<compile_context>
chip_gen: v6e
topology: v6e:2x2x1
jax: 0.10.0
libtpu: 0.0.40
codegen_flags: <defaults>
</compile_context>

<pallas_src>
import jax
import jax.numpy as jnp
from jax.experimental import pallas as pl
from jax.experimental.pallas import tpu as pltpu


LAYER_DIMS = [(3072, 512), (512, 256), (256, 128), (128, 64), (64, 10)]
K_IN = LAYER_DIMS[0][0]      # 3072 = 3*32*32 (fixed by fc1)
N_OUT = LAYER_DIMS[-1][1]    # 10


# ------------------------------ fused kernel -------------------------------

def _mlp_fused_kernel(
    x_ref,            # (TB, 3072)  bf16 batch-block of the flattened input
    w1_ref, b1_ref,   # (3072, 512) bf16, (1, 512) f32
    w3_ref, b3_ref,   # (512, 256)  bf16, (1, 256) f32
    w5_ref, b5_ref,   # (256, 128)  bf16, (1, 128) f32
    w7_ref, b7_ref,   # (128, 64)   bf16, (1, 64)  f32
    w8_ref, b8_ref,   # (64, 10)    bf16, (1, 10)  f32
    o_ref,            # (TB, 10)    f32 log-probabilities
):
    # Layer 1: bf16 x bf16 -> f32 accumulate on the MXU, bias + ReLU in f32.
    h = jnp.dot(x_ref[...], w1_ref[...], preferred_element_type=jnp.float32)
    h = jnp.maximum(h + b1_ref[...], 0.0)

    # Layers 2..4: cast activations back to bf16 for the MXU, keep f32 acc.
    for w_ref, b_ref in ((w3_ref, b3_ref), (w5_ref, b5_ref), (w7_ref, b7_ref)):
        h = jnp.dot(h.astype(jnp.bfloat16), w_ref[...],
                    preferred_element_type=jnp.float32)
        h = jnp.maximum(h + b_ref[...], 0.0)

    # Layer 5 (logits), no ReLU.
    y = jnp.dot(h.astype(jnp.bfloat16), w8_ref[...],
                preferred_element_type=jnp.float32)
    y = y + b8_ref[...]

    # Numerically-stable log_softmax over the class dim.
    m = jnp.max(y, axis=-1, keepdims=True)
    s = y - m
    lse = jnp.log(jnp.sum(jnp.exp(s), axis=-1, keepdims=True))
    o_ref[...] = s - lse


# ------------------------------ wrapper -------------------------------------

def mlp_sample_pallas(x2d, params, *, batch_block=128):
    """x2d: (B, 3072) bf16; params: list of (W (in,out) bf16, b (1,out) f32)."""
    B = x2d.shape[0]
    tb = B if B <= batch_block else batch_block
    assert B % tb == 0, "batch must be divisible by the batch block"
    # NOTE: tb should be a multiple of 8 (sublane) for B > 8-row batches.
    n_b = B // tb
    (w1, b1), (w3, b3), (w5, b5), (w7, b7), (w8, b8) = params

    # All weights/biases are whole-array VMEM blocks with a constant block
    # index, so they are DMA'd once regardless of the batch-block count.
    whole = lambda shp: pl.BlockSpec(shp, lambda i: (0, 0))

    return pl.pallas_call(
        _mlp_fused_kernel,
        out_shape=jax.ShapeDtypeStruct((B, N_OUT), jnp.float32),
        grid=(n_b,),
        in_specs=[
            pl.BlockSpec((tb, K_IN), lambda i: (i, 0)),     # x batch-block
            whole(w1.shape), whole(b1.shape),
            whole(w3.shape), whole(b3.shape),
            whole(w5.shape), whole(b5.shape),
            whole(w7.shape), whole(b7.shape),
            whole(w8.shape), whole(b8.shape),
        ],
        out_specs=pl.BlockSpec((tb, N_OUT), lambda i: (i, 0)),
        compiler_params=pltpu.CompilerParams(
            dimension_semantics=("parallel",),   # batch rows are independent
            vmem_limit_bytes=32 << 20,
        ),
    )(x2d, w1, b1, w3, b3, w5, b5, w7, b7, w8, b8)


# --------------------------- model / params ---------------------------------

def init_params(key):
    """Deterministic synthetic parameters (nn.Linear-style init ranges).

    Weights stored pre-transposed (in, out) and in bf16 (HBM traffic is the
    bottleneck); biases kept in f32.
    """
    params = []
    for (fan_in, fan_out) in LAYER_DIMS:
        key, kw, kb = jax.random.split(key, 3)
        bound = 1.0 / jnp.sqrt(fan_in)
        w = jax.random.uniform(kw, (fan_in, fan_out), jnp.float32, -bound, bound)
        b = jax.random.uniform(kb, (1, fan_out), jnp.float32, -bound, bound)
        params.append((w.astype(jnp.bfloat16), b))
    return params


@jax.jit
def mlp_sample_forward(x, params):
    # x: (B, C, H, W) NCHW -> flatten to (B, 3072) (the `x.view(B, -1)`),
    # cast to bf16, then the fused Pallas kernel.
    B = x.shape[0]
    h = x.reshape(B, -1).astype(jnp.bfloat16)
    return mlp_sample_pallas(h, params)


# ------------------------------ main ---------------------------------------

if __name__ == "__main__":
    key = jax.random.PRNGKey(0)
    kx, kp = jax.random.split(key)

    # CIFAR-like input: (batch, 3, 32, 32) -> flattens to 3072 features
    # (3*32*32 is fixed by the module's fc1; batch kept small at 8).
    x = jax.random.normal(kx, (8, 3, 32, 32), dtype=jnp.float32)
    params = init_params(kp)

    out = mlp_sample_forward(x, params)
    jax.block_until_ready(out)

    # Reference at matching precision (bf16 weights/activations, f32 acc).
    def ref_forward(x, params):
        h = x.reshape(x.shape[0], -1).astype(jnp.bfloat16)
        y = None
        for i, (w, b) in enumerate(params):
            y = jnp.dot(h, w, preferred_element_type=jnp.float32) + b
            if i < len(params) - 1:
                h = jnp.maximum(y, 0.0).astype(jnp.bfloat16)
        return jax.nn.log_softmax(y, axis=-1)

    ref = ref_forward(x, params)

    assert out.shape == (8, 10)
    # log_softmax rows must exponentiate-sum to 1
    row_sums = jnp.sum(jnp.exp(out), axis=-1)
    assert bool(jnp.all(jnp.abs(row_sums - 1.0) < 1e-3))
    assert bool(jnp.all(jnp.abs(out - ref) < 5e-3))

    print("KERNEL_OK")
</pallas_src>

<mosaic_0001>
module attributes {stable_mosaic.version = 11 : i64} {
  func.func @_mlp_fused_kernel(%arg0: i32, %arg1: memref<8x3072xbf16, #tpu.memory_space<vmem>>, %arg2: memref<3072x512xbf16, #tpu.memory_space<vmem>>, %arg3: memref<1x512xf32, #tpu.memory_space<vmem>>, %arg4: memref<512x256xbf16, #tpu.memory_space<vmem>>, %arg5: memref<1x256xf32, #tpu.memory_space<vmem>>, %arg6: memref<256x128xbf16, #tpu.memory_space<vmem>>, %arg7: memref<1x128xf32, #tpu.memory_space<vmem>>, %arg8: memref<128x64xbf16, #tpu.memory_space<vmem>>, %arg9: memref<1x64xf32, #tpu.memory_space<vmem>>, %arg10: memref<64x10xbf16, #tpu.memory_space<vmem>>, %arg11: memref<1x10xf32, #tpu.memory_space<vmem>>, %arg12: memref<8x10xf32, #tpu.memory_space<vmem>>) attributes {dimension_semantics = [#tpu.dimension_semantics<parallel>], iteration_bounds = array<i64: 1>, scalar_prefetch = 0 : i64, scratch_operands = 0 : i64, tpu.core_type = #tpu.core_type<tc>, window_params = [{transform_indices = @transform_0, window_bounds = array<i64: 8, 3072>}, {pipeline_mode = #tpu.pipeline_mode<synchronous>, transform_indices = @transform_1, window_bounds = array<i64: 3072, 512>}, {pipeline_mode = #tpu.pipeline_mode<synchronous>, transform_indices = @transform_2, window_bounds = array<i64: 1, 512>}, {pipeline_mode = #tpu.pipeline_mode<synchronous>, transform_indices = @transform_3, window_bounds = array<i64: 512, 256>}, {pipeline_mode = #tpu.pipeline_mode<synchronous>, transform_indices = @transform_4, window_bounds = array<i64: 1, 256>}, {pipeline_mode = #tpu.pipeline_mode<synchronous>, transform_indices = @transform_5, window_bounds = array<i64: 256, 128>}, {pipeline_mode = #tpu.pipeline_mode<synchronous>, transform_indices = @transform_6, window_bounds = array<i64: 1, 128>}, {pipeline_mode = #tpu.pipeline_mode<synchronous>, transform_indices = @transform_7, window_bounds = array<i64: 128, 64>}, {pipeline_mode = #tpu.pipeline_mode<synchronous>, transform_indices = @transform_8, window_bounds = array<i64: 1, 64>}, {pipeline_mode = #tpu.pipeline_mode<synchronous>, transform_indices = @transform_9, window_bounds = array<i64: 64, 10>}, {pipeline_mode = #tpu.pipeline_mode<synchronous>, transform_indices = @transform_10, window_bounds = array<i64: 1, 10>}, {transform_indices = @transform_11, window_bounds = array<i64: 8, 10>}]} {
    %c0 = arith.constant 0 : index
    %c0_0 = arith.constant 0 : index
    %0 = vector.load %arg1[%c0, %c0_0] : memref<8x3072xbf16, #tpu.memory_space<vmem>>, vector<8x3072xbf16>
    %c0_1 = arith.constant 0 : index
    %c0_2 = arith.constant 0 : index
    %1 = vector.load %arg2[%c0_1, %c0_2] : memref<3072x512xbf16, #tpu.memory_space<vmem>>, vector<3072x512xbf16>
    %cst = arith.constant dense<0.000000e+00> : vector<8x512xf32>
    %2 = tpu.matmul %0, %1, %cst {dimension_numbers = #tpu.dot_dimension_numbers<[1], [0], [0], [1], [0, 0, 1, 1], [], []>} : vector<8x3072xbf16>, vector<3072x512xbf16>, vector<8x512xf32> -> vector<8x512xf32>
    %c0_3 = arith.constant 0 : index
    %c0_4 = arith.constant 0 : index
    %3 = vector.load %arg3[%c0_3, %c0_4] : memref<1x512xf32, #tpu.memory_space<vmem>>, vector<1x512xf32>
    %4 = vector.broadcast %3 : vector<1x512xf32> to vector<8x512xf32>
    %5 = arith.addf %2, %4 : vector<8x512xf32>
    %cst_5 = arith.constant 0.000000e+00 : f32
    %6 = vector.broadcast %cst_5 : f32 to vector<8x512xf32>
    %7 = arith.maximumf %5, %6 : vector<8x512xf32>
    %8 = arith.truncf %7 : vector<8x512xf32> to vector<8x512xbf16>
    %c0_6 = arith.constant 0 : index
    %c0_7 = arith.constant 0 : index
    %9 = vector.load %arg4[%c0_6, %c0_7] : memref<512x256xbf16, #tpu.memory_space<vmem>>, vector<512x256xbf16>
    %cst_8 = arith.constant dense<0.000000e+00> : vector<8x256xf32>
    %10 = tpu.matmul %8, %9, %cst_8 {dimension_numbers = #tpu.dot_dimension_numbers<[1], [0], [0], [1], [0, 0, 1, 1], [], []>} : vector<8x512xbf16>, vector<512x256xbf16>, vector<8x256xf32> -> vector<8x256xf32>
    %c0_9 = arith.constant 0 : index
    %c0_10 = arith.constant 0 : index
    %11 = vector.load %arg5[%c0_9, %c0_10] : memref<1x256xf32, #tpu.memory_space<vmem>>, vector<1x256xf32>
    %12 = vector.broadcast %11 : vector<1x256xf32> to vector<8x256xf32>
    %13 = arith.addf %10, %12 : vector<8x256xf32>
    %cst_11 = arith.constant 0.000000e+00 : f32
    %14 = vector.broadcast %cst_11 : f32 to vector<8x256xf32>
    %15 = arith.maximumf %13, %14 : vector<8x256xf32>
    %16 = arith.truncf %15 : vector<8x256xf32> to vector<8x256xbf16>
    %c0_12 = arith.constant 0 : index
    %c0_13 = arith.constant 0 : index
    %17 = vector.load %arg6[%c0_12, %c0_13] : memref<256x128xbf16, #tpu.memory_space<vmem>>, vector<256x128xbf16>
    %cst_14 = arith.constant dense<0.000000e+00> : vector<8x128xf32>
    %18 = tpu.matmul %16, %17, %cst_14 {dimension_numbers = #tpu.dot_dimension_numbers<[1], [0], [0], [1], [0, 0, 1, 1], [], []>} : vector<8x256xbf16>, vector<256x128xbf16>, vector<8x128xf32> -> vector<8x128xf32>
    %c0_15 = arith.constant 0 : index
    %c0_16 = arith.constant 0 : index
    %19 = vector.load %arg7[%c0_15, %c0_16] : memref<1x128xf32, #tpu.memory_space<vmem>>, vector<1x128xf32>
    %20 = vector.broadcast %19 : vector<1x128xf32> to vector<8x128xf32>
    %21 = arith.addf %18, %20 : vector<8x128xf32>
    %cst_17 = arith.constant 0.000000e+00 : f32
    %22 = vector.broadcast %cst_17 : f32 to vector<8x128xf32>
    %23 = arith.maximumf %21, %22 : vector<8x128xf32>
    %24 = arith.truncf %23 : vector<8x128xf32> to vector<8x128xbf16>
    %c0_18 = arith.constant 0 : index
    %c0_19 = arith.constant 0 : index
    %25 = vector.load %arg8[%c0_18, %c0_19] : memref<128x64xbf16, #tpu.memory_space<vmem>>, vector<128x64xbf16>
    %cst_20 = arith.constant dense<0.000000e+00> : vector<8x64xf32>
    %26 = tpu.matmul %24, %25, %cst_20 {dimension_numbers = #tpu.dot_dimension_numbers<[1], [0], [0], [1], [0, 0, 1, 1], [], []>} : vector<8x128xbf16>, vector<128x64xbf16>, vector<8x64xf32> -> vector<8x64xf32>
    %c0_21 = arith.constant 0 : index
    %c0_22 = arith.constant 0 : index
    %27 = vector.load %arg9[%c0_21, %c0_22] : memref<1x64xf32, #tpu.memory_space<vmem>>, vector<1x64xf32>
    %28 = vector.broadcast %27 : vector<1x64xf32> to vector<8x64xf32>
    %29 = arith.addf %26, %28 : vector<8x64xf32>
    %cst_23 = arith.constant 0.000000e+00 : f32
    %30 = vector.broadcast %cst_23 : f32 to vector<8x64xf32>
    %31 = arith.maximumf %29, %30 : vector<8x64xf32>
    %32 = arith.truncf %31 : vector<8x64xf32> to vector<8x64xbf16>
    %c0_24 = arith.constant 0 : index
    %c0_25 = arith.constant 0 : index
    %33 = vector.load %arg10[%c0_24, %c0_25] : memref<64x10xbf16, #tpu.memory_space<vmem>>, vector<64x10xbf16>
    %cst_26 = arith.constant dense<0.000000e+00> : vector<8x10xf32>
    %34 = tpu.matmul %32, %33, %cst_26 {dimension_numbers = #tpu.dot_dimension_numbers<[1], [0], [0], [1], [0, 0, 1, 1], [], []>} : vector<8x64xbf16>, vector<64x10xbf16>, vector<8x10xf32> -> vector<8x10xf32>
    %c0_27 = arith.constant 0 : index
    %c0_28 = arith.constant 0 : index
    %35 = vector.load %arg11[%c0_27, %c0_28] : memref<1x10xf32, #tpu.memory_space<vmem>>, vector<1x10xf32>
    %36 = vector.broadcast %35 : vector<1x10xf32> to vector<8x10xf32>
    %37 = arith.addf %34, %36 : vector<8x10xf32>
    %cst_29 = arith.constant dense<0xFF800000> : vector<8xf32>
    %38 = vector.multi_reduction <maximumf>, %37, %cst_29 [1] : vector<8x10xf32> to vector<8xf32>
    %39 = vector.shape_cast %38 : vector<8xf32> to vector<8x1xf32>
    %40 = vector.broadcast %39 : vector<8x1xf32> to vector<8x10xf32>
    %41 = arith.subf %37, %40 : vector<8x10xf32>
    %42 = math.exp %41 : vector<8x10xf32>
    %cst_30 = arith.constant dense<0.000000e+00> : vector<8xf32>
    %43 = vector.multi_reduction <add>, %42, %cst_30 [1] : vector<8x10xf32> to vector<8xf32>
    %44 = vector.shape_cast %43 : vector<8xf32> to vector<8x1xf32>
    %45 = math.log %44 : vector<8x1xf32>
    %46 = vector.broadcast %45 : vector<8x1xf32> to vector<8x10xf32>
    %47 = arith.subf %41, %46 : vector<8x10xf32>
    %c0_31 = arith.constant 0 : index
    %c0_32 = arith.constant 0 : index
    %48 = vector.load %arg12[%c0_31, %c0_32] : memref<8x10xf32, #tpu.memory_space<vmem>>, vector<8x10xf32>
    tpu.vector_store %arg12[%c0_31, %c0_32], %47 {strides = array<i32>} : memref<8x10xf32, #tpu.memory_space<vmem>>, vector<8x10xf32>,
    return
  }
  func.func @transform_0(%arg0: i32) -> (i32, i32) {
    %c0_i32 = arith.constant 0 : i32
    %c0_i32_0 = arith.constant 0 : i32
    return %arg0, %c0_i32 : i32, i32
  }
  func.func @transform_1(%arg0: i32) -> (i32, i32) {
    %c0_i32 = arith.constant 0 : i32
    %c0_i32_0 = arith.constant 0 : i32
    %c0_i32_1 = arith.constant 0 : i32
    return %c0_i32, %c0_i32_0 : i32, i32
  }
  func.func @transform_2(%arg0: i32) -> (i32, i32) {
    %c0_i32 = arith.constant 0 : i32
    %c0_i32_0 = arith.constant 0 : i32
    %c0_i32_1 = arith.constant 0 : i32
    return %c0_i32, %c0_i32_0 : i32, i32
  }
  func.func @transform_3(%arg0: i32) -> (i32, i32) {
    %c0_i32 = arith.constant 0 : i32
    %c0_i32_0 = arith.constant 0 : i32
    %c0_i32_1 = arith.constant 0 : i32
    return %c0_i32, %c0_i32_0 : i32, i32
  }
  func.func @transform_4(%arg0: i32) -> (i32, i32) {
    %c0_i32 = arith.constant 0 : i32
    %c0_i32_0 = arith.constant 0 : i32
    %c0_i32_1 = arith.constant 0 : i32
    return %c0_i32, %c0_i32_0 : i32, i32
  }
  func.func @transform_5(%arg0: i32) -> (i32, i32) {
    %c0_i32 = arith.constant 0 : i32
    %c0_i32_0 = arith.constant 0 : i32
    %c0_i32_1 = arith.constant 0 : i32
    return %c0_i32, %c0_i32_0 : i32, i32
  }
  func.func @transform_6(%arg0: i32) -> (i32, i32) {
    %c0_i32 = arith.constant 0 : i32
    %c0_i32_0 = arith.constant 0 : i32
    %c0_i32_1 = arith.constant 0 : i32
    return %c0_i32, %c0_i32_0 : i32, i32
  }
  func.func @transform_7(%arg0: i32) -> (i32, i32) {
    %c0_i32 = arith.constant 0 : i32
    %c0_i32_0 = arith.constant 0 : i32
    %c0_i32_1 = arith.constant 0 : i32
    return %c0_i32, %c0_i32_0 : i32, i32
  }
  func.func @transform_8(%arg0: i32) -> (i32, i32) {
    %c0_i32 = arith.constant 0 : i32
    %c0_i32_0 = arith.constant 0 : i32
    %c0_i32_1 = arith.constant 0 : i32
    return %c0_i32, %c0_i32_0 : i32, i32
  }
  func.func @transform_9(%arg0: i32) -> (i32, i32) {
    %c0_i32 = arith.constant 0 : i32
    %c0_i32_0 = arith.constant 0 : i32
    %c0_i32_1 = arith.constant 0 : i32
    return %c0_i32, %c0_i32_0 : i32, i32
  }
  func.func @transform_10(%arg0: i32) -> (i32, i32) {
    %c0_i32 = arith.constant 0 : i32
    %c0_i32_0 = arith.constant 0 : i32
    %c0_i32_1 = arith.constant 0 : i32
    return %c0_i32, %c0_i32_0 : i32, i32
  }
  func.func @transform_11(%arg0: i32) -> (i32, i32) {
    %c0_i32 = arith.constant 0 : i32
    %c0_i32_0 = arith.constant 0 : i32
    return %arg0, %c0_i32 : i32, i32
  }
}

</mosaic_0001>

<llo_original>
// kernel: mlp_sample_forward.1
$region0: #{mlp_sample_forward.1}
  #allocation0 [shape = 'u32[]', space=smem, size = 0x4, offset = 0x4, fixed_abs, tag = 'smem constant byte address 0x4 - core index']
  #allocation1 [shape = 'u32[144,128]{1,0:T(1,128)}', space=vmem, size = 0x12000, scoped, tag = 'internal scratch']
  %s0 = inlined_call_operand.vmem [shape: bf16[8,3072], index: 0, kind: input, shape index: {}]
  %s1 = inlined_call_operand.hbm [shape: bf16[3072,512], index: 1, kind: input, shape index: {}]
  %s2 = inlined_call_operand.hbm [shape: f32[1,512], index: 2, kind: input, shape index: {}]
  %s3 = inlined_call_operand.hbm [shape: bf16[512,256], index: 3, kind: input, shape index: {}]
  %s4 = inlined_call_operand.hbm [shape: f32[1,256], index: 4, kind: input, shape index: {}]
  %s5 = inlined_call_operand.hbm [shape: bf16[256,128], index: 5, kind: input, shape index: {}]
  %s6 = inlined_call_operand.hbm [shape: f32[1,128], index: 6, kind: input, shape index: {}]
  %s7 = inlined_call_operand.vmem [shape: bf16[128,64], index: 7, kind: input, shape index: {}]
  %s8 = inlined_call_operand.hbm [shape: f32[1,64], index: 8, kind: input, shape index: {}]
  %s9 = inlined_call_operand.vmem [shape: bf16[64,10], index: 9, kind: input, shape index: {}]
  %s10 = inlined_call_operand.hbm [shape: f32[1,10], index: 10, kind: input, shape index: {}]
  %s11 = inlined_call_operand.hbm [shape: f32[8,10], index: 11, kind: output, shape index: {}]
  %s12 = sld [smem:[#allocation0]]
  $region86: #{mlp_sample_forward.1} parent=0
    _
  %s14 = ssub.s32 1, %s12
  %s15 = scalar_select 0, %s14, %s12
  $region1: #{mlp_sample_forward.1} parent=0
    #allocation2 [shape = 'u8[3145728]{0}', space=vmem, size = 0x300000, scoped, tag = 'input window, operand 1, single buffered']
    #allocation3 [shape = 's32[1]{0}', space=sflag, size = 0x4, scoped, tag = 'scoped memory for mlp_sample_forward.1']
    #allocation4 [shape = 's32[1]{0}', space=sflag, size = 0x4, scoped, tag = 'scoped memory for mlp_sample_forward.1']
    #allocation5 [shape = 'u8[2048]{0}', space=vmem, size = 0x800, scoped, tag = 'input window, operand 2, single buffered']
    #allocation6 [shape = 's32[1]{0}', space=sflag, size = 0x4, scoped, tag = 'scoped memory for mlp_sample_forward.1']
    #allocation7 [shape = 'u8[262144]{0}', space=vmem, size = 0x40000, scoped, tag = 'input window, operand 3, single buffered']
    #allocation8 [shape = 'u8[1024]{0}', space=vmem, size = 0x400, scoped, tag = 'input window, operand 4, single buffered']
    #allocation9 [shape = 's32[1]{0}', space=sflag, size = 0x4, scoped, tag = 'scoped memory for mlp_sample_forward.1']
    #allocation10 [shape = 'u8[65536]{0}', space=vmem, size = 0x10000, scoped, tag = 'input window, operand 5, single buffered']
    #allocation11 [shape = 'u8[512]{0}', space=vmem, size = 0x400, scoped, tag = 'input window, operand 6, single buffered']
    #allocation12 [shape = 's32[1]{0}', space=sflag, size = 0x4, scoped, tag = 'scoped memory for mlp_sample_forward.1']
    #allocation13 [shape = 'u8[512]{0}', space=vmem, size = 0x400, scoped, tag = 'input window, operand 8, single buffered']
    #allocation14 [shape = 'u8[512]{0}', space=vmem, size = 0x400, scoped, tag = 'input window, operand 10, single buffered']
    #allocation15 [shape = 's32[1]{0}', space=sflag, size = 0x4, scoped, tag = 'scoped memory for mlp_sample_forward.1']
    #allocation16 [shape = 'u8[4096]{0}', space=vmem, size = 0x1000, scoped, tag = 'output window, operand 0, single buffered']
    %16 = vsyncpa [#allocation3], 0
    %17 = vsyncpa [#allocation6], 0
    %18 = vsyncpa [#allocation9], 0
    %19 = vsyncpa [#allocation12], 0
    %20 = vsyncpa [#allocation15], 0
    %21 = vsyncpa [#allocation4], 0
    // Predicated region
    $region2: #{mlp_sample_forward.1} parent=1 // pred_check
      _
    $region3: #{mlp_sample_forward.1} parent=1 // pred_check_branch
      %23 = sbr.rel (0) target = $region5
    $region4: #{mlp_sample_forward.1} parent=1 // pred_region
      _
    $region5: #{mlp_sample_forward.1} parent=1 // pred_fallthru
      _
    // Predicated region
    $region6: #{mlp_sample_forward.1} parent=1 // pred_check
      _
    $region7: #{mlp_sample_forward.1} parent=1 // pred_check_branch
      %25 = sbr.rel (0) target = $region9
    $region8: #{mlp_sample_forward.1} parent=1 // pred_region
      %s27 = ssub.s32 98304, 98304
      %28 = vsyncadd [#allocation3], %s27
      %s29 = sshll.u32 [#allocation2], 4
      %s30 = int_to_ptr.vmem [resolvable:$true] %s29
      %35 = dma.hbm_to_vmem [thread:$0]  %s1, 98304, %s30, [#allocation3], 256, 256, 16
    $region9: #{mlp_sample_forward.1} parent=1 // pred_fallthru
      _
    // Predicated region
    $region10: #{mlp_sample_forward.1} parent=1 // pred_check
      _
    $region11: #{mlp_sample_forward.1} parent=1 // pred_check_branch
      %37 = sbr.rel (0) target = $region13
    $region12: #{mlp_sample_forward.1} parent=1 // pred_region
      %s39 = ssub.s32 64, 64
      %40 = vsyncadd [#allocation6], %s39
      %s42 = sshll.u32 [#allocation5], 4
      %s43 = int_to_ptr.vmem [resolvable:$true] %s42
      %45 = dma.hbm_to_vmem [thread:$0]  %s2, 64, %s43, [#allocation6]
    $region13: #{mlp_sample_forward.1} parent=1 // pred_fallthru
      _
    // Predicated region
    $region14: #{mlp_sample_forward.1} parent=1 // pred_check
      _
    $region15: #{mlp_sample_forward.1} parent=1 // pred_check_branch
      %47 = sbr.rel (0) target = $region17
    $region16: #{mlp_sample_forward.1} parent=1 // pred_region
      %s49 = ssub.s32 8192, 8192
      %50 = vsyncadd [#allocation6], %s49
      %s51 = sshll.u32 [#allocation7], 4
      %s52 = int_to_ptr.vmem [resolvable:$true] %s51
      %57 = dma.hbm_to_vmem [thread:$0]  %s3, 8192, %s52, [#allocation6], 128, 128, 8
    $region17: #{mlp_sample_forward.1} parent=1 // pred_fallthru
      _
    // Predicated region
    $region18: #{mlp_sample_forward.1} parent=1 // pred_check
      _
    $region19: #{mlp_sample_forward.1} parent=1 // pred_check_branch
      %59 = sbr.rel (0) target = $region21
    $region20: #{mlp_sample_forward.1} parent=1 // pred_region
      %s61 = ssub.s32 32, 32
      %62 = vsyncadd [#allocation9], %s61
      %s64 = sshll.u32 [#allocation8], 4
      %s65 = int_to_ptr.vmem [resolvable:$true] %s64
      %67 = dma.hbm_to_vmem [thread:$0]  %s4, 32, %s65, [#allocation9]
    $region21: #{mlp_sample_forward.1} parent=1 // pred_fallthru
      _
    // Predicated region
    $region22: #{mlp_sample_forward.1} parent=1 // pred_check
      _
    $region23: #{mlp_sample_forward.1} parent=1 // pred_check_branch
      %69 = sbr.rel (0) target = $region25
    $region24: #{mlp_sample_forward.1} parent=1 // pred_region
      %s71 = ssub.s32 2048, 2048
      %72 = vsyncadd [#allocation9], %s71
      %s73 = sshll.u32 [#allocation10], 4
      %s74 = int_to_ptr.vmem [resolvable:$true] %s73
      %79 = dma.hbm_to_vmem [thread:$0]  %s5, 2048, %s74, [#allocation9], 64, 64, 4
    $region25: #{mlp_sample_forward.1} parent=1 // pred_fallthru
      _
    // Predicated region
    $region26: #{mlp_sample_forward.1} parent=1 // pred_check
      _
    $region27: #{mlp_sample_forward.1} parent=1 // pred_check_branch
      %81 = sbr.rel (0) target = $region29
    $region28: #{mlp_sample_forward.1} parent=1 // pred_region
      %s83 = ssub.s32 16, 16
      %84 = vsyncadd [#allocation12], %s83
      %s86 = sshll.u32 [#allocation11], 4
      %s87 = int_to_ptr.vmem [resolvable:$true] %s86
      %89 = dma.hbm_to_vmem [thread:$0]  %s6, 16, %s87, [#allocation12]
    $region29: #{mlp_sample_forward.1} parent=1 // pred_fallthru
      _
    // Predicated region
    $region30: #{mlp_sample_forward.1} parent=1 // pred_check
      _
    $region31: #{mlp_sample_forward.1} parent=1 // pred_check_branch
      %91 = sbr.rel (0) target = $region33
    $region32: #{mlp_sample_forward.1} parent=1 // pred_region
      _
    $region33: #{mlp_sample_forward.1} parent=1 // pred_fallthru
      _
    // Predicated region
    $region34: #{mlp_sample_forward.1} parent=1 // pred_check
      _
    $region35: #{mlp_sample_forward.1} parent=1 // pred_check_branch
      %93 = sbr.rel (0) target = $region37
    $region36: #{mlp_sample_forward.1} parent=1 // pred_region
      %s95 = ssub.s32 16, 16
      %96 = vsyncadd [#allocation12], %s95
      %s98 = sshll.u32 [#allocation13], 4
      %s99 = int_to_ptr.vmem [resolvable:$true] %s98
      %101 = dma.hbm_to_vmem [thread:$0]  %s8, 16, %s99, [#allocation12]
    $region37: #{mlp_sample_forward.1} parent=1 // pred_fallthru
      _
    // Predicated region
    $region38: #{mlp_sample_forward.1} parent=1 // pred_check
      _
    $region39: #{mlp_sample_forward.1} parent=1 // pred_check_branch
      %103 = sbr.rel (0) target = $region41
    $region40: #{mlp_sample_forward.1} parent=1 // pred_region
      _
    $region41: #{mlp_sample_forward.1} parent=1 // pred_fallthru
      _
    // Predicated region
    $region42: #{mlp_sample_forward.1} parent=1 // pred_check
      _
    $region43: #{mlp_sample_forward.1} parent=1 // pred_check_branch
      %105 = sbr.rel (0) target = $region45
    $region44: #{mlp_sample_forward.1} parent=1 // pred_region
      %s107 = ssub.s32 16, 16
      %108 = vsyncadd [#allocation15], %s107
      %s110 = sshll.u32 [#allocation14], 4
      %s111 = int_to_ptr.vmem [resolvable:$true] %s110
      %113 = dma.hbm_to_vmem [thread:$0]  %s10, 16, %s111, [#allocation15]
    $region45: #{mlp_sample_forward.1} parent=1 // pred_fallthru
      _
    // Predicated region
    $region46: #{mlp_sample_forward.1} parent=1 // pred_check
      _
    $region47: #{mlp_sample_forward.1} parent=1 // pred_check_branch
      %115 = sbr.rel (0) target = $region49
    $region48: #{mlp_sample_forward.1} parent=1 // pred_region
      %116 = dma.done [#allocation3], 98304
    $region49: #{mlp_sample_forward.1} parent=1 // pred_fallthru
      _
    // Predicated region
    $region50: #{mlp_sample_forward.1} parent=1 // pred_check
      _
    $region51: #{mlp_sample_forward.1} parent=1 // pred_check_branch
      %118 = sbr.rel (0) target = $region53
    $region52: #{mlp_sample_forward.1} parent=1 // pred_region
      %119 = dma.done [#allocation6], 64
    $region53: #{mlp_sample_forward.1} parent=1 // pred_fallthru
      _
    // Predicated region
    $region54: #{mlp_sample_forward.1} parent=1 // pred_check
      _
    $region55: #{mlp_sample_forward.1} parent=1 // pred_check_branch
      %121 = sbr.rel (0) target = $region57
    $region56: #{mlp_sample_forward.1} parent=1 // pred_region
      %122 = dma.done [#allocation6], 8192
    $region57: #{mlp_sample_forward.1} parent=1 // pred_fallthru
      _
    // Predicated region
    $region58: #{mlp_sample_forward.1} parent=1 // pred_check
      _
    $region59: #{mlp_sample_forward.1} parent=1 // pred_check_branch
      %124 = sbr.rel (0) target = $region61
    $region60: #{mlp_sample_forward.1} parent=1 // pred_region
      %125 = dma.done [#allocation9], 32
    $region61: #{mlp_sample_forward.1} parent=1 // pred_fallthru
      _
    // Predicated region
    $region62: #{mlp_sample_forward.1} parent=1 // pred_check
      _
    $region63: #{mlp_sample_forward.1} parent=1 // pred_check_branch
      %127 = sbr.rel (0) target = $region65
    $region64: #{mlp_sample_forward.1} parent=1 // pred_region
      %128 = dma.done [#allocation9], 2048
    $region65: #{mlp_sample_forward.1} parent=1 // pred_fallthru
      _
    // Predicated region
    $region66: #{mlp_sample_forward.1} parent=1 // pred_check
      _
    $region67: #{mlp_sample_forward.1} parent=1 // pred_check_branch
      %130 = sbr.rel (0) target = $region69
    $region68: #{mlp_sample_forward.1} parent=1 // pred_region
      %131 = dma.done [#allocation12], 16
    $region69: #{mlp_sample_forward.1} parent=1 // pred_fallthru
      _
    // Predicated region
    $region70: #{mlp_sample_forward.1} parent=1 // pred_check
      _
    $region71: #{mlp_sample_forward.1} parent=1 // pred_check_branch
      %133 = sbr.rel (0) target = $region73
    $region72: #{mlp_sample_forward.1} parent=1 // pred_region
      %134 = dma.done [#allocation12], 16
    $region73: #{mlp_sample_forward.1} parent=1 // pred_fallthru
      _
    // Predicated region
    $region74: #{mlp_sample_forward.1} parent=1 // pred_check
      _
    $region75: #{mlp_sample_forward.1} parent=1 // pred_check_branch
      %136 = sbr.rel (0) target = $region77
    $region76: #{mlp_sample_forward.1} parent=1 // pred_region
      %137 = dma.done [#allocation15], 16
    $region77: #{mlp_sample_forward.1} parent=1 // pred_fallthru
      _
    %v139 = vld [vmem:[%s0] sm:$0xff]
    %v140 = vld [vmem:[%s0 + $0x8] sm:$0xff]
    %v141 = vld [vmem:[%s0 + $0x10] sm:$0xff]
    %v142 = vld [vmem:[%s0 + $0x18] sm:$0xff]
    %v143 = vld [vmem:[%s0 + $0x20] sm:$0xff]
    %v144 = vld [vmem:[%s0 + $0x28] sm:$0xff]
    %v145 = vld [vmem:[%s0 + $0x30] sm:$0xff]
    %v146 = vld [vmem:[%s0 + $0x38] sm:$0xff]
    %v147 = vld [vmem:[%s0 + $0x40] sm:$0xff]
    %v148 = vld [vmem:[%s0 + $0x48] sm:$0xff]
    %v149 = vld [vmem:[%s0 + $0x50] sm:$0xff]
    %v150 = vld [vmem:[%s0 + $0x58] sm:$0xff]
    %v151 = vld [vmem:[#allocation2] sm:$0xff]
    %v152 = vld [vmem:[#allocation2 + $0x8] sm:$0xff]
    %v153 = vld [vmem:[#allocation2 + $0x10] sm:$0xff]
    %v154 = vld [vmem:[#allocation2 + $0x18] sm:$0xff]
    %v155 = vld [vmem:[#allocation2 + $0x20] sm:$0xff]
    %v156 = vld [vmem:[#allocation2 + $0x28] sm:$0xff]
    %v157 = vld [vmem:[#allocation2 + $0x30] sm:$0xff]
    %v158 = vld [vmem:[#allocation2 + $0x38] sm:$0xff]
    %v159 = vld [vmem:[#allocation2 + $0x40] sm:$0xff]
    %v160 = vld [vmem:[#allocation2 + $0x48] sm:$0xff]
    %v161 = vld [vmem:[#allocation2 + $0x50] sm:$0xff]
    %v162 = vld [vmem:[#allocation2 + $0x58] sm:$0xff]
    %v163 = vld [vmem:[#allocation2 + $0x60] sm:$0xff]
    %v164 = vld [vmem:[#allocation2 + $0x68] sm:$0xff]
    %v165 = vld [vmem:[#allocation2 + $0x70] sm:$0xff]
    %v166 = vld [vmem:[#allocation2 + $0x78] sm:$0xff]
    %v167 = vld [vmem:[#allocation2 + $0x80] sm:$0xff]
    %v168 = vld [vmem:[#allocation2 + $0x88] sm:$0xff]
    %v169 = vld [vmem:[#allocation2 + $0x90] sm:$0xff]
    %v170 = vld [vmem:[#allocation2 + $0x98] sm:$0xff]
    %v171 = vld [vmem:[#allocation2 + $0xa0] sm:$0xff]
    %v172 = vld [vmem:[#allocation2 + $0xa8] sm:$0xff]
    %v173 = vld [vmem:[#allocation2 + $0xb0] sm:$0xff]
    %v174 = vld [vmem:[#allocation2 + $0xb8] sm:$0xff]
    %v175 = vld [vmem:[#allocation2 + $0xc0] sm:$0xff]
    %v176 = vld [vmem:[#allocation2 + $0xc8] sm:$0xff]
    %v177 = vld [vmem:[#allocation2 + $0xd0] sm:$0xff]
    %v178 = vld [vmem:[#allocation2 + $0xd8] sm:$0xff]
    %v179 = vld [vmem:[#allocation2 + $0xe0] sm:$0xff]
    %v180 = vld [vmem:[#allocation2 + $0xe8] sm:$0xff]
    %v181 = vld [vmem:[#allocation2 + $0xf0] sm:$0xff]
    %v182 = vld [vmem:[#allocation2 + $0xf8] sm:$0xff]
    %v183 = vld [vmem:[#allocation2 + $0x100] sm:$0xff]
    %v184 = vld [vmem:[#allocation2 + $0x108] sm:$0xff]
    %v185 = vld [vmem:[#allocation2 + $0x110] sm:$0xff]
    %v186 = vld [vmem:[#allocation2 + $0x118] sm:$0xff]
    %v187 = vld [vmem:[#allocation2 + $0x120] sm:$0xff]
    %v188 = vld [vmem:[#allocation2 + $0x128] sm:$0xff]
    %v189 = vld [vmem:[#allocation2 + $0x130] sm:$0xff]
    %v190 = vld [vmem:[#allocation2 + $0x138] sm:$0xff]
    %v191 = vld [vmem:[#allocation2 + $0x140] sm:$0xff]
    %v192 = vld [vmem:[#allocation2 + $0x148] sm:$0xff]
    %v193 = vld [vmem:[#allocation2 + $0x150] sm:$0xff]
    %v194 = vld [vmem:[#allocation2 + $0x158] sm:$0xff]
    %v195 = vld [vmem:[#allocation2 + $0x160] sm:$0xff]
    %v196 = vld [vmem:[#allocation2 + $0x168] sm:$0xff]
    %v197 = vld [vmem:[#allocation2 + $0x170] sm:$0xff]
    %v198 = vld [vmem:[#allocation2 + $0x178] sm:$0xff]
    %v199 = vld [vmem:[#allocation2 + $0x180] sm:$0xff]
    %v200 = vld [vmem:[#allocation2 + $0x188] sm:$0xff]
    %v201 = vld [vmem:[#allocation2 + $0x190] sm:$0xff]
    %v202 = vld [vmem:[#allocation2 + $0x198] sm:$0xff]
    %v203 = vld [vmem:[#allocation2 + $0x1a0] sm:$0xff]
    %v204 = vld [vmem:[#allocation2 + $0x1a8] sm:$0xff]
    %v205 = vld [vmem:[#allocation2 + $0x1b0] sm:$0xff]
    %v206 = vld [vmem:[#allocation2 + $0x1b8] sm:$0xff]
    %v207 = vld [vmem:[#allocation2 + $0x1c0] sm:$0xff]
    %v208 = vld [vmem:[#allocation2 + $0x1c8] sm:$0xff]
    %v209 = vld [vmem:[#allocation2 + $0x1d0] sm:$0xff]
    %v210 = vld [vmem:[#allocation2 + $0x1d8] sm:$0xff]
    %v211 = vld [vmem:[#allocation2 + $0x1e0] sm:$0xff]
    %v212 = vld [vmem:[#allocation2 + $0x1e8] sm:$0xff]
    %v213 = vld [vmem:[#allocation2 + $0x1f0] sm:$0xff]
    %v214 = vld [vmem:[#allocation2 + $0x1f8] sm:$0xff]
    %v215 = vld [vmem:[#allocation2 + $0x200] sm:$0xff]
    %v216 = vld [vmem:[#allocation2 + $0x208] sm:$0xff]
    %v217 = vld [vmem:[#allocation2 + $0x210] sm:$0xff]
    %v218 = vld [vmem:[#allocation2 + $0x218] sm:$0xff]
    %v219 = vld [vmem:[#allocation2 + $0x220] sm:$0xff]
    %v220 = vld [vmem:[#allocation2 + $0x228] sm:$0xff]
    %v221 = vld [vmem:[#allocation2 + $0x230] sm:$0xff]
    %v222 = vld [vmem:[#allocation2 + $0x238] sm:$0xff]
    %v223 = vld [vmem:[#allocation2 + $0x240] sm:$0xff]
    %v224 = vld [vmem:[#allocation2 + $0x248] sm:$0xff]
    %v225 = vld [vmem:[#allocation2 + $0x250] sm:$0xff]
    %v226 = vld [vmem:[#allocation2 + $0x258] sm:$0xff]
    %v227 = vld [vmem:[#allocation2 + $0x260] sm:$0xff]
    %v228 = vld [vmem:[#allocation2 + $0x268] sm:$0xff]
    %v229 = vld [vmem:[#allocation2 + $0x270] sm:$0xff]
    %v230 = vld [vmem:[#allocation2 + $0x278] sm:$0xff]
    %v231 = vld [vmem:[#allocation2 + $0x280] sm:$0xff]
    %v232 = vld [vmem:[#allocation2 + $0x288] sm:$0xff]
    %v233 = vld [vmem:[#allocation2 + $0x290] sm:$0xff]
    %v234 = vld [vmem:[#allocation2 + $0x298] sm:$0xff]
    %v235 = vld [vmem:[#allocation2 + $0x2a0] sm:$0xff]
    %v236 = vld [vmem:[#allocation2 + $0x2a8] sm:$0xff]
    %v237 = vld [vmem:[#allocation2 + $0x2b0] sm:$0xff]
    %v238 = vld [vmem:[#allocation2 + $0x2b8] sm:$0xff]
    %v239 = vld [vmem:[#allocation2 + $0x2c0] sm:$0xff]
    %v240 = vld [vmem:[#allocation2 + $0x2c8] sm:$0xff]
    %v241 = vld [vmem:[#allocation2 + $0x2d0] sm:$0xff]
    %v242 = vld [vmem:[#allocation2 + $0x2d8] sm:$0xff]
    %v243 = vld [vmem:[#allocation2 + $0x2e0] sm:$0xff]
    %v244 = vld [vmem:[#allocation2 + $0x2e8] sm:$0xff]
    %v245 = vld [vmem:[#allocation2 + $0x2f0] sm:$0xff]
    %v246 = vld [vmem:[#allocation2 + $0x2f8] sm:$0xff]
    %v247 = vld [vmem:[#allocation2 + $0x300] sm:$0xff]
    %v248 = vld [vmem:[#allocation2 + $0x308] sm:$0xff]
    %v249 = vld [vmem:[#allocation2 + $0x310] sm:$0xff]
    %v250 = vld [vmem:[#allocation2 + $0x318] sm:$0xff]
    %v251 = vld [vmem:[#allocation2 + $0x320] sm:$0xff]
    %v252 = vld [vmem:[#allocation2 + $0x328] sm:$0xff]
    %v253 = vld [vmem:[#allocation2 + $0x330] sm:$0xff]
    %v254 = vld [vmem:[#allocation2 + $0x338] sm:$0xff]
    %v255 = vld [vmem:[#allocation2 + $0x340] sm:$0xff]
    %v256 = vld [vmem:[#allocation2 + $0x348] sm:$0xff]
    %v257 = vld [vmem:[#allocation2 + $0x350] sm:$0xff]
    %v258 = vld [vmem:[#allocation2 + $0x358] sm:$0xff]
    %v259 = vld [vmem:[#allocation2 + $0x360] sm:$0xff]
    %v260 = vld [vmem:[#allocation2 + $0x368] sm:$0xff]
    %v261 = vld [vmem:[#allocation2 + $0x370] sm:$0xff]
    %v262 = vld [vmem:[#allocation2 + $0x378] sm:$0xff]
    %v263 = vld [vmem:[#allocation2 + $0x380] sm:$0xff]
    %v264 = vld [vmem:[#allocation2 + $0x388] sm:$0xff]
    %v265 = vld [vmem:[#allocation2 + $0x390] sm:$0xff]
    %v266 = vld [vmem:[#allocation2 + $0x398] sm:$0xff]
    %v267 = vld [vmem:[#allocation2 + $0x3a0] sm:$0xff]
    %v268 = vld [vmem:[#allocation2 + $0x3a8] sm:$0xff]
    %v269 = vld [vmem:[#allocation2 + $0x3b0] sm:$0xff]
    %v270 = vld [vmem:[#allocation2 + $0x3b8] sm:$0xff]
    %v271 = vld [vmem:[#allocation2 + $0x3c0] sm:$0xff]
    %v272 = vld [vmem:[#allocation2 + $0x3c8] sm:$0xff]
    %v273 = vld [vmem:[#allocation2 + $0x3d0] sm:$0xff]
    %v274 = vld [vmem:[#allocation2 + $0x3d8] sm:$0xff]
    %v275 = vld [vmem:[#allocation2 + $0x3e0] sm:$0xff]
    %v276 = vld [vmem:[#allocation2 + $0x3e8] sm:$0xff]
    %v277 = vld [vmem:[#allocation2 + $0x3f0] sm:$0xff]
    %v278 = vld [vmem:[#allocation2 + $0x3f8] sm:$0xff]
    %v279 = vld [vmem:[#allocation2 + $0x400] sm:$0xff]
    %v280 = vld [vmem:[#allocation2 + $0x408] sm:$0xff]
    %v281 = vld [vmem:[#allocation2 + $0x410] sm:$0xff]
    %v282 = vld [vmem:[#allocation2 + $0x418] sm:$0xff]
    %v283 = vld [vmem:[#allocation2 + $0x420] sm:$0xff]
    %v284 = vld [vmem:[#allocation2 + $0x428] sm:$0xff]
    %v285 = vld [vmem:[#allocation2 + $0x430] sm:$0xff]
    %v286 = vld [vmem:[#allocation2 + $0x438] sm:$0xff]
    %v287 = vld [vmem:[#allocation2 + $0x440] sm:$0xff]
    %v288 = vld [vmem:[#allocation2 + $0x448] sm:$0xff]
    %v289 = vld [vmem:[#allocation2 + $0x450] sm:$0xff]
    %v290 = vld [vmem:[#allocation2 + $0x458] sm:$0xff]
    %v291 = vld [vmem:[#allocation2 + $0x460] sm:$0xff]
    %v292 = vld [vmem:[#allocation2 + $0x468] sm:$0xff]
    %v293 = vld [vmem:[#allocation2 + $0x470] sm:$0xff]
    %v294 = vld [vmem:[#allocation2 + $0x478] sm:$0xff]
    %v295 = vld [vmem:[#allocation2 + $0x480] sm:$0xff]
    %v296 = vld [vmem:[#allocation2 + $0x488] sm:$0xff]
    %v297 = vld [vmem:[#allocation2 + $0x490] sm:$0xff]
    %v298 = vld [vmem:[#allocation2 + $0x498] sm:$0xff]
    %v299 = vld [vmem:[#allocation2 + $0x4a0] sm:$0xff]
    %v300 = vld [vmem:[#allocation2 + $0x4a8] sm:$0xff]
    %v301 = vld [vmem:[#allocation2 + $0x4b0] sm:$0xff]
    %v302 = vld [vmem:[#allocation2 + $0x4b8] sm:$0xff]
    %v303 = vld [vmem:[#allocation2 + $0x4c0] sm:$0xff]
    %v304 = vld [vmem:[#allocation2 + $0x4c8] sm:$0xff]
    %v305 = vld [vmem:[#allocation2 + $0x4d0] sm:$0xff]
    %v306 = vld [vmem:[#allocation2 + $0x4d8] sm:$0xff]
    %v307 = vld [vmem:[#allocation2 + $0x4e0] sm:$0xff]
    %v308 = vld [vmem:[#allocation2 + $0x4e8] sm:$0xff]
    %v309 = vld [vmem:[#allocation2 + $0x4f0] sm:$0xff]
    %v310 = vld [vmem:[#allocation2 + $0x4f8] sm:$0xff]
    %v311 = vld [vmem:[#allocation2 + $0x500] sm:$0xff]
    %v312 = vld [vmem:[#allocation2 + $0x508] sm:$0xff]
    %v313 = vld [vmem:[#allocation2 + $0x510] sm:$0xff]
    %v314 = vld [vmem:[#allocation2 + $0x518] sm:$0xff]
    %v315 = vld [vmem:[#allocation2 + $0x520] sm:$0xff]
    %v316 = vld [vmem:[#allocation2 + $0x528] sm:$0xff]
    %v317 = vld [vmem:[#allocation2 + $0x530] sm:$0xff]
    %v318 = vld [vmem:[#allocation2 + $0x538] sm:$0xff]
    %v319 = vld [vmem:[#allocation2 + $0x540] sm:$0xff]
    %v320 = vld [vmem:[#allocation2 + $0x548] sm:$0xff]
    %v321 = vld [vmem:[#allocation2 + $0x550] sm:$0xff]
    %v322 = vld [vmem:[#allocation2 + $0x558] sm:$0xff]
    %v323 = vld [vmem:[#allocation2 + $0x560] sm:$0xff]
    %v324 = vld [vmem:[#allocation2 + $0x568] sm:$0xff]
    %v325 = vld [vmem:[#allocation2 + $0x570] sm:$0xff]
    %v326 = vld [vmem:[#allocation2 + $0x578] sm:$0xff]
    %v327 = vld [vmem:[#allocation2 + $0x580] sm:$0xff]
    %v328 = vld [vmem:[#allocation2 + $0x588] sm:$0xff]
    %v329 = vld [vmem:[#allocation2 + $0x590] sm:$0xff]
    %v330 = vld [vmem:[#allocation2 + $0x598] sm:$0xff]
    %v331 = vld [vmem:[#allocation2 + $0x5a0] sm:$0xff]
    %v332 = vld [vmem:[#allocation2 + $0x5a8] sm:$0xff]
    %v333 = vld [vmem:[#allocation2 + $0x5b0] sm:$0xff]
    %v334 = vld [vmem:[#allocation2 + $0x5b8] sm:$0xff]
    %v335 = vld [vmem:[#allocation2 + $0x5c0] sm:$0xff]
    %v336 = vld [vmem:[#allocation2 + $0x5c8] sm:$0xff]
    %v337 = vld [vmem:[#allocation2 + $0x5d0] sm:$0xff]
    %v338 = vld [vmem:[#allocation2 + $0x5d8] sm:$0xff]
    %v339 = vld [vmem:[#allocation2 + $0x5e0] sm:$0xff]
    %v340 = vld [vmem:[#allocation2 + $0x5e8] sm:$0xff]
    %v341 = vld [vmem:[#allocation2 + $0x5f0] sm:$0xff]
    %v342 = vld [vmem:[#allocation2 + $0x5f8] sm:$0xff]
    %v343 = vld [vmem:[#allocation2 + $0x600] sm:$0xff]
    %v344 = vld [vmem:[#allocation2 + $0x608] sm:$0xff]
    %v345 = vld [vmem:[#allocation2 + $0x610] sm:$0xff]
    %v346 = vld [vmem:[#allocation2 + $0x618] sm:$0xff]
    %v347 = vld [vmem:[#allocation2 + $0x620] sm:$0xff]
    %v348 = vld [vmem:[#allocation2 + $0x628] sm:$0xff]
    %v349 = vld [vmem:[#allocation2 + $0x630] sm:$0xff]
    %v350 = vld [vmem:[#allocation2 + $0x638] sm:$0xff]
    %v351 = vld [vmem:[#allocation2 + $0x640] sm:$0xff]
    %v352 = vld [vmem:[#allocation2 + $0x648] sm:$0xff]
    %v353 = vld [vmem:[#allocation2 + $0x650] sm:$0xff]
    %v354 = vld [vmem:[#allocation2 + $0x658] sm:$0xff]
    %v355 = vld [vmem:[#allocation2 + $0x660] sm:$0xff]
    %v356 = vld [vmem:[#allocation2 + $0x668] sm:$0xff]
    %v357 = vld [vmem:[#allocation2 + $0x670] sm:$0xff]
    %v358 = vld [vmem:[#allocation2 + $0x678] sm:$0xff]
    %v359 = vld [vmem:[#allocation2 + $0x680] sm:$0xff]
    %v360 = vld [vmem:[#allocation2 + $0x688] sm:$0xff]
    %v361 = vld [vmem:[#allocation2 + $0x690] sm:$0xff]
    %v362 = vld [vmem:[#allocation2 + $0x698] sm:$0xff]
    %v363 = vld [vmem:[#allocation2 + $0x6a0] sm:$0xff]
    %v364 = vld [vmem:[#allocation2 + $0x6a8] sm:$0xff]
    %v365 = vld [vmem:[#allocation2 + $0x6b0] sm:$0xff]
    %v366 = vld [vmem:[#allocation2 + $0x6b8] sm:$0xff]
    %v367 = vld [vmem:[#allocation2 + $0x6c0] sm:$0xff]
    %v368 = vld [vmem:[#allocation2 + $0x6c8] sm:$0xff]
    %v369 = vld [vmem:[#allocation2 + $0x6d0] sm:$0xff]
    %v370 = vld [vmem:[#allocation2 + $0x6d8] sm:$0xff]
    %v371 = vld [vmem:[#allocation2 + $0x6e0] sm:$0xff]
    %v372 = vld [vmem:[#allocation2 + $0x6e8] sm:$0xff]
    %v373 = vld [vmem:[#allocation2 + $0x6f0] sm:$0xff]
    %v374 = vld [vmem:[#allocation2 + $0x6f8] sm:$0xff]
    %v375 = vld [vmem:[#allocation2 + $0x700] sm:$0xff]
    %v376 = vld [vmem:[#allocation2 + $0x708] sm:$0xff]
    %v377 = vld [vmem:[#allocation2 + $0x710] sm:$0xff]
    %v378 = vld [vmem:[#allocation2 + $0x718] sm:$0xff]
    %v379 = vld [vmem:[#allocation2 + $0x720] sm:$0xff]
    %v380 = vld [vmem:[#allocation2 + $0x728] sm:$0xff]
    %v381 = vld [vmem:[#allocation2 + $0x730] sm:$0xff]
    %v382 = vld [vmem:[#allocation2 + $0x738] sm:$0xff]
    %v383 = vld [vmem:[#allocation2 + $0x740] sm:$0xff]
    %v384 = vld [vmem:[#allocation2 + $0x748] sm:$0xff]
    %v385 = vld [vmem:[#allocation2 + $0x750] sm:$0xff]
    %v386 = vld [vmem:[#allocation2 + $0x758] sm:$0xff]
    %v387 = vld [vmem:[#allocation2 + $0x760] sm:$0xff]
    %v388 = vld [vmem:[#allocation2 + $0x768] sm:$0xff]
    %v389 = vld [vmem:[#allocation2 + $0x770] sm:$0xff]
    %v390 = vld [vmem:[#allocation2 + $0x778] sm:$0xff]
    %v391 = vld [vmem:[#allocation2 + $0x780] sm:$0xff]
    %v392 = vld [vmem:[#allocation2 + $0x788] sm:$0xff]
    %v393 = vld [vmem:[#allocation2 + $0x790] sm:$0xff]
    %v394 = vld [vmem:[#allocation2 + $0x798] sm:$0xff]
    %v395 = vld [vmem:[#allocation2 + $0x7a0] sm:$0xff]
    %v396 = vld [vmem:[#allocation2 + $0x7a8] sm:$0xff]
    %v397 = vld [vmem:[#allocation2 + $0x7b0] sm:$0xff]
    %v398 = vld [vmem:[#allocation2 + $0x7b8] sm:$0xff]
    %v399 = vld [vmem:[#allocation2 + $0x7c0] sm:$0xff]
    %v400 = vld [vmem:[#allocation2 + $0x7c8] sm:$0xff]
    %v401 = vld [vmem:[#allocation2 + $0x7d0] sm:$0xff]
    %v402 = vld [vmem:[#allocation2 + $0x7d8] sm:$0xff]
    %v403 = vld [vmem:[#allocation2 + $0x7e0] sm:$0xff]
    %v404 = vld [vmem:[#allocation2 + $0x7e8] sm:$0xff]
    %v405 = vld [vmem:[#allocation2 + $0x7f0] sm:$0xff]
    %v406 = vld [vmem:[#allocation2 + $0x7f8] sm:$0xff]
    %v407 = vld [vmem:[#allocation2 + $0x800] sm:$0xff]
    %v408 = vld [vmem:[#allocation2 + $0x808] sm:$0xff]
    %v409 = vld [vmem:[#allocation2 + $0x810] sm:$0xff]
    %v410 = vld [vmem:[#allocation2 + $0x818] sm:$0xff]
    %v411 = vld [vmem:[#allocation2 + $0x820] sm:$0xff]
    %v412 = vld [vmem:[#allocation2 + $0x828] sm:$0xff]
    %v413 = vld [vmem:[#allocation2 + $0x830] sm:$0xff]
    %v414 = vld [vmem:[#allocation2 + $0x838] sm:$0xff]
    %v415 = vld [vmem:[#allocation2 + $0x840] sm:$0xff]
    %v416 = vld [vmem:[#allocation2 + $0x848] sm:$0xff]
    %v417 = vld [vmem:[#allocation2 + $0x850] sm:$0xff]
    %v418 = vld [vmem:[#allocation2 + $0x858] sm:$0xff]
    %v419 = vld [vmem:[#allocation2 + $0x860] sm:$0xff]
    %v420 = vld [vmem:[#allocation2 + $0x868] sm:$0xff]
    %v421 = vld [vmem:[#allocation2 + $0x870] sm:$0xff]
    %v422 = vld [vmem:[#allocation2 + $0x878] sm:$0xff]
    %v423 = vld [vmem:[#allocation2 + $0x880] sm:$0xff]
    %v424 = vld [vmem:[#allocation2 + $0x888] sm:$0xff]
    %v425 = vld [vmem:[#allocation2 + $0x890] sm:$0xff]
    %v426 = vld [vmem:[#allocation2 + $0x898] sm:$0xff]
    %v427 = vld [vmem:[#allocation2 + $0x8a0] sm:$0xff]
    %v428 = vld [vmem:[#allocation2 + $0x8a8] sm:$0xff]
    %v429 = vld [vmem:[#allocation2 + $0x8b0] sm:$0xff]
    %v430 = vld [vmem:[#allocation2 + $0x8b8] sm:$0xff]
    %v431 = vld [vmem:[#allocation2 + $0x8c0] sm:$0xff]
    %v432 = vld [vmem:[#allocation2 + $0x8c8] sm:$0xff]
    %v433 = vld [vmem:[#allocation2 + $0x8d0] sm:$0xff]
    %v434 = vld [vmem:[#allocation2 + $0x8d8] sm:$0xff]
    %v435 = vld [vmem:[#allocation2 + $0x8e0] sm:$0xff]
    %v436 = vld [vmem:[#allocation2 + $0x8e8] sm:$0xff]
    %v437 = vld [vmem:[#allocation2 + $0x8f0] sm:$0xff]
    %v438 = vld [vmem:[#allocation2 + $0x8f8] sm:$0xff]
    %v439 = vld [vmem:[#allocation2 + $0x900] sm:$0xff]
    %v440 = vld [vmem:[#allocation2 + $0x908] sm:$0xff]
    %v441 = vld [vmem:[#allocation2 + $0x910] sm:$0xff]
    %v442 = vld [vmem:[#allocation2 + $0x918] sm:$0xff]
    %v443 = vld [vmem:[#allocation2 + $0x920] sm:$0xff]
    %v444 = vld [vmem:[#allocation2 + $0x928] sm:$0xff]
    %v445 = vld [vmem:[#allocation2 + $0x930] sm:$0xff]
    %v446 = vld [vmem:[#allocation2 + $0x938] sm:$0xff]
    %v447 = vld [vmem:[#allocation2 + $0x940] sm:$0xff]
    %v448 = vld [vmem:[#allocation2 + $0x948] sm:$0xff]
    %v449 = vld [vmem:[#allocation2 + $0x950] sm:$0xff]
    %v450 = vld [vmem:[#allocation2 + $0x958] sm:$0xff]
    %v451 = vld [vmem:[#allocation2 + $0x960] sm:$0xff]
    %v452 = vld [vmem:[#allocation2 + $0x968] sm:$0xff]
    %v453 = vld [vmem:[#allocation2 + $0x970] sm:$0xff]
    %v454 = vld [vmem:[#allocation2 + $0x978] sm:$0xff]
    %v455 = vld [vmem:[#allocation2 + $0x980] sm:$0xff]
    %v456 = vld [vmem:[#allocation2 + $0x988] sm:$0xff]
    %v457 = vld [vmem:[#allocation2 + $0x990] sm:$0xff]
    %v458 = vld [vmem:[#allocation2 + $0x998] sm:$0xff]
    %v459 = vld [vmem:[#allocation2 + $0x9a0] sm:$0xff]
    %v460 = vld [vmem:[#allocation2 + $0x9a8] sm:$0xff]
    %v461 = vld [vmem:[#allocation2 + $0x9b0] sm:$0xff]
    %v462 = vld [vmem:[#allocation2 + $0x9b8] sm:$0xff]
    %v463 = vld [vmem:[#allocation2 + $0x9c0] sm:$0xff]
    %v464 = vld [vmem:[#allocation2 + $0x9c8] sm:$0xff]
    %v465 = vld [vmem:[#allocation2 + $0x9d0] sm:$0xff]
    %v466 = vld [vmem:[#allocation2 + $0x9d8] sm:$0xff]
    %v467 = vld [vmem:[#allocation2 + $0x9e0] sm:$0xff]
    %v468 = vld [vmem:[#allocation2 + $0x9e8] sm:$0xff]
    %v469 = vld [vmem:[#allocation2 + $0x9f0] sm:$0xff]
    %v470 = vld [vmem:[#allocation2 + $0x9f8] sm:$0xff]
    %v471 = vld [vmem:[#allocation2 + $0xa00] sm:$0xff]
    %v472 = vld [vmem:[#allocation2 + $0xa08] sm:$0xff]
    %v473 = vld [vmem:[#allocation2 + $0xa10] sm:$0xff]
    %v474 = vld [vmem:[#allocation2 + $0xa18] sm:$0xff]
    %v475 = vld [vmem:[#allocation2 + $0xa20] sm:$0xff]
    %v476 = vld [vmem:[#allocation2 + $0xa28] sm:$0xff]
    %v477 = vld [vmem:[#allocation2 + $0xa30] sm:$0xff]
    %v478 = vld [vmem:[#allocation2 + $0xa38] sm:$0xff]
    %v479 = vld [vmem:[#allocation2 + $0xa40] sm:$0xff]
    %v480 = vld [vmem:[#allocation2 + $0xa48] sm:$0xff]
    %v481 = vld [vmem:[#allocation2 + $0xa50] sm:$0xff]
    %v482 = vld [vmem:[#allocation2 + $0xa58] sm:$0xff]
    %v483 = vld [vmem:[#allocation2 + $0xa60] sm:$0xff]
    %v484 = vld [vmem:[#allocation2 + $0xa68] sm:$0xff]
    %v485 = vld [vmem:[#allocation2 + $0xa70] sm:$0xff]
    %v486 = vld [vmem:[#allocation2 + $0xa78] sm:$0xff]
    %v487 = vld [vmem:[#allocation2 + $0xa80] sm:$0xff]
    %v488 = vld [vmem:[#allocation2 + $0xa88] sm:$0xff]
    %v489 = vld [vmem:[#allocation2 + $0xa90] sm:$0xff]
    %v490 = vld [vmem:[#allocation2 + $0xa98] sm:$0xff]
    %v491 = vld [vmem:[#allocation2 + $0xaa0] sm:$0xff]
    %v492 = vld [vmem:[#allocation2 + $0xaa8] sm:$0xff]
    %v493 = vld [vmem:[#allocation2 + $0xab0] sm:$0xff]
    %v494 = vld [vmem:[#allocation2 + $0xab8] sm:$0xff]
    %v495 = vld [vmem:[#allocation2 + $0xac0] sm:$0xff]
    %v496 = vld [vmem:[#allocation2 + $0xac8] sm:$0xff]
    %v497 = vld [vmem:[#allocation2 + $0xad0] sm:$0xff]
    %v498 = vld [vmem:[#allocation2 + $0xad8] sm:$0xff]
    %v499 = vld [vmem:[#allocation2 + $0xae0] sm:$0xff]
    %v500 = vld [vmem:[#allocation2 + $0xae8] sm:$0xff]
    %v501 = vld [vmem:[#allocation2 + $0xaf0] sm:$0xff]
    %v502 = vld [vmem:[#allocation2 + $0xaf8] sm:$0xff]
    %v503 = vld [vmem:[#allocation2 + $0xb00] sm:$0xff]
    %v504 = vld [vmem:[#allocation2 + $0xb08] sm:$0xff]
    %v505 = vld [vmem:[#allocation2 + $0xb10] sm:$0xff]
    %v506 = vld [vmem:[#allocation2 + $0xb18] sm:$0xff]
    %v507 = vld [vmem:[#allocation2 + $0xb20] sm:$0xff]
    %v508 = vld [vmem:[#allocation2 + $0xb28] sm:$0xff]
    %v509 = vld [vmem:[#allocation2 + $0xb30] sm:$0xff]
    %v510 = vld [vmem:[#allocation2 + $0xb38] sm:$0xff]
    %v511 = vld [vmem:[#allocation2 + $0xb40] sm:$0xff]
    %v512 = vld [vmem:[#allocation2 + $0xb48] sm:$0xff]
    %v513 = vld [vmem:[#allocation2 + $0xb50] sm:$0xff]
    %v514 = vld [vmem:[#allocation2 + $0xb58] sm:$0xff]
    %v515 = vld [vmem:[#allocation2 + $0xb60] sm:$0xff]
    %v516 = vld [vmem:[#allocation2 + $0xb68] sm:$0xff]
    %v517 = vld [vmem:[#allocation2 + $0xb70] sm:$0xff]
    %v518 = vld [vmem:[#allocation2 + $0xb78] sm:$0xff]
    %v519 = vld [vmem:[#allocation2 + $0xb80] sm:$0xff]
    %v520 = vld [vmem:[#allocation2 + $0xb88] sm:$0xff]
    %v521 = vld [vmem:[#allocation2 + $0xb90] sm:$0xff]
    %v522 = vld [vmem:[#allocation2 + $0xb98] sm:$0xff]
    %v523 = vld [vmem:[#allocation2 + $0xba0] sm:$0xff]
    %v524 = vld [vmem:[#allocation2 + $0xba8] sm:$0xff]
    %v525 = vld [vmem:[#allocation2 + $0xbb0] sm:$0xff]
    %v526 = vld [vmem:[#allocation2 + $0xbb8] sm:$0xff]
    %v527 = vld [vmem:[#allocation2 + $0xbc0] sm:$0xff]
    %v528 = vld [vmem:[#allocation2 + $0xbc8] sm:$0xff]
    %v529 = vld [vmem:[#allocation2 + $0xbd0] sm:$0xff]
    %v530 = vld [vmem:[#allocation2 + $0xbd8] sm:$0xff]
    %v531 = vld [vmem:[#allocation2 + $0xbe0] sm:$0xff]
    %v532 = vld [vmem:[#allocation2 + $0xbe8] sm:$0xff]
    %v533 = vld [vmem:[#allocation2 + $0xbf0] sm:$0xff]
    %v534 = vld [vmem:[#allocation2 + $0xbf8] sm:$0xff]
    %v535 = vld [vmem:[#allocation2 + $0xc00] sm:$0xff]
    %v536 = vld [vmem:[#allocation2 + $0xc08] sm:$0xff]
    %v537 = vld [vmem:[#allocation2 + $0xc10] sm:$0xff]
    %v538 = vld [vmem:[#allocation2 + $0xc18] sm:$0xff]
    %v539 = vld [vmem:[#allocation2 + $0xc20] sm:$0xff]
    %v540 = vld [vmem:[#allocation2 + $0xc28] sm:$0xff]
    %v541 = vld [vmem:[#allocation2 + $0xc30] sm:$0xff]
    %v542 = vld [vmem:[#allocation2 + $0xc38] sm:$0xff]
    %v543 = vld [vmem:[#allocation2 + $0xc40] sm:$0xff]
    %v544 = vld [vmem:[#allocation2 + $0xc48] sm:$0xff]
    %v545 = vld [vmem:[#allocation2 + $0xc50] sm:$0xff]
    %v546 = vld [vmem:[#allocation2 + $0xc58] sm:$0xff]
    %v547 = vld [vmem:[#allocation2 + $0xc60] sm:$0xff]
    %v548 = vld [vmem:[#allocation2 + $0xc68] sm:$0xff]
    %v549 = vld [vmem:[#allocation2 + $0xc70] sm:$0xff]
    %v550 = vld [vmem:[#allocation2 + $0xc78] sm:$0xff]
    %v551 = vld [vmem:[#allocation2 + $0xc80] sm:$0xff]
    %v552 = vld [vmem:[#allocation2 + $0xc88] sm:$0xff]
    %v553 = vld [vmem:[#allocation2 + $0xc90] sm:$0xff]
    %v554 = vld [vmem:[#allocation2 + $0xc98] sm:$0xff]
    %v555 = vld [vmem:[#allocation2 + $0xca0] sm:$0xff]
    %v556 = vld [vmem:[#allocation2 + $0xca8] sm:$0xff]
    %v557 = vld [vmem:[#allocation2 + $0xcb0] sm:$0xff]
    %v558 = vld [vmem:[#allocation2 + $0xcb8] sm:$0xff]
    %v559 = vld [vmem:[#allocation2 + $0xcc0] sm:$0xff]
    %v560 = vld [vmem:[#allocation2 + $0xcc8] sm:$0xff]
    %v561 = vld [vmem:[#allocation2 + $0xcd0] sm:$0xff]
    %v562 = vld [vmem:[#allocation2 + $0xcd8] sm:$0xff]
    %v563 = vld [vmem:[#allocation2 + $0xce0] sm:$0xff]
    %v564 = vld [vmem:[#allocation2 + $0xce8] sm:$0xff]
    %v565 = vld [vmem:[#allocation2 + $0xcf0] sm:$0xff]
    %v566 = vld [vmem:[#allocation2 + $0xcf8] sm:$0xff]
    %v567 = vld [vmem:[#allocation2 + $0xd00] sm:$0xff]
    %v568 = vld [vmem:[#allocation2 + $0xd08] sm:$0xff]
    %v569 = vld [vmem:[#allocation2 + $0xd10] sm:$0xff]
    %v570 = vld [vmem:[#allocation2 + $0xd18] sm:$0xff]
    %v571 = vld [vmem:[#allocation2 + $0xd20] sm:$0xff]
    %v572 = vld [vmem:[#allocation2 + $0xd28] sm:$0xff]
    %v573 = vld [vmem:[#allocation2 + $0xd30] sm:$0xff]
    %v574 = vld [vmem:[#allocation2 + $0xd38] sm:$0xff]
    %v575 = vld [vmem:[#allocation2 + $0xd40] sm:$0xff]
    %v576 = vld [vmem:[#allocation2 + $0xd48] sm:$0xff]
    %v577 = vld [vmem:[#allocation2 + $0xd50] sm:$0xff]
    %v578 = vld [vmem:[#allocation2 + $0xd58] sm:$0xff]
    %v579 = vld [vmem:[#allocation2 + $0xd60] sm:$0xff]
    %v580 = vld [vmem:[#allocation2 + $0xd68] sm:$0xff]
    %v581 = vld [vmem:[#allocation2 + $0xd70] sm:$0xff]
    %v582 = vld [vmem:[#allocation2 + $0xd78] sm:$0xff]
    %v583 = vld [vmem:[#allocation2 + $0xd80] sm:$0xff]
    %v584 = vld [vmem:[#allocation2 + $0xd88] sm:$0xff]
    %v585 = vld [vmem:[#allocation2 + $0xd90] sm:$0xff]
    %v586 = vld [vmem:[#allocation2 + $0xd98] sm:$0xff]
    %v587 = vld [vmem:[#allocation2 + $0xda0] sm:$0xff]
    %v588 = vld [vmem:[#allocation2 + $0xda8] sm:$0xff]
    %v589 = vld [vmem:[#allocation2 + $0xdb0] sm:$0xff]
    %v590 = vld [vmem:[#allocation2 + $0xdb8] sm:$0xff]
    %v591 = vld [vmem:[#allocation2 + $0xdc0] sm:$0xff]
    %v592 = vld [vmem:[#allocation2 + $0xdc8] sm:$0xff]
    %v593 = vld [vmem:[#allocation2 + $0xdd0] sm:$0xff]
    %v594 = vld [vmem:[#allocation2 + $0xdd8] sm:$0xff]
    %v595 = vld [vmem:[#allocation2 + $0xde0] sm:$0xff]
    %v596 = vld [vmem:[#allocation2 + $0xde8] sm:$0xff]
    %v597 = vld [vmem:[#allocation2 + $0xdf0] sm:$0xff]
    %v598 = vld [vmem:[#allocation2 + $0xdf8] sm:$0xff]
    %v599 = vld [vmem:[#allocation2 + $0xe00] sm:$0xff]
    %v600 = vld [vmem:[#allocation2 + $0xe08] sm:$0xff]
    %v601 = vld [vmem:[#allocation2 + $0xe10] sm:$0xff]
    %v602 = vld [vmem:[#allocation2 + $0xe18] sm:$0xff]
    %v603 = vld [vmem:[#allocation2 + $0xe20] sm:$0xff]
    %v604 = vld [vmem:[#allocation2 + $0xe28] sm:$0xff]
    %v605 = vld [vmem:[#allocation2 + $0xe30] sm:$0xff]
    %v606 = vld [vmem:[#allocation2 + $0xe38] sm:$0xff]
    %v607 = vld [vmem:[#allocation2 + $0xe40] sm:$0xff]
    %v608 = vld [vmem:[#allocation2 + $0xe48] sm:$0xff]
    %v609 = vld [vmem:[#allocation2 + $0xe50] sm:$0xff]
    %v610 = vld [vmem:[#allocation2 + $0xe58] sm:$0xff]
    %v611 = vld [vmem:[#allocation2 + $0xe60] sm:$0xff]
    %v612 = vld [vmem:[#allocation2 + $0xe68] sm:$0xff]
    %v613 = vld [vmem:[#allocation2 + $0xe70] sm:$0xff]
    %v614 = vld [vmem:[#allocation2 + $0xe78] sm:$0xff]
    %v615 = vld [vmem:[#allocation2 + $0xe80] sm:$0xff]
    %v616 = vld [vmem:[#allocation2 + $0xe88] sm:$0xff]
    %v617 = vld [vmem:[#allocation2 + $0xe90] sm:$0xff]
    %v618 = vld [vmem:[#allocation2 + $0xe98] sm:$0xff]
    %v619 = vld [vmem:[#allocation2 + $0xea0] sm:$0xff]
    %v620 = vld [vmem:[#allocation2 + $0xea8] sm:$0xff]
    %v621 = vld [vmem:[#allocation2 + $0xeb0] sm:$0xff]
    %v622 = vld [vmem:[#allocation2 + $0xeb8] sm:$0xff]
    %v623 = vld [vmem:[#allocation2 + $0xec0] sm:$0xff]
    %v624 = vld [vmem:[#allocation2 + $0xec8] sm:$0xff]
    %v625 = vld [vmem:[#allocation2 + $0xed0] sm:$0xff]
    %v626 = vld [vmem:[#allocation2 + $0xed8] sm:$0xff]
    %v627 = vld [vmem:[#allocation2 + $0xee0] sm:$0xff]
    %v628 = vld [vmem:[#allocation2 + $0xee8] sm:$0xff]
    %v629 = vld [vmem:[#allocation2 + $0xef0] sm:$0xff]
    %v630 = vld [vmem:[#allocation2 + $0xef8] sm:$0xff]
    %v631 = vld [vmem:[#allocation2 + $0xf00] sm:$0xff]
    %v632 = vld [vmem:[#allocation2 + $0xf08] sm:$0xff]
    %v633 = vld [vmem:[#allocation2 + $0xf10] sm:$0xff]
    %v634 = vld [vmem:[#allocation2 + $0xf18] sm:$0xff]
    %v635 = vld [vmem:[#allocation2 + $0xf20] sm:$0xff]
    %v636 = vld [vmem:[#allocation2 + $0xf28] sm:$0xff]
    %v637 = vld [vmem:[#allocation2 + $0xf30] sm:$0xff]
    %v638 = vld [vmem:[#allocation2 + $0xf38] sm:$0xff]
    %v639 = vld [vmem:[#allocation2 + $0xf40] sm:$0xff]
    %v640 = vld [vmem:[#allocation2 + $0xf48] sm:$0xff]
    %v641 = vld [vmem:[#allocation2 + $0xf50] sm:$0xff]
    %v642 = vld [vmem:[#allocation2 + $0xf58] sm:$0xff]
    %v643 = vld [vmem:[#allocation2 + $0xf60] sm:$0xff]
    %v644 = vld [vmem:[#allocation2 + $0xf68] sm:$0xff]
    %v645 = vld [vmem:[#allocation2 + $0xf70] sm:$0xff]
    %v646 = vld [vmem:[#allocation2 + $0xf78] sm:$0xff]
    %v647 = vld [vmem:[#allocation2 + $0xf80] sm:$0xff]
    %v648 = vld [vmem:[#allocation2 + $0xf88] sm:$0xff]
    %v649 = vld [vmem:[#allocation2 + $0xf90] sm:$0xff]
    %v650 = vld [vmem:[#allocation2 + $0xf98] sm:$0xff]
    %v651 = vld [vmem:[#allocation2 + $0xfa0] sm:$0xff]
    %v652 = vld [vmem:[#allocation2 + $0xfa8] sm:$0xff]
    %v653 = vld [vmem:[#allocation2 + $0xfb0] sm:$0xff]
    %v654 = vld [vmem:[#allocation2 + $0xfb8] sm:$0xff]
    %v655 = vld [vmem:[#allocation2 + $0xfc0] sm:$0xff]
    %v656 = vld [vmem:[#allocation2 + $0xfc8] sm:$0xff]
    %v657 = vld [vmem:[#allocation2 + $0xfd0] sm:$0xff]
    %v658 = vld [vmem:[#allocation2 + $0xfd8] sm:$0xff]
    %v659 = vld [vmem:[#allocation2 + $0xfe0] sm:$0xff]
    %v660 = vld [vmem:[#allocation2 + $0xfe8] sm:$0xff]
    %v661 = vld [vmem:[#allocation2 + $0xff0] sm:$0xff]
    %v662 = vld [vmem:[#allocation2 + $0xff8] sm:$0xff]
    %v663 = vld [vmem:[#allocation2 + $0x1000] sm:$0xff]
    %v664 = vld [vmem:[#allocation2 + $0x1008] sm:$0xff]
    %v665 = vld [vmem:[#allocation2 + $0x1010] sm:$0xff]
    %v666 = vld [vmem:[#allocation2 + $0x1018] sm:$0xff]
    %v667 = vld [vmem:[#allocation2 + $0x1020] sm:$0xff]
    %v668 = vld [vmem:[#allocation2 + $0x1028] sm:$0xff]
    %v669 = vld [vmem:[#allocation2 + $0x1030] sm:$0xff]
    %v670 = vld [vmem:[#allocation2 + $0x1038] sm:$0xff]
    %v671 = vld [vmem:[#allocation2 + $0x1040] sm:$0xff]
    %v672 = vld [vmem:[#allocation2 + $0x1048] sm:$0xff]
    %v673 = vld [vmem:[#allocation2 + $0x1050] sm:$0xff]
    %v674 = vld [vmem:[#allocation2 + $0x1058] sm:$0xff]
    %v675 = vld [vmem:[#allocation2 + $0x1060] sm:$0xff]
    %v676 = vld [vmem:[#allocation2 + $0x1068] sm:$0xff]
    %v677 = vld [vmem:[#allocation2 + $0x1070] sm:$0xff]
    %v678 = vld [vmem:[#allocation2 + $0x1078] sm:$0xff]
    %v679 = vld [vmem:[#allocation2 + $0x1080] sm:$0xff]
    %v680 = vld [vmem:[#allocation2 + $0x1088] sm:$0xff]
    %v681 = vld [vmem:[#allocation2 + $0x1090] sm:$0xff]
    %v682 = vld [vmem:[#allocation2 + $0x1098] sm:$0xff]
    %v683 = vld [vmem:[#allocation2 + $0x10a0] sm:$0xff]
    %v684 = vld [vmem:[#allocation2 + $0x10a8] sm:$0xff]
    %v685 = vld [vmem:[#allocation2 + $0x10b0] sm:$0xff]
    %v686 = vld [vmem:[#allocation2 + $0x10b8] sm:$0xff]
    %v687 = vld [vmem:[#allocation2 + $0x10c0] sm:$0xff]
    %v688 = vld [vmem:[#allocation2 + $0x10c8] sm:$0xff]
    %v689 = vld [vmem:[#allocation2 + $0x10d0] sm:$0xff]
    %v690 = vld [vmem:[#allocation2 + $0x10d8] sm:$0xff]
    %v691 = vld [vmem:[#allocation2 + $0x10e0] sm:$0xff]
    %v692 = vld [vmem:[#allocation2 + $0x10e8] sm:$0xff]
    %v693 = vld [vmem:[#allocation2 + $0x10f0] sm:$0xff]
    %v694 = vld [vmem:[#allocation2 + $0x10f8] sm:$0xff]
    %v695 = vld [vmem:[#allocation2 + $0x1100] sm:$0xff]
    %v696 = vld [vmem:[#allocation2 + $0x1108] sm:$0xff]
    %v697 = vld [vmem:[#allocation2 + $0x1110] sm:$0xff]
    %v698 = vld [vmem:[#allocation2 + $0x1118] sm:$0xff]
    %v699 = vld [vmem:[#allocation2 + $0x1120] sm:$0xff]
    %v700 = vld [vmem:[#allocation2 + $0x1128] sm:$0xff]
    %v701 = vld [vmem:[#allocation2 + $0x1130] sm:$0xff]
    %v702 = vld [vmem:[#allocation2 + $0x1138] sm:$0xff]
    %v703 = vld [vmem:[#allocation2 + $0x1140] sm:$0xff]
    %v704 = vld [vmem:[#allocation2 + $0x1148] sm:$0xff]
    %v705 = vld [vmem:[#allocation2 + $0x1150] sm:$0xff]
    %v706 = vld [vmem:[#allocation2 + $0x1158] sm:$0xff]
    %v707 = vld [vmem:[#allocation2 + $0x1160] sm:$0xff]
    %v708 = vld [vmem:[#allocation2 + $0x1168] sm:$0xff]
    %v709 = vld [vmem:[#allocation2 + $0x1170] sm:$0xff]
    %v710 = vld [vmem:[#allocation2 + $0x1178] sm:$0xff]
    %v711 = vld [vmem:[#allocation2 + $0x1180] sm:$0xff]
    %v712 = vld [vmem:[#allocation2 + $0x1188] sm:$0xff]
    %v713 = vld [vmem:[#allocation2 + $0x1190] sm:$0xff]
    %v714 = vld [vmem:[#allocation2 + $0x1198] sm:$0xff]
    %v715 = vld [vmem:[#allocation2 + $0x11a0] sm:$0xff]
    %v716 = vld [vmem:[#allocation2 + $0x11a8] sm:$0xff]
    %v717 = vld [vmem:[#allocation2 + $0x11b0] sm:$0xff]
    %v718 = vld [vmem:[#allocation2 + $0x11b8] sm:$0xff]
    %v719 = vld [vmem:[#allocation2 + $0x11c0] sm:$0xff]
    %v720 = vld [vmem:[#allocation2 + $0x11c8] sm:$0xff]
    %v721 = vld [vmem:[#allocation2 + $0x11d0] sm:$0xff]
    %v722 = vld [vmem:[#allocation2 + $0x11d8] sm:$0xff]
    %v723 = vld [vmem:[#allocation2 + $0x11e0] sm:$0xff]
    %v724 = vld [vmem:[#allocation2 + $0x11e8] sm:$0xff]
    %v725 = vld [vmem:[#allocation2 + $0x11f0] sm:$0xff]
    %v726 = vld [vmem:[#allocation2 + $0x11f8] sm:$0xff]
    %v727 = vld [vmem:[#allocation2 + $0x1200] sm:$0xff]
    %v728 = vld [vmem:[#allocation2 + $0x1208] sm:$0xff]
    %v729 = vld [vmem:[#allocation2 + $0x1210] sm:$0xff]
    %v730 = vld [vmem:[#allocation2 + $0x1218] sm:$0xff]
    %v731 = vld [vmem:[#allocation2 + $0x1220] sm:$0xff]
    %v732 = vld [vmem:[#allocation2 + $0x1228] sm:$0xff]
    %v733 = vld [vmem:[#allocation2 + $0x1230] sm:$0xff]
    %v734 = vld [vmem:[#allocation2 + $0x1238] sm:$0xff]
    %v735 = vld [vmem:[#allocation2 + $0x1240] sm:$0xff]
    %v736 = vld [vmem:[#allocation2 + $0x1248] sm:$0xff]
    %v737 = vld [vmem:[#allocation2 + $0x1250] sm:$0xff]
    %v738 = vld [vmem:[#allocation2 + $0x1258] sm:$0xff]
    %v739 = vld [vmem:[#allocation2 + $0x1260] sm:$0xff]
    %v740 = vld [vmem:[#allocation2 + $0x1268] sm:$0xff]
    %v741 = vld [vmem:[#allocation2 + $0x1270] sm:$0xff]
    %v742 = vld [vmem:[#allocation2 + $0x1278] sm:$0xff]
    %v743 = vld [vmem:[#allocation2 + $0x1280] sm:$0xff]
    %v744 = vld [vmem:[#allocation2 + $0x1288] sm:$0xff]
    %v745 = vld [vmem:[#allocation2 + $0x1290] sm:$0xff]
    %v746 = vld [vmem:[#allocation2 + $0x1298] sm:$0xff]
    %v747 = vld [vmem:[#allocation2 + $0x12a0] sm:$0xff]
    %v748 = vld [vmem:[#allocation2 + $0x12a8] sm:$0xff]
    %v749 = vld [vmem:[#allocation2 + $0x12b0] sm:$0xff]
    %v750 = vld [vmem:[#allocation2 + $0x12b8] sm:$0xff]
    %v751 = vld [vmem:[#allocation2 + $0x12c0] sm:$0xff]
    %v752 = vld [vmem:[#allocation2 + $0x12c8] sm:$0xff]
    %v753 = vld [vmem:[#allocation2 + $0x12d0] sm:$0xff]
    %v754 = vld [vmem:[#allocation2 + $0x12d8] sm:$0xff]
    %v755 = vld [vmem:[#allocation2 + $0x12e0] sm:$0xff]
    %v756 = vld [vmem:[#allocation2 + $0x12e8] sm:$0xff]
    %v757 = vld [vmem:[#allocation2 + $0x12f0] sm:$0xff]
    %v758 = vld [vmem:[#allocation2 + $0x12f8] sm:$0xff]
    %v759 = vld [vmem:[#allocation2 + $0x1300] sm:$0xff]
    %v760 = vld [vmem:[#allocation2 + $0x1308] sm:$0xff]
    %v761 = vld [vmem:[#allocation2 + $0x1310] sm:$0xff]
    %v762 = vld [vmem:[#allocation2 + $0x1318] sm:$0xff]
    %v763 = vld [vmem:[#allocation2 + $0x1320] sm:$0xff]
    %v764 = vld [vmem:[#allocation2 + $0x1328] sm:$0xff]
    %v765 = vld [vmem:[#allocation2 + $0x1330] sm:$0xff]
    %v766 = vld [vmem:[#allocation2 + $0x1338] sm:$0xff]
    %v767 = vld [vmem:[#allocation2 + $0x1340] sm:$0xff]
    %v768 = vld [vmem:[#allocation2 + $0x1348] sm:$0xff]
    %v769 = vld [vmem:[#allocation2 + $0x1350] sm:$0xff]
    %v770 = vld [vmem:[#allocation2 + $0x1358] sm:$0xff]
    %v771 = vld [vmem:[#allocation2 + $0x1360] sm:$0xff]
    %v772 = vld [vmem:[#allocation2 + $0x1368] sm:$0xff]
    %v773 = vld [vmem:[#allocation2 + $0x1370] sm:$0xff]
    %v774 = vld [vmem:[#allocation2 + $0x1378] sm:$0xff]
    %v775 = vld [vmem:[#allocation2 + $0x1380] sm:$0xff]
    %v776 = vld [vmem:[#allocation2 + $0x1388] sm:$0xff]
    %v777 = vld [vmem:[#allocation2 + $0x1390] sm:$0xff]
    %v778 = vld [vmem:[#allocation2 + $0x1398] sm:$0xff]
    %v779 = vld [vmem:[#allocation2 + $0x13a0] sm:$0xff]
    %v780 = vld [vmem:[#allocation2 + $0x13a8] sm:$0xff]
    %v781 = vld [vmem:[#allocation2 + $0x13b0] sm:$0xff]
    %v782 = vld [vmem:[#allocation2 + $0x13b8] sm:$0xff]
    %v783 = vld [vmem:[#allocation2 + $0x13c0] sm:$0xff]
    %v784 = vld [vmem:[#allocation2 + $0x13c8] sm:$0xff]
    %v785 = vld [vmem:[#allocation2 + $0x13d0] sm:$0xff]
    %v786 = vld [vmem:[#allocation2 + $0x13d8] sm:$0xff]
    %v787 = vld [vmem:[#allocation2 + $0x13e0] sm:$0xff]
    %v788 = vld [vmem:[#allocation2 + $0x13e8] sm:$0xff]
    %v789 = vld [vmem:[#allocation2 + $0x13f0] sm:$0xff]
    %v790 = vld [vmem:[#allocation2 + $0x13f8] sm:$0xff]
    %v791 = vld [vmem:[#allocation2 + $0x1400] sm:$0xff]
    %v792 = vld [vmem:[#allocation2 + $0x1408] sm:$0xff]
    %v793 = vld [vmem:[#allocation2 + $0x1410] sm:$0xff]
    %v794 = vld [vmem:[#allocation2 + $0x1418] sm:$0xff]
    %v795 = vld [vmem:[#allocation2 + $0x1420] sm:$0xff]
    %v796 = vld [vmem:[#allocation2 + $0x1428] sm:$0xff]
    %v797 = vld [vmem:[#allocation2 + $0x1430] sm:$0xff]
    %v798 = vld [vmem:[#allocation2 + $0x1438] sm:$0xff]
    %v799 = vld [vmem:[#allocation2 + $0x1440] sm:$0xff]
    %v800 = vld [vmem:[#allocation2 + $0x1448] sm:$0xff]
    %v801 = vld [vmem:[#allocation2 + $0x1450] sm:$0xff]
    %v802 = vld [vmem:[#allocation2 + $0x1458] sm:$0xff]
    %v803 = vld [vmem:[#allocation2 + $0x1460] sm:$0xff]
    %v804 = vld [vmem:[#allocation2 + $0x1468] sm:$0xff]
    %v805 = vld [vmem:[#allocation2 + $0x1470] sm:$0xff]
    %v806 = vld [vmem:[#allocation2 + $0x1478] sm:$0xff]
    %v807 = vld [vmem:[#allocation2 + $0x1480] sm:$0xff]
    %v808 = vld [vmem:[#allocation2 + $0x1488] sm:$0xff]
    %v809 = vld [vmem:[#allocation2 + $0x1490] sm:$0xff]
    %v810 = vld [vmem:[#allocation2 + $0x1498] sm:$0xff]
    %v811 = vld [vmem:[#allocation2 + $0x14a0] sm:$0xff]
    %v812 = vld [vmem:[#allocation2 + $0x14a8] sm:$0xff]
    %v813 = vld [vmem:[#allocation2 + $0x14b0] sm:$0xff]
    %v814 = vld [vmem:[#allocation2 + $0x14b8] sm:$0xff]
    %v815 = vld [vmem:[#allocation2 + $0x14c0] sm:$0xff]
    %v816 = vld [vmem:[#allocation2 + $0x14c8] sm:$0xff]
    %v817 = vld [vmem:[#allocation2 + $0x14d0] sm:$0xff]
    %v818 = vld [vmem:[#allocation2 + $0x14d8] sm:$0xff]
    %v819 = vld [vmem:[#allocation2 + $0x14e0] sm:$0xff]
    %v820 = vld [vmem:[#allocation2 + $0x14e8] sm:$0xff]
    %v821 = vld [vmem:[#allocation2 + $0x14f0] sm:$0xff]
    %v822 = vld [vmem:[#allocation2 + $0x14f8] sm:$0xff]
    %v823 = vld [vmem:[#allocation2 + $0x1500] sm:$0xff]
    %v824 = vld [vmem:[#allocation2 + $0x1508] sm:$0xff]
    %v825 = vld [vmem:[#allocation2 + $0x1510] sm:$0xff]
    %v826 = vld [vmem:[#allocation2 + $0x1518] sm:$0xff]
    %v827 = vld [vmem:[#allocation2 + $0x1520] sm:$0xff]
    %v828 = vld [vmem:[#allocation2 + $0x1528] sm:$0xff]
    %v829 = vld [vmem:[#allocation2 + $0x1530] sm:$0xff]
    %v830 = vld [vmem:[#allocation2 + $0x1538] sm:$0xff]
    %v831 = vld [vmem:[#allocation2 + $0x1540] sm:$0xff]
    %v832 = vld [vmem:[#allocation2 + $0x1548] sm:$0xff]
    %v833 = vld [vmem:[#allocation2 + $0x1550] sm:$0xff]
    %v834 = vld [vmem:[#allocation2 + $0x1558] sm:$0xff]
    %v835 = vld [vmem:[#allocation2 + $0x1560] sm:$0xff]
    %v836 = vld [vmem:[#allocation2 + $0x1568] sm:$0xff]
    %v837 = vld [vmem:[#allocation2 + $0x1570] sm:$0xff]
    %v838 = vld [vmem:[#allocation2 + $0x1578] sm:$0xff]
    %v839 = vld [vmem:[#allocation2 + $0x1580] sm:$0xff]
    %v840 = vld [vmem:[#allocation2 + $0x1588] sm:$0xff]
    %v841 = vld [vmem:[#allocation2 + $0x1590] sm:$0xff]
    %v842 = vld [vmem:[#allocation2 + $0x1598] sm:$0xff]
    %v843 = vld [vmem:[#allocation2 + $0x15a0] sm:$0xff]
    %v844 = vld [vmem:[#allocation2 + $0x15a8] sm:$0xff]
    %v845 = vld [vmem:[#allocation2 + $0x15b0] sm:$0xff]
    %v846 = vld [vmem:[#allocation2 + $0x15b8] sm:$0xff]
    %v847 = vld [vmem:[#allocation2 + $0x15c0] sm:$0xff]
    %v848 = vld [vmem:[#allocation2 + $0x15c8] sm:$0xff]
    %v849 = vld [vmem:[#allocation2 + $0x15d0] sm:$0xff]
    %v850 = vld [vmem:[#allocation2 + $0x15d8] sm:$0xff]
    %v851 = vld [vmem:[#allocation2 + $0x15e0] sm:$0xff]
    %v852 = vld [vmem:[#allocation2 + $0x15e8] sm:$0xff]
    %v853 = vld [vmem:[#allocation2 + $0x15f0] sm:$0xff]
    %v854 = vld [vmem:[#allocation2 + $0x15f8] sm:$0xff]
    %v855 = vld [vmem:[#allocation2 + $0x1600] sm:$0xff]
    %v856 = vld [vmem:[#allocation2 + $0x1608] sm:$0xff]
    %v857 = vld [vmem:[#allocation2 + $0x1610] sm:$0xff]
    %v858 = vld [vmem:[#allocation2 + $0x1618] sm:$0xff]
    %v859 = vld [vmem:[#allocation2 + $0x1620] sm:$0xff]
    %v860 = vld [vmem:[#allocation2 + $0x1628] sm:$0xff]
    %v861 = vld [vmem:[#allocation2 + $0x1630] sm:$0xff]
    %v862 = vld [vmem:[#allocation2 + $0x1638] sm:$0xff]
    %v863 = vld [vmem:[#allocation2 + $0x1640] sm:$0xff]
    %v864 = vld [vmem:[#allocation2 + $0x1648] sm:$0xff]
    %v865 = vld [vmem:[#allocation2 + $0x1650] sm:$0xff]
    %v866 = vld [vmem:[#allocation2 + $0x1658] sm:$0xff]
    %v867 = vld [vmem:[#allocation2 + $0x1660] sm:$0xff]
    %v868 = vld [vmem:[#allocation2 + $0x1668] sm:$0xff]
    %v869 = vld [vmem:[#allocation2 + $0x1670] sm:$0xff]
    %v870 = vld [vmem:[#allocation2 + $0x1678] sm:$0xff]
    %v871 = vld [vmem:[#allocation2 + $0x1680] sm:$0xff]
    %v872 = vld [vmem:[#allocation2 + $0x1688] sm:$0xff]
    %v873 = vld [vmem:[#allocation2 + $0x1690] sm:$0xff]
    %v874 = vld [vmem:[#allocation2 + $0x1698] sm:$0xff]
    %v875 = vld [vmem:[#allocation2 + $0x16a0] sm:$0xff]
    %v876 = vld [vmem:[#allocation2 + $0x16a8] sm:$0xff]
    %v877 = vld [vmem:[#allocation2 + $0x16b0] sm:$0xff]
    %v878 = vld [vmem:[#allocation2 + $0x16b8] sm:$0xff]
    %v879 = vld [vmem:[#allocation2 + $0x16c0] sm:$0xff]
    %v880 = vld [vmem:[#allocation2 + $0x16c8] sm:$0xff]
    %v881 = vld [vmem:[#allocation2 + $0x16d0] sm:$0xff]
    %v882 = vld [vmem:[#allocation2 + $0x16d8] sm:$0xff]
    %v883 = vld [vmem:[#allocation2 + $0x16e0] sm:$0xff]
    %v884 = vld [vmem:[#allocation2 + $0x16e8] sm:$0xff]
    %v885 = vld [vmem:[#allocation2 + $0x16f0] sm:$0xff]
    %v886 = vld [vmem:[#allocation2 + $0x16f8] sm:$0xff]
    %v887 = vld [vmem:[#allocation2 + $0x1700] sm:$0xff]
    %v888 = vld [vmem:[#allocation2 + $0x1708] sm:$0xff]
    %v889 = vld [vmem:[#allocation2 + $0x1710] sm:$0xff]
    %v890 = vld [vmem:[#allocation2 + $0x1718] sm:$0xff]
    %v891 = vld [vmem:[#allocation2 + $0x1720] sm:$0xff]
    %v892 = vld [vmem:[#allocation2 + $0x1728] sm:$0xff]
    %v893 = vld [vmem:[#allocation2 + $0x1730] sm:$0xff]
    %v894 = vld [vmem:[#allocation2 + $0x1738] sm:$0xff]
    %v895 = vld [vmem:[#allocation2 + $0x1740] sm:$0xff]
    %v896 = vld [vmem:[#allocation2 + $0x1748] sm:$0xff]
    %v897 = vld [vmem:[#allocation2 + $0x1750] sm:$0xff]
    %v898 = vld [vmem:[#allocation2 + $0x1758] sm:$0xff]
    %v899 = vld [vmem:[#allocation2 + $0x1760] sm:$0xff]
    %v900 = vld [vmem:[#allocation2 + $0x1768] sm:$0xff]
    %v901 = vld [vmem:[#allocation2 + $0x1770] sm:$0xff]
    %v902 = vld [vmem:[#allocation2 + $0x1778] sm:$0xff]
    %v903 = vld [vmem:[#allocation2 + $0x1780] sm:$0xff]
    %v904 = vld [vmem:[#allocation2 + $0x1788] sm:$0xff]
    %v905 = vld [vmem:[#allocation2 + $0x1790] sm:$0xff]
    %v906 = vld [vmem:[#allocation2 + $0x1798] sm:$0xff]
    %v907 = vld [vmem:[#allocation2 + $0x17a0] sm:$0xff]
    %v908 = vld [vmem:[#allocation2 + $0x17a8] sm:$0xff]
    %v909 = vld [vmem:[#allocation2 + $0x17b0] sm:$0xff]
    %v910 = vld [vmem:[#allocation2 + $0x17b8] sm:$0xff]
    %v911 = vld [vmem:[#allocation2 + $0x17c0] sm:$0xff]
    %v912 = vld [vmem:[#allocation2 + $0x17c8] sm:$0xff]
    %v913 = vld [vmem:[#allocation2 + $0x17d0] sm:$0xff]
    %v914 = vld [vmem:[#allocation2 + $0x17d8] sm:$0xff]
    %v915 = vld [vmem:[#allocation2 + $0x17e0] sm:$0xff]
    %v916 = vld [vmem:[#allocation2 + $0x17e8] sm:$0xff]
    %v917 = vld [vmem:[#allocation2 + $0x17f0] sm:$0xff]
    %v918 = vld [vmem:[#allocation2 + $0x17f8] sm:$0xff]
    %v919 = vld [vmem:[#allocation5] sm:$0xf]
    %v921 = vlaneseq
    %v922 = vshrl.u32 %v921, 7
    %v923 = vsub.s32 0, %v922
    %v924 = vrot.slane %v919, %v923
    %v925 = vlaneseq
    %v926 = vshrl.u32 %v925, 7
    %v927 = vsub.s32 1, %v926
    %v928 = vrot.slane %v919, %v927
    %v929 = vlaneseq
    %v930 = vshrl.u32 %v929, 7
    %v931 = vsub.s32 2, %v930
    %v932 = vrot.slane %v919, %v931
    %v933 = vlaneseq
    %v934 = vshrl.u32 %v933, 7
    %v935 = vsub.s32 3, %v934
    %v936 = vrot.slane %v919, %v935
    %v953 = vunpack.c.l.b16 %v139
    %v954 = vunpack.c.h.b16 %v139
    %v955 = vunpack.c.l.b16 %v140
    %v956 = vunpack.c.h.b16 %v140
    %v957 = vunpack.c.l.b16 %v141
    %v958 = vunpack.c.h.b16 %v141
    %v959 = vunpack.c.l.b16 %v142
    %v960 = vunpack.c.h.b16 %v142
    %v961 = vunpack.c.l.b16 %v143
    %v962 = vunpack.c.h.b16 %v143
    %v963 = vunpack.c.l.b16 %v144
    %v964 = vunpack.c.h.b16 %v144
    %v965 = vunpack.c.l.b16 %v145
    %v966 = vunpack.c.h.b16 %v145
    %v967 = vunpack.c.l.b16 %v146
    %v968 = vunpack.c.h.b16 %v146
    %v969 = vunpack.c.l.b16 %v147
    %v970 = vunpack.c.h.b16 %v147
    %v971 = vunpack.c.l.b16 %v148
    %v972 = vunpack.c.h.b16 %v148
    %v973 = vunpack.c.l.b16 %v149
    %v974 = vunpack.c.h.b16 %v149
    %v975 = vunpack.c.l.b16 %v150
    %v976 = vunpack.c.h.b16 %v150
    %v977 = vpack.c.b16 %v953, %v953
    %v978 = vpack.c.b16 %v954, %v954
    %v979 = vpack.c.b16 %v955, %v955
    %v980 = vpack.c.b16 %v956, %v956
    %v981 = vpack.c.b16 %v957, %v957
    %v982 = vpack.c.b16 %v958, %v958
    %v983 = vpack.c.b16 %v959, %v959
    %v984 = vpack.c.b16 %v960, %v960
    %v985 = vpack.c.b16 %v961, %v961
    %v986 = vpack.c.b16 %v962, %v962
    %v987 = vpack.c.b16 %v963, %v963
    %v988 = vpack.c.b16 %v964, %v964
    %v989 = vpack.c.b16 %v965, %v965
    %v990 = vpack.c.b16 %v966, %v966
    %v991 = vpack.c.b16 %v967, %v967
    %v992 = vpack.c.b16 %v968, %v968
    %v993 = vpack.c.b16 %v969, %v969
    %v994 = vpack.c.b16 %v970, %v970
    %v995 = vpack.c.b16 %v971, %v971
    %v996 = vpack.c.b16 %v972, %v972
    %v997 = vpack.c.b16 %v973, %v973
    %v998 = vpack.c.b16 %v974, %v974
    %v999 = vpack.c.b16 %v975, %v975
    %v1000 = vpack.c.b16 %v976, %v976
    %v1793 = vunpack.c.l.b16 %v151
    %v1794 = vunpack.c.h.b16 %v151
    %v1795 = vunpack.c.l.b16 %v152
    %v1796 = vunpack.c.h.b16 %v152
    %v1797 = vunpack.c.l.b16 %v153
    %v1798 = vunpack.c.h.b16 %v153
    %v1799 = vunpack.c.l.b16 %v154
    %v1800 = vunpack.c.h.b16 %v154
    %v1801 = vunpack.c.l.b16 %v155
    %v1802 = vunpack.c.h.b16 %v155
    %v1803 = vunpack.c.l.b16 %v156
    %v1804 = vunpack.c.h.b16 %v156
    %v1805 = vunpack.c.l.b16 %v157
    %v1806 = vunpack.c.h.b16 %v157
    %v1807 = vunpack.c.l.b16 %v158
    %v1808 = vunpack.c.h.b16 %v158
    %v1809 = vunpack.c.l.b16 %v159
    %v1810 = vunpack.c.h.b16 %v159
    %v1811 = vunpack.c.l.b16 %v160
    %v1812 = vunpack.c.h.b16 %v160
    %v1813 = vunpack.c.l.b16 %v161
    %v1814 = vunpack.c.h.b16 %v161
    %v1815 = vunpack.c.l.b16 %v162
    %v1816 = vunpack.c.h.b16 %v162
    %v1817 = vunpack.c.l.b16 %v163
    %v1818 = vunpack.c.h.b16 %v163
    %v1819 = vunpack.c.l.b16 %v164
    %v1820 = vunpack.c.h.b16 %v164
    %v1821 = vunpack.c.l.b16 %v165
    %v1822 = vunpack.c.h.b16 %v165
    %v1823 = vunpack.c.l.b16 %v166
    %v1824 = vunpack.c.h.b16 %v166
    %v1825 = vunpack.c.l.b16 %v167
    %v1826 = vunpack.c.h.b16 %v167
    %v1827 = vunpack.c.l.b16 %v168
    %v1828 = vunpack.c.h.b16 %v168
    %v1829 = vunpack.c.l.b16 %v169
    %v1830 = vunpack.c.h.b16 %v169
    %v1831 = vunpack.c.l.b16 %v170
    %v1832 = vunpack.c.h.b16 %v170
    %v1833 = vunpack.c.l.b16 %v171
    %v1834 = vunpack.c.h.b16 %v171
    %v1835 = vunpack.c.l.b16 %v172
    %v1836 = vunpack.c.h.b16 %v172
    %v1837 = vunpack.c.l.b16 %v173
    %v1838 = vunpack.c.h.b16 %v173
    %v1839 = vunpack.c.l.b16 %v174
    %v1840 = vunpack.c.h.b16 %v174
    %v1841 = vunpack.c.l.b16 %v175
    %v1842 = vunpack.c.h.b16 %v175
    %v1843 = vunpack.c.l.b16 %v176
    %v1844 = vunpack.c.h.b16 %v176
    %v1845 = vunpack.c.l.b16 %v177
    %v1846 = vunpack.c.h.b16 %v177
    %v1847 = vunpack.c.l.b16 %v178
    %v1848 = vunpack.c.h.b16 %v178
    %v1849 = vunpack.c.l.b16 %v179
    %v1850 = vunpack.c.h.b16 %v179
    %v1851 = vunpack.c.l.b16 %v180
    %v1852 = vunpack.c.h.b16 %v180
    %v1853 = vunpack.c.l.b16 %v181
    %v1854 = vunpack.c.h.b16 %v181
    %v1855 = vunpack.c.l.b16 %v182
    %v1856 = vunpack.c.h.b16 %v182
    %v1857 = vunpack.c.l.b16 %v183
    %v1858 = vunpack.c.h.b16 %v183
    %v1859 = vunpack.c.l.b16 %v184
    %v1860 = vunpack.c.h.b16 %v184
    %v1861 = vunpack.c.l.b16 %v185
    %v1862 = vunpack.c.h.b16 %v185
    %v1863 = vunpack.c.l.b16 %v186
    %v1864 = vunpack.c.h.b16 %v186
    %v1865 = vunpack.c.l.b16 %v187
    %v1866 = vunpack.c.h.b16 %v187
    %v1867 = vunpack.c.l.b16 %v188
    %v1868 = vunpack.c.h.b16 %v188
    %v1869 = vunpack.c.l.b16 %v189
    %v1870 = vunpack.c.h.b16 %v189
    %v1871 = vunpack.c.l.b16 %v190
    %v1872 = vunpack.c.h.b16 %v190
    %v1873 = vunpack.c.l.b16 %v191
    %v1874 = vunpack.c.h.b16 %v191
    %v1875 = vunpack.c.l.b16 %v192
    %v1876 = vunpack.c.h.b16 %v192
    %v1877 = vunpack.c.l.b16 %v193
    %v1878 = vunpack.c.h.b16 %v193
    %v1879 = vunpack.c.l.b16 %v194
    %v1880 = vunpack.c.h.b16 %v194
    %v1881 = vunpack.c.l.b16 %v195
    %v1882 = vunpack.c.h.b16 %v195
    %v1883 = vunpack.c.l.b16 %v196
    %v1884 = vunpack.c.h.b16 %v196
    %v1885 = vunpack.c.l.b16 %v197
    %v1886 = vunpack.c.h.b16 %v197
    %v1887 = vunpack.c.l.b16 %v198
    %v1888 = vunpack.c.h.b16 %v198
    %v1889 = vunpack.c.l.b16 %v199
    %v1890 = vunpack.c.h.b16 %v199
    %v1891 = vunpack.c.l.b16 %v200
    %v1892 = vunpack.c.h.b16 %v200
    %v1893 = vunpack.c.l.b16 %v201
    %v1894 = vunpack.c.h.b16 %v201
    %v1895 = vunpack.c.l.b16 %v202
    %v1896 = vunpack.c.h.b16 %v202
    %v1897 = vunpack.c.l.b16 %v203
    %v1898 = vunpack.c.h.b16 %v203
    %v1899 = vunpack.c.l.b16 %v204
    %v1900 = vunpack.c.h.b16 %v204
    %v1901 = vunpack.c.l.b16 %v205
    %v1902 = vunpack.c.h.b16 %v205
    %v1903 = vunpack.c.l.b16 %v206
    %v1904 = vunpack.c.h.b16 %v206
    %v1905 = vunpack.c.l.b16 %v207
    %v1906 = vunpack.c.h.b16 %v207
    %v1907 = vunpack.c.l.b16 %v208
    %v1908 = vunpack.c.h.b16 %v208
    %v1909 = vunpack.c.l.b16 %v209
    %v1910 = vunpack.c.h.b16 %v209
    %v1911 = vunpack.c.l.b16 %v210
    %v1912 = vunpack.c.h.b16 %v210
    %v1913 = vunpack.c.l.b16 %v211
    %v1914 = vunpack.c.h.b16 %v211
    %v1915 = vunpack.c.l.b16 %v212
    %v1916 = vunpack.c.h.b16 %v212
    %v1917 = vunpack.c.l.b16 %v213
    %v1918 = vunpack.c.h.b16 %v213
    %v1919 = vunpack.c.l.b16 %v214
    %v1920 = vunpack.c.h.b16 %v214
    %v1921 = vunpack.c.l.b16 %v215
    %v1922 = vunpack.c.h.b16 %v215
    %v1923 = vunpack.c.l.b16 %v216
    %v1924 = vunpack.c.h.b16 %v216
    %v1925 = vunpack.c.l.b16 %v217
    %v1926 = vunpack.c.h.b16 %v217
    %v1927 = vunpack.c.l.b16 %v218
    %v1928 = vunpack.c.h.b16 %v218
    %v1929 = vunpack.c.l.b16 %v219
    %v1930 = vunpack.c.h.b16 %v219
    %v1931 = vunpack.c.l.b16 %v220
    %v1932 = vunpack.c.h.b16 %v220
    %v1933 = vunpack.c.l.b16 %v221
    %v1934 = vunpack.c.h.b16 %v221
    %v1935 = vunpack.c.l.b16 %v222
    %v1936 = vunpack.c.h.b16 %v222
    %v1937 = vunpack.c.l.b16 %v223
    %v1938 = vunpack.c.h.b16 %v223
    %v1939 = vunpack.c.l.b16 %v224
    %v1940 = vunpack.c.h.b16 %v224
    %v1941 = vunpack.c.l.b16 %v225
    %v1942 = vunpack.c.h.b16 %v225
    %v1943 = vunpack.c.l.b16 %v226
    %v1944 = vunpack.c.h.b16 %v226
    %v1945 = vunpack.c.l.b16 %v227
    %v1946 = vunpack.c.h.b16 %v227
    %v1947 = vunpack.c.l.b16 %v228
    %v1948 = vunpack.c.h.b16 %v228
    %v1949 = vunpack.c.l.b16 %v229
    %v1950 = vunpack.c.h.b16 %v229
    %v1951 = vunpack.c.l.b16 %v230
    %v1952 = vunpack.c.h.b16 %v230
    %v1953 = vunpack.c.l.b16 %v231
    %v1954 = vunpack.c.h.b16 %v231
    %v1955 = vunpack.c.l.b16 %v232
    %v1956 = vunpack.c.h.b16 %v232
    %v1957 = vunpack.c.l.b16 %v233
    %v1958 = vunpack.c.h.b16 %v233
    %v1959 = vunpack.c.l.b16 %v234
    %v1960 = vunpack.c.h.b16 %v234
    %v1961 = vunpack.c.l.b16 %v235
    %v1962 = vunpack.c.h.b16 %v235
    %v1963 = vunpack.c.l.b16 %v236
    %v1964 = vunpack.c.h.b16 %v236
    %v1965 = vunpack.c.l.b16 %v237
    %v1966 = vunpack.c.h.b16 %v237
    %v1967 = vunpack.c.l.b16 %v238
    %v1968 = vunpack.c.h.b16 %v238
    %v1969 = vunpack.c.l.b16 %v239
    %v1970 = vunpack.c.h.b16 %v239
    %v1971 = vunpack.c.l.b16 %v240
    %v1972 = vunpack.c.h.b16 %v240
    %v1973 = vunpack.c.l.b16 %v241
    %v1974 = vunpack.c.h.b16 %v241
    %v1975 = vunpack.c.l.b16 %v242
    %v1976 = vunpack.c.h.b16 %v242
    %v1977 = vunpack.c.l.b16 %v243
    %v1978 = vunpack.c.h.b16 %v243
    %v1979 = vunpack.c.l.b16 %v244
    %v1980 = vunpack.c.h.b16 %v244
    %v1981 = vunpack.c.l.b16 %v245
    %v1982 = vunpack.c.h.b16 %v245
    %v1983 = vunpack.c.l.b16 %v246
    %v1984 = vunpack.c.h.b16 %v246
    %v1985 = vunpack.c.l.b16 %v247
    %v1986 = vunpack.c.h.b16 %v247
    %v1987 = vunpack.c.l.b16 %v248
    %v1988 = vunpack.c.h.b16 %v248
    %v1989 = vunpack.c.l.b16 %v249
    %v1990 = vunpack.c.h.b16 %v249
    %v1991 = vunpack.c.l.b16 %v250
    %v1992 = vunpack.c.h.b16 %v250
    %v1993 = vunpack.c.l.b16 %v251
    %v1994 = vunpack.c.h.b16 %v251
    %v1995 = vunpack.c.l.b16 %v252
    %v1996 = vunpack.c.h.b16 %v252
    %v1997 = vunpack.c.l.b16 %v253
    %v1998 = vunpack.c.h.b16 %v253
    %v1999 = vunpack.c.l.b16 %v254
    %v2000 = vunpack.c.h.b16 %v254
    %v2001 = vunpack.c.l.b16 %v255
    %v2002 = vunpack.c.h.b16 %v255
    %v2003 = vunpack.c.l.b16 %v256
    %v2004 = vunpack.c.h.b16 %v256
    %v2005 = vunpack.c.l.b16 %v257
    %v2006 = vunpack.c.h.b16 %v257
    %v2007 = vunpack.c.l.b16 %v258
    %v2008 = vunpack.c.h.b16 %v258
    %v2009 = vunpack.c.l.b16 %v259
    %v2010 = vunpack.c.h.b16 %v259
    %v2011 = vunpack.c.l.b16 %v260
    %v2012 = vunpack.c.h.b16 %v260
    %v2013 = vunpack.c.l.b16 %v261
    %v2014 = vunpack.c.h.b16 %v261
    %v2015 = vunpack.c.l.b16 %v262
    %v2016 = vunpack.c.h.b16 %v262
    %v2017 = vunpack.c.l.b16 %v263
    %v2018 = vunpack.c.h.b16 %v263
    %v2019 = vunpack.c.l.b16 %v264
    %v2020 = vunpack.c.h.b16 %v264
    %v2021 = vunpack.c.l.b16 %v265
    %v2022 = vunpack.c.h.b16 %v265
    %v2023 = vunpack.c.l.b16 %v266
    %v2024 = vunpack.c.h.b16 %v266
    %v2025 = vunpack.c.l.b16 %v267
    %v2026 = vunpack.c.h.b16 %v267
    %v2027 = vunpack.c.l.b16 %v268
    %v2028 = vunpack.c.h.b16 %v268
    %v2029 = vunpack.c.l.b16 %v269
    %v2030 = vunpack.c.h.b16 %v269
    %v2031 = vunpack.c.l.b16 %v270
    %v2032 = vunpack.c.h.b16 %v270
    %v2033 = vunpack.c.l.b16 %v271
    %v2034 = vunpack.c.h.b16 %v271
    %v2035 = vunpack.c.l.b16 %v272
    %v2036 = vunpack.c.h.b16 %v272
    %v2037 = vunpack.c.l.b16 %v273
    %v2038 = vunpack.c.h.b16 %v273
    %v2039 = vunpack.c.l.b16 %v274
    %v2040 = vunpack.c.h.b16 %v274
    %v2041 = vunpack.c.l.b16 %v275
    %v2042 = vunpack.c.h.b16 %v275
    %v2043 = vunpack.c.l.b16 %v276
    %v2044 = vunpack.c.h.b16 %v276
    %v2045 = vunpack.c.l.b16 %v277
    %v2046 = vunpack.c.h.b16 %v277
    %v2047 = vunpack.c.l.b16 %v278
    %v2048 = vunpack.c.h.b16 %v278
    %v2049 = vunpack.c.l.b16 %v279
    %v2050 = vunpack.c.h.b16 %v279
    %v2051 = vunpack.c.l.b16 %v280
    %v2052 = vunpack.c.h.b16 %v280
    %v2053 = vunpack.c.l.b16 %v281
    %v2054 = vunpack.c.h.b16 %v281
    %v2055 = vunpack.c.l.b16 %v282
    %v2056 = vunpack.c.h.b16 %v282
    %v2057 = vunpack.c.l.b16 %v283
    %v2058 = vunpack.c.h.b16 %v283
    %v2059 = vunpack.c.l.b16 %v284
    %v2060 = vunpack.c.h.b16 %v284
    %v2061 = vunpack.c.l.b16 %v285
    %v2062 = vunpack.c.h.b16 %v285
    %v2063 = vunpack.c.l.b16 %v286
    %v2064 = vunpack.c.h.b16 %v286
    %v2065 = vunpack.c.l.b16 %v287
    %v2066 = vunpack.c.h.b16 %v287
    %v2067 = vunpack.c.l.b16 %v288
    %v2068 = vunpack.c.h.b16 %v288
    %v2069 = vunpack.c.l.b16 %v289
    %v2070 = vunpack.c.h.b16 %v289
    %v2071 = vunpack.c.l.b16 %v290
    %v2072 = vunpack.c.h.b16 %v290
    %v2073 = vunpack.c.l.b16 %v291
    %v2074 = vunpack.c.h.b16 %v291
    %v2075 = vunpack.c.l.b16 %v292
    %v2076 = vunpack.c.h.b16 %v292
    %v2077 = vunpack.c.l.b16 %v293
    %v2078 = vunpack.c.h.b16 %v293
    %v2079 = vunpack.c.l.b16 %v294
    %v2080 = vunpack.c.h.b16 %v294
    %v2081 = vunpack.c.l.b16 %v295
    %v2082 = vunpack.c.h.b16 %v295
    %v2083 = vunpack.c.l.b16 %v296
    %v2084 = vunpack.c.h.b16 %v296
    %v2085 = vunpack.c.l.b16 %v297
    %v2086 = vunpack.c.h.b16 %v297
    %v2087 = vunpack.c.l.b16 %v298
    %v2088 = vunpack.c.h.b16 %v298
    %v2089 = vunpack.c.l.b16 %v299
    %v2090 = vunpack.c.h.b16 %v299
    %v2091 = vunpack.c.l.b16 %v300
    %v2092 = vunpack.c.h.b16 %v300
    %v2093 = vunpack.c.l.b16 %v301
    %v2094 = vunpack.c.h.b16 %v301
    %v2095 = vunpack.c.l.b16 %v302
    %v2096 = vunpack.c.h.b16 %v302
    %v2097 = vunpack.c.l.b16 %v303
    %v2098 = vunpack.c.h.b16 %v303
    %v2099 = vunpack.c.l.b16 %v304
    %v2100 = vunpack.c.h.b16 %v304
    %v2101 = vunpack.c.l.b16 %v305
    %v2102 = vunpack.c.h.b16 %v305
    %v2103 = vunpack.c.l.b16 %v306
    %v2104 = vunpack.c.h.b16 %v306
    %v2105 = vunpack.c.l.b16 %v307
    %v2106 = vunpack.c.h.b16 %v307
    %v2107 = vunpack.c.l.b16 %v308
    %v2108 = vunpack.c.h.b16 %v308
    %v2109 = vunpack.c.l.b16 %v309
    %v2110 = vunpack.c.h.b16 %v309
    %v2111 = vunpack.c.l.b16 %v310
    %v2112 = vunpack.c.h.b16 %v310
    %v2113 = vunpack.c.l.b16 %v311
    %v2114 = vunpack.c.h.b16 %v311
    %v2115 = vunpack.c.l.b16 %v312
    %v2116 = vunpack.c.h.b16 %v312
    %v2117 = vunpack.c.l.b16 %v313
    %v2118 = vunpack.c.h.b16 %v313
    %v2119 = vunpack.c.l.b16 %v314
    %v2120 = vunpack.c.h.b16 %v314
    %v2121 = vunpack.c.l.b16 %v315
    %v2122 = vunpack.c.h.b16 %v315
    %v2123 = vunpack.c.l.b16 %v316
    %v2124 = vunpack.c.h.b16 %v316
    %v2125 = vunpack.c.l.b16 %v317
    %v2126 = vunpack.c.h.b16 %v317
    %v2127 = vunpack.c.l.b16 %v318
    %v2128 = vunpack.c.h.b16 %v318
    %v2129 = vunpack.c.l.b16 %v319
    %v2130 = vunpack.c.h.b16 %v319
    %v2131 = vunpack.c.l.b16 %v320
    %v2132 = vunpack.c.h.b16 %v320
    %v2133 = vunpack.c.l.b16 %v321
    %v2134 = vunpack.c.h.b16 %v321
    %v2135 = vunpack.c.l.b16 %v322
    %v2136 = vunpack.c.h.b16 %v322
    %v2137 = vunpack.c.l.b16 %v323
    %v2138 = vunpack.c.h.b16 %v323
    %v2139 = vunpack.c.l.b16 %v324
    %v2140 = vunpack.c.h.b16 %v324
    %v2141 = vunpack.c.l.b16 %v325
    %v2142 = vunpack.c.h.b16 %v325
    %v2143 = vunpack.c.l.b16 %v326
    %v2144 = vunpack.c.h.b16 %v326
    %v2145 = vunpack.c.l.b16 %v327
    %v2146 = vunpack.c.h.b16 %v327
    %v2147 = vunpack.c.l.b16 %v328
    %v2148 = vunpack.c.h.b16 %v328
    %v2149 = vunpack.c.l.b16 %v329
    %v2150 = vunpack.c.h.b16 %v329
    %v2151 = vunpack.c.l.b16 %v330
    %v2152 = vunpack.c.h.b16 %v330
    %v2153 = vunpack.c.l.b16 %v331
    %v2154 = vunpack.c.h.b16 %v331
    %v2155 = vunpack.c.l.b16 %v332
    %v2156 = vunpack.c.h.b16 %v332
    %v2157 = vunpack.c.l.b16 %v333
    %v2158 = vunpack.c.h.b16 %v333
    %v2159 = vunpack.c.l.b16 %v334
    %v2160 = vunpack.c.h.b16 %v334
    %v2161 = vunpack.c.l.b16 %v335
    %v2162 = vunpack.c.h.b16 %v335
    %v2163 = vunpack.c.l.b16 %v336
    %v2164 = vunpack.c.h.b16 %v336
    %v2165 = vunpack.c.l.b16 %v337
    %v2166 = vunpack.c.h.b16 %v337
    %v2167 = vunpack.c.l.b16 %v338
    %v2168 = vunpack.c.h.b16 %v338
    %v2169 = vunpack.c.l.b16 %v339
    %v2170 = vunpack.c.h.b16 %v339
    %v2171 = vunpack.c.l.b16 %v340
    %v2172 = vunpack.c.h.b16 %v340
    %v2173 = vunpack.c.l.b16 %v341
    %v2174 = vunpack.c.h.b16 %v341
    %v2175 = vunpack.c.l.b16 %v342
    %v2176 = vunpack.c.h.b16 %v342
    %v2177 = vunpack.c.l.b16 %v343
    %v2178 = vunpack.c.h.b16 %v343
    %v2179 = vunpack.c.l.b16 %v344
    %v2180 = vunpack.c.h.b16 %v344
    %v2181 = vunpack.c.l.b16 %v345
    %v2182 = vunpack.c.h.b16 %v345
    %v2183 = vunpack.c.l.b16 %v346
    %v2184 = vunpack.c.h.b16 %v346
    %v2185 = vunpack.c.l.b16 %v347
    %v2186 = vunpack.c.h.b16 %v347
    %v2187 = vunpack.c.l.b16 %v348
    %v2188 = vunpack.c.h.b16 %v348
    %v2189 = vunpack.c.l.b16 %v349
    %v2190 = vunpack.c.h.b16 %v349
    %v2191 = vunpack.c.l.b16 %v350
    %v2192 = vunpack.c.h.b16 %v350
    %v2193 = vunpack.c.l.b16 %v351
    %v2194 = vunpack.c.h.b16 %v351
    %v2195 = vunpack.c.l.b16 %v352
    %v2196 = vunpack.c.h.b16 %v352
    %v2197 = vunpack.c.l.b16 %v353
    %v2198 = vunpack.c.h.b16 %v353
    %v2199 = vunpack.c.l.b16 %v354
    %v2200 = vunpack.c.h.b16 %v354
    %v2201 = vunpack.c.l.b16 %v355
    %v2202 = vunpack.c.h.b16 %v355
    %v2203 = vunpack.c.l.b16 %v356
    %v2204 = vunpack.c.h.b16 %v356
    %v2205 = vunpack.c.l.b16 %v357
    %v2206 = vunpack.c.h.b16 %v357
    %v2207 = vunpack.c.l.b16 %v358
    %v2208 = vunpack.c.h.b16 %v358
    %v2209 = vunpack.c.l.b16 %v359
    %v2210 = vunpack.c.h.b16 %v359
    %v2211 = vunpack.c.l.b16 %v360
    %v2212 = vunpack.c.h.b16 %v360
    %v2213 = vunpack.c.l.b16 %v361
    %v2214 = vunpack.c.h.b16 %v361
    %v2215 = vunpack.c.l.b16 %v362
    %v2216 = vunpack.c.h.b16 %v362
    %v2217 = vunpack.c.l.b16 %v363
    %v2218 = vunpack.c.h.b16 %v363
    %v2219 = vunpack.c.l.b16 %v364
    %v2220 = vunpack.c.h.b16 %v364
    %v2221 = vunpack.c.l.b16 %v365
    %v2222 = vunpack.c.h.b16 %v365
    %v2223 = vunpack.c.l.b16 %v366
    %v2224 = vunpack.c.h.b16 %v366
    %v2225 = vunpack.c.l.b16 %v367
    %v2226 = vunpack.c.h.b16 %v367
    %v2227 = vunpack.c.l.b16 %v368
    %v2228 = vunpack.c.h.b16 %v368
    %v2229 = vunpack.c.l.b16 %v369
    %v2230 = vunpack.c.h.b16 %v369
    %v2231 = vunpack.c.l.b16 %v370
    %v2232 = vunpack.c.h.b16 %v370
    %v2233 = vunpack.c.l.b16 %v371
    %v2234 = vunpack.c.h.b16 %v371
    %v2235 = vunpack.c.l.b16 %v372
    %v2236 = vunpack.c.h.b16 %v372
    %v2237 = vunpack.c.l.b16 %v373
    %v2238 = vunpack.c.h.b16 %v373
    %v2239 = vunpack.c.l.b16 %v374
    %v2240 = vunpack.c.h.b16 %v374
    %v2241 = vunpack.c.l.b16 %v375
    %v2242 = vunpack.c.h.b16 %v375
    %v2243 = vunpack.c.l.b16 %v376
    %v2244 = vunpack.c.h.b16 %v376
    %v2245 = vunpack.c.l.b16 %v377
    %v2246 = vunpack.c.h.b16 %v377
    %v2247 = vunpack.c.l.b16 %v378
    %v2248 = vunpack.c.h.b16 %v378
    %v2249 = vunpack.c.l.b16 %v379
    %v2250 = vunpack.c.h.b16 %v379
    %v2251 = vunpack.c.l.b16 %v380
    %v2252 = vunpack.c.h.b16 %v380
    %v2253 = vunpack.c.l.b16 %v381
    %v2254 = vunpack.c.h.b16 %v381
    %v2255 = vunpack.c.l.b16 %v382
    %v2256 = vunpack.c.h.b16 %v382
    %v2257 = vunpack.c.l.b16 %v383
    %v2258 = vunpack.c.h.b16 %v383
    %v2259 = vunpack.c.l.b16 %v384
    %v2260 = vunpack.c.h.b16 %v384
    %v2261 = vunpack.c.l.b16 %v385
    %v2262 = vunpack.c.h.b16 %v385
    %v2263 = vunpack.c.l.b16 %v386
    %v2264 = vunpack.c.h.b16 %v386
    %v2265 = vunpack.c.l.b16 %v387
    %v2266 = vunpack.c.h.b16 %v387
    %v2267 = vunpack.c.l.b16 %v388
    %v2268 = vunpack.c.h.b16 %v388
    %v2269 = vunpack.c.l.b16 %v389
    %v2270 = vunpack.c.h.b16 %v389
    %v2271 = vunpack.c.l.b16 %v390
    %v2272 = vunpack.c.h.b16 %v390
    %v2273 = vunpack.c.l.b16 %v391
    %v2274 = vunpack.c.h.b16 %v391
    %v2275 = vunpack.c.l.b16 %v392
    %v2276 = vunpack.c.h.b16 %v392
    %v2277 = vunpack.c.l.b16 %v393
    %v2278 = vunpack.c.h.b16 %v393
    %v2279 = vunpack.c.l.b16 %v394
    %v2280 = vunpack.c.h.b16 %v394
    %v2281 = vunpack.c.l.b16 %v395
    %v2282 = vunpack.c.h.b16 %v395
    %v2283 = vunpack.c.l.b16 %v396
    %v2284 = vunpack.c.h.b16 %v396
    %v2285 = vunpack.c.l.b16 %v397
    %v2286 = vunpack.c.h.b16 %v397
    %v2287 = vunpack.c.l.b16 %v398
    %v2288 = vunpack.c.h.b16 %v398
    %v2289 = vunpack.c.l.b16 %v399
    %v2290 = vunpack.c.h.b16 %v399
    %v2291 = vunpack.c.l.b16 %v400
    %v2292 = vunpack.c.h.b16 %v400
    %v2293 = vunpack.c.l.b16 %v401
    %v2294 = vunpack.c.h.b16 %v401
    %v2295 = vunpack.c.l.b16 %v402
    %v2296 = vunpack.c.h.b16 %v402
    %v2297 = vunpack.c.l.b16 %v403
    %v2298 = vunpack.c.h.b16 %v403
    %v2299 = vunpack.c.l.b16 %v404
    %v2300 = vunpack.c.h.b16 %v404
    %v2301 = vunpack.c.l.b16 %v405
    %v2302 = vunpack.c.h.b16 %v405
    %v2303 = vunpack.c.l.b16 %v406
    %v2304 = vunpack.c.h.b16 %v406
    %v2305 = vunpack.c.l.b16 %v407
    %v2306 = vunpack.c.h.b16 %v407
    %v2307 = vunpack.c.l.b16 %v408
    %v2308 = vunpack.c.h.b16 %v408
    %v2309 = vunpack.c.l.b16 %v409
    %v2310 = vunpack.c.h.b16 %v409
    %v2311 = vunpack.c.l.b16 %v410
    %v2312 = vunpack.c.h.b16 %v410
    %v2313 = vunpack.c.l.b16 %v411
    %v2314 = vunpack.c.h.b16 %v411
    %v2315 = vunpack.c.l.b16 %v412
    %v2316 = vunpack.c.h.b16 %v412
    %v2317 = vunpack.c.l.b16 %v413
    %v2318 = vunpack.c.h.b16 %v413
    %v2319 = vunpack.c.l.b16 %v414
    %v2320 = vunpack.c.h.b16 %v414
    %v2321 = vunpack.c.l.b16 %v415
    %v2322 = vunpack.c.h.b16 %v415
    %v2323 = vunpack.c.l.b16 %v416
    %v2324 = vunpack.c.h.b16 %v416
    %v2325 = vunpack.c.l.b16 %v417
    %v2326 = vunpack.c.h.b16 %v417
    %v2327 = vunpack.c.l.b16 %v418
    %v2328 = vunpack.c.h.b16 %v418
    %v2329 = vunpack.c.l.b16 %v419
    %v2330 = vunpack.c.h.b16 %v419
    %v2331 = vunpack.c.l.b16 %v420
    %v2332 = vunpack.c.h.b16 %v420
    %v2333 = vunpack.c.l.b16 %v421
    %v2334 = vunpack.c.h.b16 %v421
    %v2335 = vunpack.c.l.b16 %v422
    %v2336 = vunpack.c.h.b16 %v422
    %v2337 = vunpack.c.l.b16 %v423
    %v2338 = vunpack.c.h.b16 %v423
    %v2339 = vunpack.c.l.b16 %v424
    %v2340 = vunpack.c.h.b16 %v424
    %v2341 = vunpack.c.l.b16 %v425
    %v2342 = vunpack.c.h.b16 %v425
    %v2343 = vunpack.c.l.b16 %v426
    %v2344 = vunpack.c.h.b16 %v426
    %v2345 = vunpack.c.l.b16 %v427
    %v2346 = vunpack.c.h.b16 %v427
    %v2347 = vunpack.c.l.b16 %v428
    %v2348 = vunpack.c.h.b16 %v428
    %v2349 = vunpack.c.l.b16 %v429
    %v2350 = vunpack.c.h.b16 %v429
    %v2351 = vunpack.c.l.b16 %v430
    %v2352 = vunpack.c.h.b16 %v430
    %v2353 = vunpack.c.l.b16 %v431
    %v2354 = vunpack.c.h.b16 %v431
    %v2355 = vunpack.c.l.b16 %v432
    %v2356 = vunpack.c.h.b16 %v432
    %v2357 = vunpack.c.l.b16 %v433
    %v2358 = vunpack.c.h.b16 %v433
    %v2359 = vunpack.c.l.b16 %v434
    %v2360 = vunpack.c.h.b16 %v434
    %v2361 = vunpack.c.l.b16 %v435
    %v2362 = vunpack.c.h.b16 %v435
    %v2363 = vunpack.c.l.b16 %v436
    %v2364 = vunpack.c.h.b16 %v436
    %v2365 = vunpack.c.l.b16 %v437
    %v2366 = vunpack.c.h.b16 %v437
    %v2367 = vunpack.c.l.b16 %v438
    %v2368 = vunpack.c.h.b16 %v438
    %v2369 = vunpack.c.l.b16 %v439
    %v2370 = vunpack.c.h.b16 %v439
    %v2371 = vunpack.c.l.b16 %v440
    %v2372 = vunpack.c.h.b16 %v440
    %v2373 = vunpack.c.l.b16 %v441
    %v2374 = vunpack.c.h.b16 %v441
    %v2375 = vunpack.c.l.b16 %v442
    %v2376 = vunpack.c.h.b16 %v442
    %v2377 = vunpack.c.l.b16 %v443
    %v2378 = vunpack.c.h.b16 %v443
    %v2379 = vunpack.c.l.b16 %v444
    %v2380 = vunpack.c.h.b16 %v444
    %v2381 = vunpack.c.l.b16 %v445
    %v2382 = vunpack.c.h.b16 %v445
    %v2383 = vunpack.c.l.b16 %v446
    %v2384 = vunpack.c.h.b16 %v446
    %v2385 = vunpack.c.l.b16 %v447
    %v2386 = vunpack.c.h.b16 %v447
    %v2387 = vunpack.c.l.b16 %v448
    %v2388 = vunpack.c.h.b16 %v448
    %v2389 = vunpack.c.l.b16 %v449
    %v2390 = vunpack.c.h.b16 %v449
    %v2391 = vunpack.c.l.b16 %v450
    %v2392 = vunpack.c.h.b16 %v450
    %v2393 = vunpack.c.l.b16 %v451
    %v2394 = vunpack.c.h.b16 %v451
    %v2395 = vunpack.c.l.b16 %v452
    %v2396 = vunpack.c.h.b16 %v452
    %v2397 = vunpack.c.l.b16 %v453
    %v2398 = vunpack.c.h.b16 %v453
    %v2399 = vunpack.c.l.b16 %v454
    %v2400 = vunpack.c.h.b16 %v454
    %v2401 = vunpack.c.l.b16 %v455
    %v2402 = vunpack.c.h.b16 %v455
    %v2403 = vunpack.c.l.b16 %v456
    %v2404 = vunpack.c.h.b16 %v456
    %v2405 = vunpack.c.l.b16 %v457
    %v2406 = vunpack.c.h.b16 %v457
    %v2407 = vunpack.c.l.b16 %v458
    %v2408 = vunpack.c.h.b16 %v458
    %v2409 = vunpack.c.l.b16 %v459
    %v2410 = vunpack.c.h.b16 %v459
    %v2411 = vunpack.c.l.b16 %v460
    %v2412 = vunpack.c.h.b16 %v460
    %v2413 = vunpack.c.l.b16 %v461
    %v2414 = vunpack.c.h.b16 %v461
    %v2415 = vunpack.c.l.b16 %v462
    %v2416 = vunpack.c.h.b16 %v462
    %v2417 = vunpack.c.l.b16 %v463
    %v2418 = vunpack.c.h.b16 %v463
    %v2419 = vunpack.c.l.b16 %v464
    %v2420 = vunpack.c.h.b16 %v464
    %v2421 = vunpack.c.l.b16 %v465
    %v2422 = vunpack.c.h.b16 %v465
    %v2423 = vunpack.c.l.b16 %v466
    %v2424 = vunpack.c.h.b16 %v466
    %v2425 = vunpack.c.l.b16 %v467
    %v2426 = vunpack.c.h.b16 %v467
    %v2427 = vunpack.c.l.b16 %v468
    %v2428 = vunpack.c.h.b16 %v468
    %v2429 = vunpack.c.l.b16 %v469
    %v2430 = vunpack.c.h.b16 %v469
    %v2431 = vunpack.c.l.b16 %v470
    %v2432 = vunpack.c.h.b16 %v470
    %v2433 = vunpack.c.l.b16 %v471
    %v2434 = vunpack.c.h.b16 %v471
    %v2435 = vunpack.c.l.b16 %v472
    %v2436 = vunpack.c.h.b16 %v472
    %v2437 = vunpack.c.l.b16 %v473
    %v2438 = vunpack.c.h.b16 %v473
    %v2439 = vunpack.c.l.b16 %v474
    %v2440 = vunpack.c.h.b16 %v474
    %v2441 = vunpack.c.l.b16 %v475
    %v2442 = vunpack.c.h.b16 %v475
    %v2443 = vunpack.c.l.b16 %v476
    %v2444 = vunpack.c.h.b16 %v476
    %v2445 = vunpack.c.l.b16 %v477
    %v2446 = vunpack.c.h.b16 %v477
    %v2447 = vunpack.c.l.b16 %v478
    %v2448 = vunpack.c.h.b16 %v478
    %v2449 = vunpack.c.l.b16 %v479
    %v2450 = vunpack.c.h.b16 %v479
    %v2451 = vunpack.c.l.b16 %v480
    %v2452 = vunpack.c.h.b16 %v480
    %v2453 = vunpack.c.l.b16 %v481
    %v2454 = vunpack.c.h.b16 %v481
    %v2455 = vunpack.c.l.b16 %v482
    %v2456 = vunpack.c.h.b16 %v482
    %v2457 = vunpack.c.l.b16 %v483
    %v2458 = vunpack.c.h.b16 %v483
    %v2459 = vunpack.c.l.b16 %v484
    %v2460 = vunpack.c.h.b16 %v484
    %v2461 = vunpack.c.l.b16 %v485
    %v2462 = vunpack.c.h.b16 %v485
    %v2463 = vunpack.c.l.b16 %v486
    %v2464 = vunpack.c.h.b16 %v486
    %v2465 = vunpack.c.l.b16 %v487
    %v2466 = vunpack.c.h.b16 %v487
    %v2467 = vunpack.c.l.b16 %v488
    %v2468 = vunpack.c.h.b16 %v488
    %v2469 = vunpack.c.l.b16 %v489
    %v2470 = vunpack.c.h.b16 %v489
    %v2471 = vunpack.c.l.b16 %v490
    %v2472 = vunpack.c.h.b16 %v490
    %v2473 = vunpack.c.l.b16 %v491
    %v2474 = vunpack.c.h.b16 %v491
    %v2475 = vunpack.c.l.b16 %v492
    %v2476 = vunpack.c.h.b16 %v492
    %v2477 = vunpack.c.l.b16 %v493
    %v2478 = vunpack.c.h.b16 %v493
    %v2479 = vunpack.c.l.b16 %v494
    %v2480 = vunpack.c.h.b16 %v494
    %v2481 = vunpack.c.l.b16 %v495
    %v2482 = vunpack.c.h.b16 %v495
    %v2483 = vunpack.c.l.b16 %v496
    %v2484 = vunpack.c.h.b16 %v496
    %v2485 = vunpack.c.l.b16 %v497
    %v2486 = vunpack.c.h.b16 %v497
    %v2487 = vunpack.c.l.b16 %v498
    %v2488 = vunpack.c.h.b16 %v498
    %v2489 = vunpack.c.l.b16 %v499
    %v2490 = vunpack.c.h.b16 %v499
    %v2491 = vunpack.c.l.b16 %v500
    %v2492 = vunpack.c.h.b16 %v500
    %v2493 = vunpack.c.l.b16 %v501
    %v2494 = vunpack.c.h.b16 %v501
    %v2495 = vunpack.c.l.b16 %v502
    %v2496 = vunpack.c.h.b16 %v502
    %v2497 = vunpack.c.l.b16 %v503
    %v2498 = vunpack.c.h.b16 %v503
    %v2499 = vunpack.c.l.b16 %v504
    %v2500 = vunpack.c.h.b16 %v504
    %v2501 = vunpack.c.l.b16 %v505
    %v2502 = vunpack.c.h.b16 %v505
    %v2503 = vunpack.c.l.b16 %v506
    %v2504 = vunpack.c.h.b16 %v506
    %v2505 = vunpack.c.l.b16 %v507
    %v2506 = vunpack.c.h.b16 %v507
    %v2507 = vunpack.c.l.b16 %v508
    %v2508 = vunpack.c.h.b16 %v508
    %v2509 = vunpack.c.l.b16 %v509
    %v2510 = vunpack.c.h.b16 %v509
    %v2511 = vunpack.c.l.b16 %v510
    %v2512 = vunpack.c.h.b16 %v510
    %v2513 = vunpack.c.l.b16 %v511
    %v2514 = vunpack.c.h.b16 %v511
    %v2515 = vunpack.c.l.b16 %v512
    %v2516 = vunpack.c.h.b16 %v512
    %v2517 = vunpack.c.l.b16 %v513
    %v2518 = vunpack.c.h.b16 %v513
    %v2519 = vunpack.c.l.b16 %v514
    %v2520 = vunpack.c.h.b16 %v514
    %v2521 = vunpack.c.l.b16 %v515
    %v2522 = vunpack.c.h.b16 %v515
    %v2523 = vunpack.c.l.b16 %v516
    %v2524 = vunpack.c.h.b16 %v516
    %v2525 = vunpack.c.l.b16 %v517
    %v2526 = vunpack.c.h.b16 %v517
    %v2527 = vunpack.c.l.b16 %v518
    %v2528 = vunpack.c.h.b16 %v518
    %v2529 = vunpack.c.l.b16 %v519
    %v2530 = vunpack.c.h.b16 %v519
    %v2531 = vunpack.c.l.b16 %v520
    %v2532 = vunpack.c.h.b16 %v520
    %v2533 = vunpack.c.l.b16 %v521
    %v2534 = vunpack.c.h.b16 %v521
    %v2535 = vunpack.c.l.b16 %v522
    %v2536 = vunpack.c.h.b16 %v522
    %v2537 = vunpack.c.l.b16 %v523
    %v2538 = vunpack.c.h.b16 %v523
    %v2539 = vunpack.c.l.b16 %v524
    %v2540 = vunpack.c.h.b16 %v524
    %v2541 = vunpack.c.l.b16 %v525
    %v2542 = vunpack.c.h.b16 %v525
    %v2543 = vunpack.c.l.b16 %v526
    %v2544 = vunpack.c.h.b16 %v526
    %v2545 = vunpack.c.l.b16 %v527
    %v2546 = vunpack.c.h.b16 %v527
    %v2547 = vunpack.c.l.b16 %v528
    %v2548 = vunpack.c.h.b16 %v528
    %v2549 = vunpack.c.l.b16 %v529
    %v2550 = vunpack.c.h.b16 %v529
    %v2551 = vunpack.c.l.b16 %v530
    %v2552 = vunpack.c.h.b16 %v530
    %v2553 = vunpack.c.l.b16 %v531
    %v2554 = vunpack.c.h.b16 %v531
    %v2555 = vunpack.c.l.b16 %v532
    %v2556 = vunpack.c.h.b16 %v532
    %v2557 = vunpack.c.l.b16 %v533
    %v2558 = vunpack.c.h.b16 %v533
    %v2559 = vunpack.c.l.b16 %v534
    %v2560 = vunpack.c.h.b16 %v534
    %v2561 = vunpack.c.l.b16 %v535
    %v2562 = vunpack.c.h.b16 %v535
    %v2563 = vunpack.c.l.b16 %v536
    %v2564 = vunpack.c.h.b16 %v536
    %v2565 = vunpack.c.l.b16 %v537
    %v2566 = vunpack.c.h.b16 %v537
    %v2567 = vunpack.c.l.b16 %v538
    %v2568 = vunpack.c.h.b16 %v538
    %v2569 = vunpack.c.l.b16 %v539
    %v2570 = vunpack.c.h.b16 %v539
    %v2571 = vunpack.c.l.b16 %v540
    %v2572 = vunpack.c.h.b16 %v540
    %v2573 = vunpack.c.l.b16 %v541
    %v2574 = vunpack.c.h.b16 %v541
    %v2575 = vunpack.c.l.b16 %v542
    %v2576 = vunpack.c.h.b16 %v542
    %v2577 = vunpack.c.l.b16 %v543
    %v2578 = vunpack.c.h.b16 %v543
    %v2579 = vunpack.c.l.b16 %v544
    %v2580 = vunpack.c.h.b16 %v544
    %v2581 = vunpack.c.l.b16 %v545
    %v2582 = vunpack.c.h.b16 %v545
    %v2583 = vunpack.c.l.b16 %v546
    %v2584 = vunpack.c.h.b16 %v546
    %v2585 = vunpack.c.l.b16 %v547
    %v2586 = vunpack.c.h.b16 %v547
    %v2587 = vunpack.c.l.b16 %v548
    %v2588 = vunpack.c.h.b16 %v548
    %v2589 = vunpack.c.l.b16 %v549
    %v2590 = vunpack.c.h.b16 %v549
    %v2591 = vunpack.c.l.b16 %v550
    %v2592 = vunpack.c.h.b16 %v550
    %v2593 = vunpack.c.l.b16 %v551
    %v2594 = vunpack.c.h.b16 %v551
    %v2595 = vunpack.c.l.b16 %v552
    %v2596 = vunpack.c.h.b16 %v552
    %v2597 = vunpack.c.l.b16 %v553
    %v2598 = vunpack.c.h.b16 %v553
    %v2599 = vunpack.c.l.b16 %v554
    %v2600 = vunpack.c.h.b16 %v554
    %v2601 = vunpack.c.l.b16 %v555
    %v2602 = vunpack.c.h.b16 %v555
    %v2603 = vunpack.c.l.b16 %v556
    %v2604 = vunpack.c.h.b16 %v556
    %v2605 = vunpack.c.l.b16 %v557
    %v2606 = vunpack.c.h.b16 %v557
    %v2607 = vunpack.c.l.b16 %v558
    %v2608 = vunpack.c.h.b16 %v558
    %v2609 = vunpack.c.l.b16 %v559
    %v2610 = vunpack.c.h.b16 %v559
    %v2611 = vunpack.c.l.b16 %v560
    %v2612 = vunpack.c.h.b16 %v560
    %v2613 = vunpack.c.l.b16 %v561
    %v2614 = vunpack.c.h.b16 %v561
    %v2615 = vunpack.c.l.b16 %v562
    %v2616 = vunpack.c.h.b16 %v562
    %v2617 = vunpack.c.l.b16 %v563
    %v2618 = vunpack.c.h.b16 %v563
    %v2619 = vunpack.c.l.b16 %v564
    %v2620 = vunpack.c.h.b16 %v564
    %v2621 = vunpack.c.l.b16 %v565
    %v2622 = vunpack.c.h.b16 %v565
    %v2623 = vunpack.c.l.b16 %v566
    %v2624 = vunpack.c.h.b16 %v566
    %v2625 = vunpack.c.l.b16 %v567
    %v2626 = vunpack.c.h.b16 %v567
    %v2627 = vunpack.c.l.b16 %v568
    %v2628 = vunpack.c.h.b16 %v568
    %v2629 = vunpack.c.l.b16 %v569
    %v2630 = vunpack.c.h.b16 %v569
    %v2631 = vunpack.c.l.b16 %v570
    %v2632 = vunpack.c.h.b16 %v570
    %v2633 = vunpack.c.l.b16 %v571
    %v2634 = vunpack.c.h.b16 %v571
    %v2635 = vunpack.c.l.b16 %v572
    %v2636 = vunpack.c.h.b16 %v572
    %v2637 = vunpack.c.l.b16 %v573
    %v2638 = vunpack.c.h.b16 %v573
    %v2639 = vunpack.c.l.b16 %v574
    %v2640 = vunpack.c.h.b16 %v574
    %v2641 = vunpack.c.l.b16 %v575
    %v2642 = vunpack.c.h.b16 %v575
    %v2643 = vunpack.c.l.b16 %v576
    %v2644 = vunpack.c.h.b16 %v576
    %v2645 = vunpack.c.l.b16 %v577
    %v2646 = vunpack.c.h.b16 %v577
    %v2647 = vunpack.c.l.b16 %v578
    %v2648 = vunpack.c.h.b16 %v578
    %v2649 = vunpack.c.l.b16 %v579
    %v2650 = vunpack.c.h.b16 %v579
    %v2651 = vunpack.c.l.b16 %v580
    %v2652 = vunpack.c.h.b16 %v580
    %v2653 = vunpack.c.l.b16 %v581
    %v2654 = vunpack.c.h.b16 %v581
    %v2655 = vunpack.c.l.b16 %v582
    %v2656 = vunpack.c.h.b16 %v582
    %v2657 = vunpack.c.l.b16 %v583
    %v2658 = vunpack.c.h.b16 %v583
    %v2659 = vunpack.c.l.b16 %v584
    %v2660 = vunpack.c.h.b16 %v584
    %v2661 = vunpack.c.l.b16 %v585
    %v2662 = vunpack.c.h.b16 %v585
    %v2663 = vunpack.c.l.b16 %v586
    %v2664 = vunpack.c.h.b16 %v586
    %v2665 = vunpack.c.l.b16 %v587
    %v2666 = vunpack.c.h.b16 %v587
    %v2667 = vunpack.c.l.b16 %v588
    %v2668 = vunpack.c.h.b16 %v588
    %v2669 = vunpack.c.l.b16 %v589
    %v2670 = vunpack.c.h.b16 %v589
    %v2671 = vunpack.c.l.b16 %v590
    %v2672 = vunpack.c.h.b16 %v590
    %v2673 = vunpack.c.l.b16 %v591
    %v2674 = vunpack.c.h.b16 %v591
    %v2675 = vunpack.c.l.b16 %v592
    %v2676 = vunpack.c.h.b16 %v592
    %v2677 = vunpack.c.l.b16 %v593
    %v2678 = vunpack.c.h.b16 %v593
    %v2679 = vunpack.c.l.b16 %v594
    %v2680 = vunpack.c.h.b16 %v594
    %v2681 = vunpack.c.l.b16 %v595
    %v2682 = vunpack.c.h.b16 %v595
    %v2683 = vunpack.c.l.b16 %v596
    %v2684 = vunpack.c.h.b16 %v596
    %v2685 = vunpack.c.l.b16 %v597
    %v2686 = vunpack.c.h.b16 %v597
    %v2687 = vunpack.c.l.b16 %v598
    %v2688 = vunpack.c.h.b16 %v598
    %v2689 = vunpack.c.l.b16 %v599
    %v2690 = vunpack.c.h.b16 %v599
    %v2691 = vunpack.c.l.b16 %v600
    %v2692 = vunpack.c.h.b16 %v600
    %v2693 = vunpack.c.l.b16 %v601
    %v2694 = vunpack.c.h.b16 %v601
    %v2695 = vunpack.c.l.b16 %v602
    %v2696 = vunpack.c.h.b16 %v602
    %v2697 = vunpack.c.l.b16 %v603
    %v2698 = vunpack.c.h.b16 %v603
    %v2699 = vunpack.c.l.b16 %v604
    %v2700 = vunpack.c.h.b16 %v604
    %v2701 = vunpack.c.l.b16 %v605
    %v2702 = vunpack.c.h.b16 %v605
    %v2703 = vunpack.c.l.b16 %v606
    %v2704 = vunpack.c.h.b16 %v606
    %v2705 = vunpack.c.l.b16 %v607
    %v2706 = vunpack.c.h.b16 %v607
    %v2707 = vunpack.c.l.b16 %v608
    %v2708 = vunpack.c.h.b16 %v608
    %v2709 = vunpack.c.l.b16 %v609
    %v2710 = vunpack.c.h.b16 %v609
    %v2711 = vunpack.c.l.b16 %v610
    %v2712 = vunpack.c.h.b16 %v610
    %v2713 = vunpack.c.l.b16 %v611
    %v2714 = vunpack.c.h.b16 %v611
    %v2715 = vunpack.c.l.b16 %v612
    %v2716 = vunpack.c.h.b16 %v612
    %v2717 = vunpack.c.l.b16 %v613
    %v2718 = vunpack.c.h.b16 %v613
    %v2719 = vunpack.c.l.b16 %v614
    %v2720 = vunpack.c.h.b16 %v614
    %v2721 = vunpack.c.l.b16 %v615
    %v2722 = vunpack.c.h.b16 %v615
    %v2723 = vunpack.c.l.b16 %v616
    %v2724 = vunpack.c.h.b16 %v616
    %v2725 = vunpack.c.l.b16 %v617
    %v2726 = vunpack.c.h.b16 %v617
    %v2727 = vunpack.c.l.b16 %v618
    %v2728 = vunpack.c.h.b16 %v618
    %v2729 = vunpack.c.l.b16 %v619
    %v2730 = vunpack.c.h.b16 %v619
    %v2731 = vunpack.c.l.b16 %v620
    %v2732 = vunpack.c.h.b16 %v620
    %v2733 = vunpack.c.l.b16 %v621
    %v2734 = vunpack.c.h.b16 %v621
    %v2735 = vunpack.c.l.b16 %v622
    %v2736 = vunpack.c.h.b16 %v622
    %v2737 = vunpack.c.l.b16 %v623
    %v2738 = vunpack.c.h.b16 %v623
    %v2739 = vunpack.c.l.b16 %v624
    %v2740 = vunpack.c.h.b16 %v624
    %v2741 = vunpack.c.l.b16 %v625
    %v2742 = vunpack.c.h.b16 %v625
    %v2743 = vunpack.c.l.b16 %v626
    %v2744 = vunpack.c.h.b16 %v626
    %v2745 = vunpack.c.l.b16 %v627
    %v2746 = vunpack.c.h.b16 %v627
    %v2747 = vunpack.c.l.b16 %v628
    %v2748 = vunpack.c.h.b16 %v628
    %v2749 = vunpack.c.l.b16 %v629
    %v2750 = vunpack.c.h.b16 %v629
    %v2751 = vunpack.c.l.b16 %v630
    %v2752 = vunpack.c.h.b16 %v630
    %v2753 = vunpack.c.l.b16 %v631
    %v2754 = vunpack.c.h.b16 %v631
    %v2755 = vunpack.c.l.b16 %v632
    %v2756 = vunpack.c.h.b16 %v632
    %v2757 = vunpack.c.l.b16 %v633
    %v2758 = vunpack.c.h.b16 %v633
    %v2759 = vunpack.c.l.b16 %v634
    %v2760 = vunpack.c.h.b16 %v634
    %v2761 = vunpack.c.l.b16 %v635
    %v2762 = vunpack.c.h.b16 %v635
    %v2763 = vunpack.c.l.b16 %v636
    %v2764 = vunpack.c.h.b16 %v636
    %v2765 = vunpack.c.l.b16 %v637
    %v2766 = vunpack.c.h.b16 %v637
    %v2767 = vunpack.c.l.b16 %v638
    %v2768 = vunpack.c.h.b16 %v638
    %v2769 = vunpack.c.l.b16 %v639
    %v2770 = vunpack.c.h.b16 %v639
    %v2771 = vunpack.c.l.b16 %v640
    %v2772 = vunpack.c.h.b16 %v640
    %v2773 = vunpack.c.l.b16 %v641
    %v2774 = vunpack.c.h.b16 %v641
    %v2775 = vunpack.c.l.b16 %v642
    %v2776 = vunpack.c.h.b16 %v642
    %v2777 = vunpack.c.l.b16 %v643
    %v2778 = vunpack.c.h.b16 %v643
    %v2779 = vunpack.c.l.b16 %v644
    %v2780 = vunpack.c.h.b16 %v644
    %v2781 = vunpack.c.l.b16 %v645
    %v2782 = vunpack.c.h.b16 %v645
    %v2783 = vunpack.c.l.b16 %v646
    %v2784 = vunpack.c.h.b16 %v646
    %v2785 = vunpack.c.l.b16 %v647
    %v2786 = vunpack.c.h.b16 %v647
    %v2787 = vunpack.c.l.b16 %v648
    %v2788 = vunpack.c.h.b16 %v648
    %v2789 = vunpack.c.l.b16 %v649
    %v2790 = vunpack.c.h.b16 %v649
    %v2791 = vunpack.c.l.b16 %v650
    %v2792 = vunpack.c.h.b16 %v650
    %v2793 = vunpack.c.l.b16 %v651
    %v2794 = vunpack.c.h.b16 %v651
    %v2795 = vunpack.c.l.b16 %v652
    %v2796 = vunpack.c.h.b16 %v652
    %v2797 = vunpack.c.l.b16 %v653
    %v2798 = vunpack.c.h.b16 %v653
    %v2799 = vunpack.c.l.b16 %v654
    %v2800 = vunpack.c.h.b16 %v654
    %v2801 = vunpack.c.l.b16 %v655
    %v2802 = vunpack.c.h.b16 %v655
    %v2803 = vunpack.c.l.b16 %v656
    %v2804 = vunpack.c.h.b16 %v656
    %v2805 = vunpack.c.l.b16 %v657
    %v2806 = vunpack.c.h.b16 %v657
    %v2807 = vunpack.c.l.b16 %v658
    %v2808 = vunpack.c.h.b16 %v658
    %v2809 = vunpack.c.l.b16 %v659
    %v2810 = vunpack.c.h.b16 %v659
    %v2811 = vunpack.c.l.b16 %v660
    %v2812 = vunpack.c.h.b16 %v660
    %v2813 = vunpack.c.l.b16 %v661
    %v2814 = vunpack.c.h.b16 %v661
    %v2815 = vunpack.c.l.b16 %v662
    %v2816 = vunpack.c.h.b16 %v662
    %v2817 = vunpack.c.l.b16 %v663
    %v2818 = vunpack.c.h.b16 %v663
    %v2819 = vunpack.c.l.b16 %v664
    %v2820 = vunpack.c.h.b16 %v664
    %v2821 = vunpack.c.l.b16 %v665
    %v2822 = vunpack.c.h.b16 %v665
    %v2823 = vunpack.c.l.b16 %v666
    %v2824 = vunpack.c.h.b16 %v666
    %v2825 = vunpack.c.l.b16 %v667
    %v2826 = vunpack.c.h.b16 %v667
    %v2827 = vunpack.c.l.b16 %v668
    %v2828 = vunpack.c.h.b16 %v668
    %v2829 = vunpack.c.l.b16 %v669
    %v2830 = vunpack.c.h.b16 %v669
    %v2831 = vunpack.c.l.b16 %v670
    %v2832 = vunpack.c.h.b16 %v670
    %v2833 = vunpack.c.l.b16 %v671
    %v2834 = vunpack.c.h.b16 %v671
    %v2835 = vunpack.c.l.b16 %v672
    %v2836 = vunpack.c.h.b16 %v672
    %v2837 = vunpack.c.l.b16 %v673
    %v2838 = vunpack.c.h.b16 %v673
    %v2839 = vunpack.c.l.b16 %v674
    %v2840 = vunpack.c.h.b16 %v674
    %v2841 = vunpack.c.l.b16 %v675
    %v2842 = vunpack.c.h.b16 %v675
    %v2843 = vunpack.c.l.b16 %v676
    %v2844 = vunpack.c.h.b16 %v676
    %v2845 = vunpack.c.l.b16 %v677
    %v2846 = vunpack.c.h.b16 %v677
    %v2847 = vunpack.c.l.b16 %v678
    %v2848 = vunpack.c.h.b16 %v678
    %v2849 = vunpack.c.l.b16 %v679
    %v2850 = vunpack.c.h.b16 %v679
    %v2851 = vunpack.c.l.b16 %v680
    %v2852 = vunpack.c.h.b16 %v680
    %v2853 = vunpack.c.l.b16 %v681
    %v2854 = vunpack.c.h.b16 %v681
    %v2855 = vunpack.c.l.b16 %v682
    %v2856 = vunpack.c.h.b16 %v682
    %v2857 = vunpack.c.l.b16 %v683
    %v2858 = vunpack.c.h.b16 %v683
    %v2859 = vunpack.c.l.b16 %v684
    %v2860 = vunpack.c.h.b16 %v684
    %v2861 = vunpack.c.l.b16 %v685
    %v2862 = vunpack.c.h.b16 %v685
    %v2863 = vunpack.c.l.b16 %v686
    %v2864 = vunpack.c.h.b16 %v686
    %v2865 = vunpack.c.l.b16 %v687
    %v2866 = vunpack.c.h.b16 %v687
    %v2867 = vunpack.c.l.b16 %v688
    %v2868 = vunpack.c.h.b16 %v688
    %v2869 = vunpack.c.l.b16 %v689
    %v2870 = vunpack.c.h.b16 %v689
    %v2871 = vunpack.c.l.b16 %v690
    %v2872 = vunpack.c.h.b16 %v690
    %v2873 = vunpack.c.l.b16 %v691
    %v2874 = vunpack.c.h.b16 %v691
    %v2875 = vunpack.c.l.b16 %v692
    %v2876 = vunpack.c.h.b16 %v692
    %v2877 = vunpack.c.l.b16 %v693
    %v2878 = vunpack.c.h.b16 %v693
    %v2879 = vunpack.c.l.b16 %v694
    %v2880 = vunpack.c.h.b16 %v694
    %v2881 = vunpack.c.l.b16 %v695
    %v2882 = vunpack.c.h.b16 %v695
    %v2883 = vunpack.c.l.b16 %v696
    %v2884 = vunpack.c.h.b16 %v696
    %v2885 = vunpack.c.l.b16 %v697
    %v2886 = vunpack.c.h.b16 %v697
    %v2887 = vunpack.c.l.b16 %v698
    %v2888 = vunpack.c.h.b16 %v698
    %v2889 = vunpack.c.l.b16 %v699
    %v2890 = vunpack.c.h.b16 %v699
    %v2891 = vunpack.c.l.b16 %v700
    %v2892 = vunpack.c.h.b16 %v700
    %v2893 = vunpack.c.l.b16 %v701
    %v2894 = vunpack.c.h.b16 %v701
    %v2895 = vunpack.c.l.b16 %v702
    %v2896 = vunpack.c.h.b16 %v702
    %v2897 = vunpack.c.l.b16 %v703
    %v2898 = vunpack.c.h.b16 %v703
    %v2899 = vunpack.c.l.b16 %v704
    %v2900 = vunpack.c.h.b16 %v704
    %v2901 = vunpack.c.l.b16 %v705
    %v2902 = vunpack.c.h.b16 %v705
    %v2903 = vunpack.c.l.b16 %v706
    %v2904 = vunpack.c.h.b16 %v706
    %v2905 = vunpack.c.l.b16 %v707
    %v2906 = vunpack.c.h.b16 %v707
    %v2907 = vunpack.c.l.b16 %v708
    %v2908 = vunpack.c.h.b16 %v708
    %v2909 = vunpack.c.l.b16 %v709
    %v2910 = vunpack.c.h.b16 %v709
    %v2911 = vunpack.c.l.b16 %v710
    %v2912 = vunpack.c.h.b16 %v710
    %v2913 = vunpack.c.l.b16 %v711
    %v2914 = vunpack.c.h.b16 %v711
    %v2915 = vunpack.c.l.b16 %v712
    %v2916 = vunpack.c.h.b16 %v712
    %v2917 = vunpack.c.l.b16 %v713
    %v2918 = vunpack.c.h.b16 %v713
    %v2919 = vunpack.c.l.b16 %v714
    %v2920 = vunpack.c.h.b16 %v714
    %v2921 = vunpack.c.l.b16 %v715
    %v2922 = vunpack.c.h.b16 %v715
    %v2923 = vunpack.c.l.b16 %v716
    %v2924 = vunpack.c.h.b16 %v716
    %v2925 = vunpack.c.l.b16 %v717
    %v2926 = vunpack.c.h.b16 %v717
    %v2927 = vunpack.c.l.b16 %v718
    %v2928 = vunpack.c.h.b16 %v718
    %v2929 = vunpack.c.l.b16 %v719
    %v2930 = vunpack.c.h.b16 %v719
    %v2931 = vunpack.c.l.b16 %v720
    %v2932 = vunpack.c.h.b16 %v720
    %v2933 = vunpack.c.l.b16 %v721
    %v2934 = vunpack.c.h.b16 %v721
    %v2935 = vunpack.c.l.b16 %v722
    %v2936 = vunpack.c.h.b16 %v722
    %v2937 = vunpack.c.l.b16 %v723
    %v2938 = vunpack.c.h.b16 %v723
    %v2939 = vunpack.c.l.b16 %v724
    %v2940 = vunpack.c.h.b16 %v724
    %v2941 = vunpack.c.l.b16 %v725
    %v2942 = vunpack.c.h.b16 %v725
    %v2943 = vunpack.c.l.b16 %v726
    %v2944 = vunpack.c.h.b16 %v726
    %v2945 = vunpack.c.l.b16 %v727
    %v2946 = vunpack.c.h.b16 %v727
    %v2947 = vunpack.c.l.b16 %v728
    %v2948 = vunpack.c.h.b16 %v728
    %v2949 = vunpack.c.l.b16 %v729
    %v2950 = vunpack.c.h.b16 %v729
    %v2951 = vunpack.c.l.b16 %v730
    %v2952 = vunpack.c.h.b16 %v730
    %v2953 = vunpack.c.l.b16 %v731
    %v2954 = vunpack.c.h.b16 %v731
    %v2955 = vunpack.c.l.b16 %v732
    %v2956 = vunpack.c.h.b16 %v732
    %v2957 = vunpack.c.l.b16 %v733
    %v2958 = vunpack.c.h.b16 %v733
    %v2959 = vunpack.c.l.b16 %v734
    %v2960 = vunpack.c.h.b16 %v734
    %v2961 = vunpack.c.l.b16 %v735
    %v2962 = vunpack.c.h.b16 %v735
    %v2963 = vunpack.c.l.b16 %v736
    %v2964 = vunpack.c.h.b16 %v736
    %v2965 = vunpack.c.l.b16 %v737
    %v2966 = vunpack.c.h.b16 %v737
    %v2967 = vunpack.c.l.b16 %v738
    %v2968 = vunpack.c.h.b16 %v738
    %v2969 = vunpack.c.l.b16 %v739
    %v2970 = vunpack.c.h.b16 %v739
    %v2971 = vunpack.c.l.b16 %v740
    %v2972 = vunpack.c.h.b16 %v740
    %v2973 = vunpack.c.l.b16 %v741
    %v2974 = vunpack.c.h.b16 %v741
    %v2975 = vunpack.c.l.b16 %v742
    %v2976 = vunpack.c.h.b16 %v742
    %v2977 = vunpack.c.l.b16 %v743
    %v2978 = vunpack.c.h.b16 %v743
    %v2979 = vunpack.c.l.b16 %v744
    %v2980 = vunpack.c.h.b16 %v744
    %v2981 = vunpack.c.l.b16 %v745
    %v2982 = vunpack.c.h.b16 %v745
    %v2983 = vunpack.c.l.b16 %v746
    %v2984 = vunpack.c.h.b16 %v746
    %v2985 = vunpack.c.l.b16 %v747
    %v2986 = vunpack.c.h.b16 %v747
    %v2987 = vunpack.c.l.b16 %v748
    %v2988 = vunpack.c.h.b16 %v748
    %v2989 = vunpack.c.l.b16 %v749
    %v2990 = vunpack.c.h.b16 %v749
    %v2991 = vunpack.c.l.b16 %v750
    %v2992 = vunpack.c.h.b16 %v750
    %v2993 = vunpack.c.l.b16 %v751
    %v2994 = vunpack.c.h.b16 %v751
    %v2995 = vunpack.c.l.b16 %v752
    %v2996 = vunpack.c.h.b16 %v752
    %v2997 = vunpack.c.l.b16 %v753
    %v2998 = vunpack.c.h.b16 %v753
    %v2999 = vunpack.c.l.b16 %v754
    %v3000 = vunpack.c.h.b16 %v754
    %v3001 = vunpack.c.l.b16 %v755
    %v3002 = vunpack.c.h.b16 %v755
    %v3003 = vunpack.c.l.b16 %v756
    %v3004 = vunpack.c.h.b16 %v756
    %v3005 = vunpack.c.l.b16 %v757
    %v3006 = vunpack.c.h.b16 %v757
    %v3007 = vunpack.c.l.b16 %v758
    %v3008 = vunpack.c.h.b16 %v758
    %v3009 = vunpack.c.l.b16 %v759
    %v3010 = vunpack.c.h.b16 %v759
    %v3011 = vunpack.c.l.b16 %v760
    %v3012 = vunpack.c.h.b16 %v760
    %v3013 = vunpack.c.l.b16 %v761
    %v3014 = vunpack.c.h.b16 %v761
    %v3015 = vunpack.c.l.b16 %v762
    %v3016 = vunpack.c.h.b16 %v762
    %v3017 = vunpack.c.l.b16 %v763
    %v3018 = vunpack.c.h.b16 %v763
    %v3019 = vunpack.c.l.b16 %v764
    %v3020 = vunpack.c.h.b16 %v764
    %v3021 = vunpack.c.l.b16 %v765
    %v3022 = vunpack.c.h.b16 %v765
    %v3023 = vunpack.c.l.b16 %v766
    %v3024 = vunpack.c.h.b16 %v766
    %v3025 = vunpack.c.l.b16 %v767
    %v3026 = vunpack.c.h.b16 %v767
    %v3027 = vunpack.c.l.b16 %v768
    %v3028 = vunpack.c.h.b16 %v768
    %v3029 = vunpack.c.l.b16 %v769
    %v3030 = vunpack.c.h.b16 %v769
    %v3031 = vunpack.c.l.b16 %v770
    %v3032 = vunpack.c.h.b16 %v770
    %v3033 = vunpack.c.l.b16 %v771
    %v3034 = vunpack.c.h.b16 %v771
    %v3035 = vunpack.c.l.b16 %v772
    %v3036 = vunpack.c.h.b16 %v772
    %v3037 = vunpack.c.l.b16 %v773
    %v3038 = vunpack.c.h.b16 %v773
    %v3039 = vunpack.c.l.b16 %v774
    %v3040 = vunpack.c.h.b16 %v774
    %v3041 = vunpack.c.l.b16 %v775
    %v3042 = vunpack.c.h.b16 %v775
    %v3043 = vunpack.c.l.b16 %v776
    %v3044 = vunpack.c.h.b16 %v776
    %v3045 = vunpack.c.l.b16 %v777
    %v3046 = vunpack.c.h.b16 %v777
    %v3047 = vunpack.c.l.b16 %v778
    %v3048 = vunpack.c.h.b16 %v778
    %v3049 = vunpack.c.l.b16 %v779
    %v3050 = vunpack.c.h.b16 %v779
    %v3051 = vunpack.c.l.b16 %v780
    %v3052 = vunpack.c.h.b16 %v780
    %v3053 = vunpack.c.l.b16 %v781
    %v3054 = vunpack.c.h.b16 %v781
    %v3055 = vunpack.c.l.b16 %v782
    %v3056 = vunpack.c.h.b16 %v782
    %v3057 = vunpack.c.l.b16 %v783
    %v3058 = vunpack.c.h.b16 %v783
    %v3059 = vunpack.c.l.b16 %v784
    %v3060 = vunpack.c.h.b16 %v784
    %v3061 = vunpack.c.l.b16 %v785
    %v3062 = vunpack.c.h.b16 %v785
    %v3063 = vunpack.c.l.b16 %v786
    %v3064 = vunpack.c.h.b16 %v786
    %v3065 = vunpack.c.l.b16 %v787
    %v3066 = vunpack.c.h.b16 %v787
    %v3067 = vunpack.c.l.b16 %v788
    %v3068 = vunpack.c.h.b16 %v788
    %v3069 = vunpack.c.l.b16 %v789
    %v3070 = vunpack.c.h.b16 %v789
    %v3071 = vunpack.c.l.b16 %v790
    %v3072 = vunpack.c.h.b16 %v790
    %v3073 = vunpack.c.l.b16 %v791
    %v3074 = vunpack.c.h.b16 %v791
    %v3075 = vunpack.c.l.b16 %v792
    %v3076 = vunpack.c.h.b16 %v792
    %v3077 = vunpack.c.l.b16 %v793
    %v3078 = vunpack.c.h.b16 %v793
    %v3079 = vunpack.c.l.b16 %v794
    %v3080 = vunpack.c.h.b16 %v794
    %v3081 = vunpack.c.l.b16 %v795
    %v3082 = vunpack.c.h.b16 %v795
    %v3083 = vunpack.c.l.b16 %v796
    %v3084 = vunpack.c.h.b16 %v796
    %v3085 = vunpack.c.l.b16 %v797
    %v3086 = vunpack.c.h.b16 %v797
    %v3087 = vunpack.c.l.b16 %v798
    %v3088 = vunpack.c.h.b16 %v798
    %v3089 = vunpack.c.l.b16 %v799
    %v3090 = vunpack.c.h.b16 %v799
    %v3091 = vunpack.c.l.b16 %v800
    %v3092 = vunpack.c.h.b16 %v800
    %v3093 = vunpack.c.l.b16 %v801
    %v3094 = vunpack.c.h.b16 %v801
    %v3095 = vunpack.c.l.b16 %v802
    %v3096 = vunpack.c.h.b16 %v802
    %v3097 = vunpack.c.l.b16 %v803
    %v3098 = vunpack.c.h.b16 %v803
    %v3099 = vunpack.c.l.b16 %v804
    %v3100 = vunpack.c.h.b16 %v804
    %v3101 = vunpack.c.l.b16 %v805
    %v3102 = vunpack.c.h.b16 %v805
    %v3103 = vunpack.c.l.b16 %v806
    %v3104 = vunpack.c.h.b16 %v806
    %v3105 = vunpack.c.l.b16 %v807
    %v3106 = vunpack.c.h.b16 %v807
    %v3107 = vunpack.c.l.b16 %v808
    %v3108 = vunpack.c.h.b16 %v808
    %v3109 = vunpack.c.l.b16 %v809
    %v3110 = vunpack.c.h.b16 %v809
    %v3111 = vunpack.c.l.b16 %v810
    %v3112 = vunpack.c.h.b16 %v810
    %v3113 = vunpack.c.l.b16 %v811
    %v3114 = vunpack.c.h.b16 %v811
    %v3115 = vunpack.c.l.b16 %v812
    %v3116 = vunpack.c.h.b16 %v812
    %v3117 = vunpack.c.l.b16 %v813
    %v3118 = vunpack.c.h.b16 %v813
    %v3119 = vunpack.c.l.b16 %v814
    %v3120 = vunpack.c.h.b16 %v814
    %v3121 = vunpack.c.l.b16 %v815
    %v3122 = vunpack.c.h.b16 %v815
    %v3123 = vunpack.c.l.b16 %v816
    %v3124 = vunpack.c.h.b16 %v816
    %v3125 = vunpack.c.l.b16 %v817
    %v3126 = vunpack.c.h.b16 %v817
    %v3127 = vunpack.c.l.b16 %v818
    %v3128 = vunpack.c.h.b16 %v818
    %v3129 = vunpack.c.l.b16 %v819
    %v3130 = vunpack.c.h.b16 %v819
    %v3131 = vunpack.c.l.b16 %v820
    %v3132 = vunpack.c.h.b16 %v820
    %v3133 = vunpack.c.l.b16 %v821
    %v3134 = vunpack.c.h.b16 %v821
    %v3135 = vunpack.c.l.b16 %v822
    %v3136 = vunpack.c.h.b16 %v822
    %v3137 = vunpack.c.l.b16 %v823
    %v3138 = vunpack.c.h.b16 %v823
    %v3139 = vunpack.c.l.b16 %v824
    %v3140 = vunpack.c.h.b16 %v824
    %v3141 = vunpack.c.l.b16 %v825
    %v3142 = vunpack.c.h.b16 %v825
    %v3143 = vunpack.c.l.b16 %v826
    %v3144 = vunpack.c.h.b16 %v826
    %v3145 = vunpack.c.l.b16 %v827
    %v3146 = vunpack.c.h.b16 %v827
    %v3147 = vunpack.c.l.b16 %v828
    %v3148 = vunpack.c.h.b16 %v828
    %v3149 = vunpack.c.l.b16 %v829
    %v3150 = vunpack.c.h.b16 %v829
    %v3151 = vunpack.c.l.b16 %v830
    %v3152 = vunpack.c.h.b16 %v830
    %v3153 = vunpack.c.l.b16 %v831
    %v3154 = vunpack.c.h.b16 %v831
    %v3155 = vunpack.c.l.b16 %v832
    %v3156 = vunpack.c.h.b16 %v832
    %v3157 = vunpack.c.l.b16 %v833
    %v3158 = vunpack.c.h.b16 %v833
    %v3159 = vunpack.c.l.b16 %v834
    %v3160 = vunpack.c.h.b16 %v834
    %v3161 = vunpack.c.l.b16 %v835
    %v3162 = vunpack.c.h.b16 %v835
    %v3163 = vunpack.c.l.b16 %v836
    %v3164 = vunpack.c.h.b16 %v836
    %v3165 = vunpack.c.l.b16 %v837
    %v3166 = vunpack.c.h.b16 %v837
    %v3167 = vunpack.c.l.b16 %v838
    %v3168 = vunpack.c.h.b16 %v838
    %v3169 = vunpack.c.l.b16 %v839
    %v3170 = vunpack.c.h.b16 %v839
    %v3171 = vunpack.c.l.b16 %v840
    %v3172 = vunpack.c.h.b16 %v840
    %v3173 = vunpack.c.l.b16 %v841
    %v3174 = vunpack.c.h.b16 %v841
    %v3175 = vunpack.c.l.b16 %v842
    %v3176 = vunpack.c.h.b16 %v842
    %v3177 = vunpack.c.l.b16 %v843
    %v3178 = vunpack.c.h.b16 %v843
    %v3179 = vunpack.c.l.b16 %v844
    %v3180 = vunpack.c.h.b16 %v844
    %v3181 = vunpack.c.l.b16 %v845
    %v3182 = vunpack.c.h.b16 %v845
    %v3183 = vunpack.c.l.b16 %v846
    %v3184 = vunpack.c.h.b16 %v846
    %v3185 = vunpack.c.l.b16 %v847
    %v3186 = vunpack.c.h.b16 %v847
    %v3187 = vunpack.c.l.b16 %v848
    %v3188 = vunpack.c.h.b16 %v848
    %v3189 = vunpack.c.l.b16 %v849
    %v3190 = vunpack.c.h.b16 %v849
    %v3191 = vunpack.c.l.b16 %v850
    %v3192 = vunpack.c.h.b16 %v850
    %v3193 = vunpack.c.l.b16 %v851
    %v3194 = vunpack.c.h.b16 %v851
    %v3195 = vunpack.c.l.b16 %v852
    %v3196 = vunpack.c.h.b16 %v852
    %v3197 = vunpack.c.l.b16 %v853
    %v3198 = vunpack.c.h.b16 %v853
    %v3199 = vunpack.c.l.b16 %v854
    %v3200 = vunpack.c.h.b16 %v854
    %v3201 = vunpack.c.l.b16 %v855
    %v3202 = vunpack.c.h.b16 %v855
    %v3203 = vunpack.c.l.b16 %v856
    %v3204 = vunpack.c.h.b16 %v856
    %v3205 = vunpack.c.l.b16 %v857
    %v3206 = vunpack.c.h.b16 %v857
    %v3207 = vunpack.c.l.b16 %v858
    %v3208 = vunpack.c.h.b16 %v858
    %v3209 = vunpack.c.l.b16 %v859
    %v3210 = vunpack.c.h.b16 %v859
    %v3211 = vunpack.c.l.b16 %v860
    %v3212 = vunpack.c.h.b16 %v860
    %v3213 = vunpack.c.l.b16 %v861
    %v3214 = vunpack.c.h.b16 %v861
    %v3215 = vunpack.c.l.b16 %v862
    %v3216 = vunpack.c.h.b16 %v862
    %v3217 = vunpack.c.l.b16 %v863
    %v3218 = vunpack.c.h.b16 %v863
    %v3219 = vunpack.c.l.b16 %v864
    %v3220 = vunpack.c.h.b16 %v864
    %v3221 = vunpack.c.l.b16 %v865
    %v3222 = vunpack.c.h.b16 %v865
    %v3223 = vunpack.c.l.b16 %v866
    %v3224 = vunpack.c.h.b16 %v866
    %v3225 = vunpack.c.l.b16 %v867
    %v3226 = vunpack.c.h.b16 %v867
    %v3227 = vunpack.c.l.b16 %v868
    %v3228 = vunpack.c.h.b16 %v868
    %v3229 = vunpack.c.l.b16 %v869
    %v3230 = vunpack.c.h.b16 %v869
    %v3231 = vunpack.c.l.b16 %v870
    %v3232 = vunpack.c.h.b16 %v870
    %v3233 = vunpack.c.l.b16 %v871
    %v3234 = vunpack.c.h.b16 %v871
    %v3235 = vunpack.c.l.b16 %v872
    %v3236 = vunpack.c.h.b16 %v872
    %v3237 = vunpack.c.l.b16 %v873
    %v3238 = vunpack.c.h.b16 %v873
    %v3239 = vunpack.c.l.b16 %v874
    %v3240 = vunpack.c.h.b16 %v874
    %v3241 = vunpack.c.l.b16 %v875
    %v3242 = vunpack.c.h.b16 %v875
    %v3243 = vunpack.c.l.b16 %v876
    %v3244 = vunpack.c.h.b16 %v876
    %v3245 = vunpack.c.l.b16 %v877
    %v3246 = vunpack.c.h.b16 %v877
    %v3247 = vunpack.c.l.b16 %v878
    %v3248 = vunpack.c.h.b16 %v878
    %v3249 = vunpack.c.l.b16 %v879
    %v3250 = vunpack.c.h.b16 %v879
    %v3251 = vunpack.c.l.b16 %v880
    %v3252 = vunpack.c.h.b16 %v880
    %v3253 = vunpack.c.l.b16 %v881
    %v3254 = vunpack.c.h.b16 %v881
    %v3255 = vunpack.c.l.b16 %v882
    %v3256 = vunpack.c.h.b16 %v882
    %v3257 = vunpack.c.l.b16 %v883
    %v3258 = vunpack.c.h.b16 %v883
    %v3259 = vunpack.c.l.b16 %v884
    %v3260 = vunpack.c.h.b16 %v884
    %v3261 = vunpack.c.l.b16 %v885
    %v3262 = vunpack.c.h.b16 %v885
    %v3263 = vunpack.c.l.b16 %v886
    %v3264 = vunpack.c.h.b16 %v886
    %v3265 = vunpack.c.l.b16 %v887
    %v3266 = vunpack.c.h.b16 %v887
    %v3267 = vunpack.c.l.b16 %v888
    %v3268 = vunpack.c.h.b16 %v888
    %v3269 = vunpack.c.l.b16 %v889
    %v3270 = vunpack.c.h.b16 %v889
    %v3271 = vunpack.c.l.b16 %v890
    %v3272 = vunpack.c.h.b16 %v890
    %v3273 = vunpack.c.l.b16 %v891
    %v3274 = vunpack.c.h.b16 %v891
    %v3275 = vunpack.c.l.b16 %v892
    %v3276 = vunpack.c.h.b16 %v892
    %v3277 = vunpack.c.l.b16 %v893
    %v3278 = vunpack.c.h.b16 %v893
    %v3279 = vunpack.c.l.b16 %v894
    %v3280 = vunpack.c.h.b16 %v894
    %v3281 = vunpack.c.l.b16 %v895
    %v3282 = vunpack.c.h.b16 %v895
    %v3283 = vunpack.c.l.b16 %v896
    %v3284 = vunpack.c.h.b16 %v896
    %v3285 = vunpack.c.l.b16 %v897
    %v3286 = vunpack.c.h.b16 %v897
    %v3287 = vunpack.c.l.b16 %v898
    %v3288 = vunpack.c.h.b16 %v898
    %v3289 = vunpack.c.l.b16 %v899
    %v3290 = vunpack.c.h.b16 %v899
    %v3291 = vunpack.c.l.b16 %v900
    %v3292 = vunpack.c.h.b16 %v900
    %v3293 = vunpack.c.l.b16 %v901
    %v3294 = vunpack.c.h.b16 %v901
    %v3295 = vunpack.c.l.b16 %v902
    %v3296 = vunpack.c.h.b16 %v902
    %v3297 = vunpack.c.l.b16 %v903
    %v3298 = vunpack.c.h.b16 %v903
    %v3299 = vunpack.c.l.b16 %v904
    %v3300 = vunpack.c.h.b16 %v904
    %v3301 = vunpack.c.l.b16 %v905
    %v3302 = vunpack.c.h.b16 %v905
    %v3303 = vunpack.c.l.b16 %v906
    %v3304 = vunpack.c.h.b16 %v906
    %v3305 = vunpack.c.l.b16 %v907
    %v3306 = vunpack.c.h.b16 %v907
    %v3307 = vunpack.c.l.b16 %v908
    %v3308 = vunpack.c.h.b16 %v908
    %v3309 = vunpack.c.l.b16 %v909
    %v3310 = vunpack.c.h.b16 %v909
    %v3311 = vunpack.c.l.b16 %v910
    %v3312 = vunpack.c.h.b16 %v910
    %v3313 = vunpack.c.l.b16 %v911
    %v3314 = vunpack.c.h.b16 %v911
    %v3315 = vunpack.c.l.b16 %v912
    %v3316 = vunpack.c.h.b16 %v912
    %v3317 = vunpack.c.l.b16 %v913
    %v3318 = vunpack.c.h.b16 %v913
    %v3319 = vunpack.c.l.b16 %v914
    %v3320 = vunpack.c.h.b16 %v914
    %v3321 = vunpack.c.l.b16 %v915
    %v3322 = vunpack.c.h.b16 %v915
    %v3323 = vunpack.c.l.b16 %v916
    %v3324 = vunpack.c.h.b16 %v916
    %v3325 = vunpack.c.l.b16 %v917
    %v3326 = vunpack.c.h.b16 %v917
    %v3327 = vunpack.c.l.b16 %v918
    %v3328 = vunpack.c.h.b16 %v918
    %v3329 = vpack.c.b16 %v1797, %v1793
    %v3330 = vpack.c.b16 %v1798, %v1794
    %v3331 = vpack.c.b16 %v1799, %v1795
    %v3332 = vpack.c.b16 %v1800, %v1796
    %v3333 = vpack.c.b16 %v1805, %v1801
    %v3334 = vpack.c.b16 %v1806, %v1802
    %v3335 = vpack.c.b16 %v1807, %v1803
    %v3336 = vpack.c.b16 %v1808, %v1804
    %v3337 = vpack.c.b16 %v1813, %v1809
    %v3338 = vpack.c.b16 %v1814, %v1810
    %v3339 = vpack.c.b16 %v1815, %v1811
    %v3340 = vpack.c.b16 %v1816, %v1812
    %v3341 = vpack.c.b16 %v1821, %v1817
    %v3342 = vpack.c.b16 %v1822, %v1818
    %v3343 = vpack.c.b16 %v1823, %v1819
    %v3344 = vpack.c.b16 %v1824, %v1820
    %v3345 = vpack.c.b16 %v1829, %v1825
    %v3346 = vpack.c.b16 %v1830, %v1826
    %v3347 = vpack.c.b16 %v1831, %v1827
    %v3348 = vpack.c.b16 %v1832, %v1828
    %v3349 = vpack.c.b16 %v1837, %v1833
    %v3350 = vpack.c.b16 %v1838, %v1834
    %v3351 = vpack.c.b16 %v1839, %v1835
    %v3352 = vpack.c.b16 %v1840, %v1836
    %v3353 = vpack.c.b16 %v1845, %v1841
    %v3354 = vpack.c.b16 %v1846, %v1842
    %v3355 = vpack.c.b16 %v1847, %v1843
    %v3356 = vpack.c.b16 %v1848, %v1844
    %v3357 = vpack.c.b16 %v1853, %v1849
    %v3358 = vpack.c.b16 %v1854, %v1850
    %v3359 = vpack.c.b16 %v1855, %v1851
    %v3360 = vpack.c.b16 %v1856, %v1852
    %v3361 = vpack.c.b16 %v1861, %v1857
    %v3362 = vpack.c.b16 %v1862, %v1858
    %v3363 = vpack.c.b16 %v1863, %v1859
    %v3364 = vpack.c.b16 %v1864, %v1860
    %v3365 = vpack.c.b16 %v1869, %v1865
    %v3366 = vpack.c.b16 %v1870, %v1866
    %v3367 = vpack.c.b16 %v1871, %v1867
    %v3368 = vpack.c.b16 %v1872, %v1868
    %v3369 = vpack.c.b16 %v1877, %v1873
    %v3370 = vpack.c.b16 %v1878, %v1874
    %v3371 = vpack.c.b16 %v1879, %v1875
    %v3372 = vpack.c.b16 %v1880, %v1876
    %v3373 = vpack.c.b16 %v1885, %v1881
    %v3374 = vpack.c.b16 %v1886, %v1882
    %v3375 = vpack.c.b16 %v1887, %v1883
    %v3376 = vpack.c.b16 %v1888, %v1884
    %v3377 = vpack.c.b16 %v1893, %v1889
    %v3378 = vpack.c.b16 %v1894, %v1890
    %v3379 = vpack.c.b16 %v1895, %v1891
    %v3380 = vpack.c.b16 %v1896, %v1892
    %v3381 = vpack.c.b16 %v1901, %v1897
    %v3382 = vpack.c.b16 %v1902, %v1898
    %v3383 = vpack.c.b16 %v1903, %v1899
    %v3384 = vpack.c.b16 %v1904, %v1900
    %v3385 = vpack.c.b16 %v1909, %v1905
    %v3386 = vpack.c.b16 %v1910, %v1906
    %v3387 = vpack.c.b16 %v1911, %v1907
    %v3388 = vpack.c.b16 %v1912, %v1908
    %v3389 = vpack.c.b16 %v1917, %v1913
    %v3390 = vpack.c.b16 %v1918, %v1914
    %v3391 = vpack.c.b16 %v1919, %v1915
    %v3392 = vpack.c.b16 %v1920, %v1916
    %v3393 = vpack.c.b16 %v1925, %v1921
    %v3394 = vpack.c.b16 %v1926, %v1922
    %v3395 = vpack.c.b16 %v1927, %v1923
    %v3396 = vpack.c.b16 %v1928, %v1924
    %v3397 = vpack.c.b16 %v1933, %v1929
    %v3398 = vpack.c.b16 %v1934, %v1930
    %v3399 = vpack.c.b16 %v1935, %v1931
    %v3400 = vpack.c.b16 %v1936, %v1932
    %v3401 = vpack.c.b16 %v1941, %v1937
    %v3402 = vpack.c.b16 %v1942, %v1938
    %v3403 = vpack.c.b16 %v1943, %v1939
    %v3404 = vpack.c.b16 %v1944, %v1940
    %v3405 = vpack.c.b16 %v1949, %v1945
    %v3406 = vpack.c.b16 %v1950, %v1946
    %v3407 = vpack.c.b16 %v1951, %v1947
    %v3408 = vpack.c.b16 %v1952, %v1948
    %v3409 = vpack.c.b16 %v1957, %v1953
    %v3410 = vpack.c.b16 %v1958, %v1954
    %v3411 = vpack.c.b16 %v1959, %v1955
    %v3412 = vpack.c.b16 %v1960, %v1956
    %v3413 = vpack.c.b16 %v1965, %v1961
    %v3414 = vpack.c.b16 %v1966, %v1962
    %v3415 = vpack.c.b16 %v1967, %v1963
    %v3416 = vpack.c.b16 %v1968, %v1964
    %v3417 = vpack.c.b16 %v1973, %v1969
    %v3418 = vpack.c.b16 %v1974, %v1970
    %v3419 = vpack.c.b16 %v1975, %v1971
    %v3420 = vpack.c.b16 %v1976, %v1972
    %v3421 = vpack.c.b16 %v1981, %v1977
    %v3422 = vpack.c.b16 %v1982, %v1978
    %v3423 = vpack.c.b16 %v1983, %v1979
    %v3424 = vpack.c.b16 %v1984, %v1980
    %v3425 = vpack.c.b16 %v1989, %v1985
    %v3426 = vpack.c.b16 %v1990, %v1986
    %v3427 = vpack.c.b16 %v1991, %v1987
    %v3428 = vpack.c.b16 %v1992, %v1988
    %v3429 = vpack.c.b16 %v1997, %v1993
    %v3430 = vpack.c.b16 %v1998, %v1994
    %v3431 = vpack.c.b16 %v1999, %v1995
    %v3432 = vpack.c.b16 %v2000, %v1996
    %v3433 = vpack.c.b16 %v2005, %v2001
    %v3434 = vpack.c.b16 %v2006, %v2002
    %v3435 = vpack.c.b16 %v2007, %v2003
    %v3436 = vpack.c.b16 %v2008, %v2004
    %v3437 = vpack.c.b16 %v2013, %v2009
    %v3438 = vpack.c.b16 %v2014, %v2010
    %v3439 = vpack.c.b16 %v2015, %v2011
    %v3440 = vpack.c.b16 %v2016, %v2012
    %v3441 = vpack.c.b16 %v2021, %v2017
    %v3442 = vpack.c.b16 %v2022, %v2018
    %v3443 = vpack.c.b16 %v2023, %v2019
    %v3444 = vpack.c.b16 %v2024, %v2020
    %v3445 = vpack.c.b16 %v2029, %v2025
    %v3446 = vpack.c.b16 %v2030, %v2026
    %v3447 = vpack.c.b16 %v2031, %v2027
    %v3448 = vpack.c.b16 %v2032, %v2028
    %v3449 = vpack.c.b16 %v2037, %v2033
    %v3450 = vpack.c.b16 %v2038, %v2034
    %v3451 = vpack.c.b16 %v2039, %v2035
    %v3452 = vpack.c.b16 %v2040, %v2036
    %v3453 = vpack.c.b16 %v2045, %v2041
    %v3454 = vpack.c.b16 %v2046, %v2042
    %v3455 = vpack.c.b16 %v2047, %v2043
    %v3456 = vpack.c.b16 %v2048, %v2044
    %v3457 = vpack.c.b16 %v2053, %v2049
    %v3458 = vpack.c.b16 %v2054, %v2050
    %v3459 = vpack.c.b16 %v2055, %v2051
    %v3460 = vpack.c.b16 %v2056, %v2052
    %v3461 = vpack.c.b16 %v2061, %v2057
    %v3462 = vpack.c.b16 %v2062, %v2058
    %v3463 = vpack.c.b16 %v2063, %v2059
    %v3464 = vpack.c.b16 %v2064, %v2060
    %v3465 = vpack.c.b16 %v2069, %v2065
    %v3466 = vpack.c.b16 %v2070, %v2066
    %v3467 = vpack.c.b16 %v2071, %v2067
    %v3468 = vpack.c.b16 %v2072, %v2068
    %v3469 = vpack.c.b16 %v2077, %v2073
    %v3470 = vpack.c.b16 %v2078, %v2074
    %v3471 = vpack.c.b16 %v2079, %v2075
    %v3472 = vpack.c.b16 %v2080, %v2076
    %v3473 = vpack.c.b16 %v2085, %v2081
    %v3474 = vpack.c.b16 %v2086, %v2082
    %v3475 = vpack.c.b16 %v2087, %v2083
    %v3476 = vpack.c.b16 %v2088, %v2084
    %v3477 = vpack.c.b16 %v2093, %v2089
    %v3478 = vpack.c.b16 %v2094, %v2090
    %v3479 = vpack.c.b16 %v2095, %v2091
    %v3480 = vpack.c.b16 %v2096, %v2092
    %v3481 = vpack.c.b16 %v2101, %v2097
    %v3482 = vpack.c.b16 %v2102, %v2098
    %v3483 = vpack.c.b16 %v2103, %v2099
    %v3484 = vpack.c.b16 %v2104, %v2100
    %v3485 = vpack.c.b16 %v2109, %v2105
    %v3486 = vpack.c.b16 %v2110, %v2106
    %v3487 = vpack.c.b16 %v2111, %v2107
    %v3488 = vpack.c.b16 %v2112, %v2108
    %v3489 = vpack.c.b16 %v2117, %v2113
    %v3490 = vpack.c.b16 %v2118, %v2114
    %v3491 = vpack.c.b16 %v2119, %v2115
    %v3492 = vpack.c.b16 %v2120, %v2116
    %v3493 = vpack.c.b16 %v2125, %v2121
    %v3494 = vpack.c.b16 %v2126, %v2122
    %v3495 = vpack.c.b16 %v2127, %v2123
    %v3496 = vpack.c.b16 %v2128, %v2124
    %v3497 = vpack.c.b16 %v2133, %v2129
    %v3498 = vpack.c.b16 %v2134, %v2130
    %v3499 = vpack.c.b16 %v2135, %v2131
    %v3500 = vpack.c.b16 %v2136, %v2132
    %v3501 = vpack.c.b16 %v2141, %v2137
    %v3502 = vpack.c.b16 %v2142, %v2138
    %v3503 = vpack.c.b16 %v2143, %v2139
    %v3504 = vpack.c.b16 %v2144, %v2140
    %v3505 = vpack.c.b16 %v2149, %v2145
    %v3506 = vpack.c.b16 %v2150, %v2146
    %v3507 = vpack.c.b16 %v2151, %v2147
    %v3508 = vpack.c.b16 %v2152, %v2148
    %v3509 = vpack.c.b16 %v2157, %v2153
    %v3510 = vpack.c.b16 %v2158, %v2154
    %v3511 = vpack.c.b16 %v2159, %v2155
    %v3512 = vpack.c.b16 %v2160, %v2156
    %v3513 = vpack.c.b16 %v2165, %v2161
    %v3514 = vpack.c.b16 %v2166, %v2162
    %v3515 = vpack.c.b16 %v2167, %v2163
    %v3516 = vpack.c.b16 %v2168, %v2164
    %v3517 = vpack.c.b16 %v2173, %v2169
    %v3518 = vpack.c.b16 %v2174, %v2170
    %v3519 = vpack.c.b16 %v2175, %v2171
    %v3520 = vpack.c.b16 %v2176, %v2172
    %v3521 = vpack.c.b16 %v2181, %v2177
    %v3522 = vpack.c.b16 %v2182, %v2178
    %v3523 = vpack.c.b16 %v2183, %v2179
    %v3524 = vpack.c.b16 %v2184, %v2180
    %v3525 = vpack.c.b16 %v2189, %v2185
    %v3526 = vpack.c.b16 %v2190, %v2186
    %v3527 = vpack.c.b16 %v2191, %v2187
    %v3528 = vpack.c.b16 %v2192, %v2188
    %v3529 = vpack.c.b16 %v2197, %v2193
    %v3530 = vpack.c.b16 %v2198, %v2194
    %v3531 = vpack.c.b16 %v2199, %v2195
    %v3532 = vpack.c.b16 %v2200, %v2196
    %v3533 = vpack.c.b16 %v2205, %v2201
    %v3534 = vpack.c.b16 %v2206, %v2202
    %v3535 = vpack.c.b16 %v2207, %v2203
    %v3536 = vpack.c.b16 %v2208, %v2204
    %v3537 = vpack.c.b16 %v2213, %v2209
    %v3538 = vpack.c.b16 %v2214, %v2210
    %v3539 = vpack.c.b16 %v2215, %v2211
    %v3540 = vpack.c.b16 %v2216, %v2212
    %v3541 = vpack.c.b16 %v2221, %v2217
    %v3542 = vpack.c.b16 %v2222, %v2218
    %v3543 = vpack.c.b16 %v2223, %v2219
    %v3544 = vpack.c.b16 %v2224, %v2220
    %v3545 = vpack.c.b16 %v2229, %v2225
    %v3546 = vpack.c.b16 %v2230, %v2226
    %v3547 = vpack.c.b16 %v2231, %v2227
    %v3548 = vpack.c.b16 %v2232, %v2228
    %v3549 = vpack.c.b16 %v2237, %v2233
    %v3550 = vpack.c.b16 %v2238, %v2234
    %v3551 = vpack.c.b16 %v2239, %v2235
    %v3552 = vpack.c.b16 %v2240, %v2236
    %v3553 = vpack.c.b16 %v2245, %v2241
    %v3554 = vpack.c.b16 %v2246, %v2242
    %v3555 = vpack.c.b16 %v2247, %v2243
    %v3556 = vpack.c.b16 %v2248, %v2244
    %v3557 = vpack.c.b16 %v2253, %v2249
    %v3558 = vpack.c.b16 %v2254, %v2250
    %v3559 = vpack.c.b16 %v2255, %v2251
    %v3560 = vpack.c.b16 %v2256, %v2252
    %v3561 = vpack.c.b16 %v2261, %v2257
    %v3562 = vpack.c.b16 %v2262, %v2258
    %v3563 = vpack.c.b16 %v2263, %v2259
    %v3564 = vpack.c.b16 %v2264, %v2260
    %v3565 = vpack.c.b16 %v2269, %v2265
    %v3566 = vpack.c.b16 %v2270, %v2266
    %v3567 = vpack.c.b16 %v2271, %v2267
    %v3568 = vpack.c.b16 %v2272, %v2268
    %v3569 = vpack.c.b16 %v2277, %v2273
    %v3570 = vpack.c.b16 %v2278, %v2274
    %v3571 = vpack.c.b16 %v2279, %v2275
    %v3572 = vpack.c.b16 %v2280, %v2276
    %v3573 = vpack.c.b16 %v2285, %v2281
    %v3574 = vpack.c.b16 %v2286, %v2282
    %v3575 = vpack.c.b16 %v2287, %v2283
    %v3576 = vpack.c.b16 %v2288, %v2284
    %v3577 = vpack.c.b16 %v2293, %v2289
    %v3578 = vpack.c.b16 %v2294, %v2290
    %v3579 = vpack.c.b16 %v2295, %v2291
    %v3580 = vpack.c.b16 %v2296, %v2292
    %v3581 = vpack.c.b16 %v2301, %v2297
    %v3582 = vpack.c.b16 %v2302, %v2298
    %v3583 = vpack.c.b16 %v2303, %v2299
    %v3584 = vpack.c.b16 %v2304, %v2300
    %v3585 = vpack.c.b16 %v2309, %v2305
    %v3586 = vpack.c.b16 %v2310, %v2306
    %v3587 = vpack.c.b16 %v2311, %v2307
    %v3588 = vpack.c.b16 %v2312, %v2308
    %v3589 = vpack.c.b16 %v2317, %v2313
    %v3590 = vpack.c.b16 %v2318, %v2314
    %v3591 = vpack.c.b16 %v2319, %v2315
    %v3592 = vpack.c.b16 %v2320, %v2316
    %v3593 = vpack.c.b16 %v2325, %v2321
    %v3594 = vpack.c.b16 %v2326, %v2322
    %v3595 = vpack.c.b16 %v2327, %v2323
    %v3596 = vpack.c.b16 %v2328, %v2324
    %v3597 = vpack.c.b16 %v2333, %v2329
    %v3598 = vpack.c.b16 %v2334, %v2330
    %v3599 = vpack.c.b16 %v2335, %v2331
    %v3600 = vpack.c.b16 %v2336, %v2332
    %v3601 = vpack.c.b16 %v2341, %v2337
    %v3602 = vpack.c.b16 %v2342, %v2338
    %v3603 = vpack.c.b16 %v2343, %v2339
    %v3604 = vpack.c.b16 %v2344, %v2340
    %v3605 = vpack.c.b16 %v2349, %v2345
    %v3606 = vpack.c.b16 %v2350, %v2346
    %v3607 = vpack.c.b16 %v2351, %v2347
    %v3608 = vpack.c.b16 %v2352, %v2348
    %v3609 = vpack.c.b16 %v2357, %v2353
    %v3610 = vpack.c.b16 %v2358, %v2354
    %v3611 = vpack.c.b16 %v2359, %v2355
    %v3612 = vpack.c.b16 %v2360, %v2356
    %v3613 = vpack.c.b16 %v2365, %v2361
    %v3614 = vpack.c.b16 %v2366, %v2362
    %v3615 = vpack.c.b16 %v2367, %v2363
    %v3616 = vpack.c.b16 %v2368, %v2364
    %v3617 = vpack.c.b16 %v2373, %v2369
    %v3618 = vpack.c.b16 %v2374, %v2370
    %v3619 = vpack.c.b16 %v2375, %v2371
    %v3620 = vpack.c.b16 %v2376, %v2372
    %v3621 = vpack.c.b16 %v2381, %v2377
    %v3622 = vpack.c.b16 %v2382, %v2378
    %v3623 = vpack.c.b16 %v2383, %v2379
    %v3624 = vpack.c.b16 %v2384, %v2380
    %v3625 = vpack.c.b16 %v2389, %v2385
    %v3626 = vpack.c.b16 %v2390, %v2386
    %v3627 = vpack.c.b16 %v2391, %v2387
    %v3628 = vpack.c.b16 %v2392, %v2388
    %v3629 = vpack.c.b16 %v2397, %v2393
    %v3630 = vpack.c.b16 %v2398, %v2394
    %v3631 = vpack.c.b16 %v2399, %v2395
    %v3632 = vpack.c.b16 %v2400, %v2396
    %v3633 = vpack.c.b16 %v2405, %v2401
    %v3634 = vpack.c.b16 %v2406, %v2402
    %v3635 = vpack.c.b16 %v2407, %v2403
    %v3636 = vpack.c.b16 %v2408, %v2404
    %v3637 = vpack.c.b16 %v2413, %v2409
    %v3638 = vpack.c.b16 %v2414, %v2410
    %v3639 = vpack.c.b16 %v2415, %v2411
    %v3640 = vpack.c.b16 %v2416, %v2412
    %v3641 = vpack.c.b16 %v2421, %v2417
    %v3642 = vpack.c.b16 %v2422, %v2418
    %v3643 = vpack.c.b16 %v2423, %v2419
    %v3644 = vpack.c.b16 %v2424, %v2420
    %v3645 = vpack.c.b16 %v2429, %v2425
    %v3646 = vpack.c.b16 %v2430, %v2426
    %v3647 = vpack.c.b16 %v2431, %v2427
    %v3648 = vpack.c.b16 %v2432, %v2428
    %v3649 = vpack.c.b16 %v2437, %v2433
    %v3650 = vpack.c.b16 %v2438, %v2434
    %v3651 = vpack.c.b16 %v2439, %v2435
    %v3652 = vpack.c.b16 %v2440, %v2436
    %v3653 = vpack.c.b16 %v2445, %v2441
    %v3654 = vpack.c.b16 %v2446, %v2442
    %v3655 = vpack.c.b16 %v2447, %v2443
    %v3656 = vpack.c.b16 %v2448, %v2444
    %v3657 = vpack.c.b16 %v2453, %v2449
    %v3658 = vpack.c.b16 %v2454, %v2450
    %v3659 = vpack.c.b16 %v2455, %v2451
    %v3660 = vpack.c.b16 %v2456, %v2452
    %v3661 = vpack.c.b16 %v2461, %v2457
    %v3662 = vpack.c.b16 %v2462, %v2458
    %v3663 = vpack.c.b16 %v2463, %v2459
    %v3664 = vpack.c.b16 %v2464, %v2460
    %v3665 = vpack.c.b16 %v2469, %v2465
    %v3666 = vpack.c.b16 %v2470, %v2466
    %v3667 = vpack.c.b16 %v2471, %v2467
    %v3668 = vpack.c.b16 %v2472, %v2468
    %v3669 = vpack.c.b16 %v2477, %v2473
    %v3670 = vpack.c.b16 %v2478, %v2474
    %v3671 = vpack.c.b16 %v2479, %v2475
    %v3672 = vpack.c.b16 %v2480, %v2476
    %v3673 = vpack.c.b16 %v2485, %v2481
    %v3674 = vpack.c.b16 %v2486, %v2482
    %v3675 = vpack.c.b16 %v2487, %v2483
    %v3676 = vpack.c.b16 %v2488, %v2484
    %v3677 = vpack.c.b16 %v2493, %v2489
    %v3678 = vpack.c.b16 %v2494, %v2490
    %v3679 = vpack.c.b16 %v2495, %v2491
    %v3680 = vpack.c.b16 %v2496, %v2492
    %v3681 = vpack.c.b16 %v2501, %v2497
    %v3682 = vpack.c.b16 %v2502, %v2498
    %v3683 = vpack.c.b16 %v2503, %v2499
    %v3684 = vpack.c.b16 %v2504, %v2500
    %v3685 = vpack.c.b16 %v2509, %v2505
    %v3686 = vpack.c.b16 %v2510, %v2506
    %v3687 = vpack.c.b16 %v2511, %v2507
    %v3688 = vpack.c.b16 %v2512, %v2508
    %v3689 = vpack.c.b16 %v2517, %v2513
    %v3690 = vpack.c.b16 %v2518, %v2514
    %v3691 = vpack.c.b16 %v2519, %v2515
    %v3692 = vpack.c.b16 %v2520, %v2516
    %v3693 = vpack.c.b16 %v2525, %v2521
    %v3694 = vpack.c.b16 %v2526, %v2522
    %v3695 = vpack.c.b16 %v2527, %v2523
    %v3696 = vpack.c.b16 %v2528, %v2524
    %v3697 = vpack.c.b16 %v2533, %v2529
    %v3698 = vpack.c.b16 %v2534, %v2530
    %v3699 = vpack.c.b16 %v2535, %v2531
    %v3700 = vpack.c.b16 %v2536, %v2532
    %v3701 = vpack.c.b16 %v2541, %v2537
    %v3702 = vpack.c.b16 %v2542, %v2538
    %v3703 = vpack.c.b16 %v2543, %v2539
    %v3704 = vpack.c.b16 %v2544, %v2540
    %v3705 = vpack.c.b16 %v2549, %v2545
    %v3706 = vpack.c.b16 %v2550, %v2546
    %v3707 = vpack.c.b16 %v2551, %v2547
    %v3708 = vpack.c.b16 %v2552, %v2548
    %v3709 = vpack.c.b16 %v2557, %v2553
    %v3710 = vpack.c.b16 %v2558, %v2554
    %v3711 = vpack.c.b16 %v2559, %v2555
    %v3712 = vpack.c.b16 %v2560, %v2556
    %v3713 = vpack.c.b16 %v2565, %v2561
    %v3714 = vpack.c.b16 %v2566, %v2562
    %v3715 = vpack.c.b16 %v2567, %v2563
    %v3716 = vpack.c.b16 %v2568, %v2564
    %v3717 = vpack.c.b16 %v2573, %v2569
    %v3718 = vpack.c.b16 %v2574, %v2570
    %v3719 = vpack.c.b16 %v2575, %v2571
    %v3720 = vpack.c.b16 %v2576, %v2572
    %v3721 = vpack.c.b16 %v2581, %v2577
    %v3722 = vpack.c.b16 %v2582, %v2578
    %v3723 = vpack.c.b16 %v2583, %v2579
    %v3724 = vpack.c.b16 %v2584, %v2580
    %v3725 = vpack.c.b16 %v2589, %v2585
    %v3726 = vpack.c.b16 %v2590, %v2586
    %v3727 = vpack.c.b16 %v2591, %v2587
    %v3728 = vpack.c.b16 %v2592, %v2588
    %v3729 = vpack.c.b16 %v2597, %v2593
    %v3730 = vpack.c.b16 %v2598, %v2594
    %v3731 = vpack.c.b16 %v2599, %v2595
    %v3732 = vpack.c.b16 %v2600, %v2596
    %v3733 = vpack.c.b16 %v2605, %v2601
    %v3734 = vpack.c.b16 %v2606, %v2602
    %v3735 = vpack.c.b16 %v2607, %v2603
    %v3736 = vpack.c.b16 %v2608, %v2604
    %v3737 = vpack.c.b16 %v2613, %v2609
    %v3738 = vpack.c.b16 %v2614, %v2610
    %v3739 = vpack.c.b16 %v2615, %v2611
    %v3740 = vpack.c.b16 %v2616, %v2612
    %v3741 = vpack.c.b16 %v2621, %v2617
    %v3742 = vpack.c.b16 %v2622, %v2618
    %v3743 = vpack.c.b16 %v2623, %v2619
    %v3744 = vpack.c.b16 %v2624, %v2620
    %v3745 = vpack.c.b16 %v2629, %v2625
    %v3746 = vpack.c.b16 %v2630, %v2626
    %v3747 = vpack.c.b16 %v2631, %v2627
    %v3748 = vpack.c.b16 %v2632, %v2628
    %v3749 = vpack.c.b16 %v2637, %v2633
    %v3750 = vpack.c.b16 %v2638, %v2634
    %v3751 = vpack.c.b16 %v2639, %v2635
    %v3752 = vpack.c.b16 %v2640, %v2636
    %v3753 = vpack.c.b16 %v2645, %v2641
    %v3754 = vpack.c.b16 %v2646, %v2642
    %v3755 = vpack.c.b16 %v2647, %v2643
    %v3756 = vpack.c.b16 %v2648, %v2644
    %v3757 = vpack.c.b16 %v2653, %v2649
    %v3758 = vpack.c.b16 %v2654, %v2650
    %v3759 = vpack.c.b16 %v2655, %v2651
    %v3760 = vpack.c.b16 %v2656, %v2652
    %v3761 = vpack.c.b16 %v2661, %v2657
    %v3762 = vpack.c.b16 %v2662, %v2658
    %v3763 = vpack.c.b16 %v2663, %v2659
    %v3764 = vpack.c.b16 %v2664, %v2660
    %v3765 = vpack.c.b16 %v2669, %v2665
    %v3766 = vpack.c.b16 %v2670, %v2666
    %v3767 = vpack.c.b16 %v2671, %v2667
    %v3768 = vpack.c.b16 %v2672, %v2668
    %v3769 = vpack.c.b16 %v2677, %v2673
    %v3770 = vpack.c.b16 %v2678, %v2674
    %v3771 = vpack.c.b16 %v2679, %v2675
    %v3772 = vpack.c.b16 %v2680, %v2676
    %v3773 = vpack.c.b16 %v2685, %v2681
    %v3774 = vpack.c.b16 %v2686, %v2682
    %v3775 = vpack.c.b16 %v2687, %v2683
    %v3776 = vpack.c.b16 %v2688, %v2684
    %v3777 = vpack.c.b16 %v2693, %v2689
    %v3778 = vpack.c.b16 %v2694, %v2690
    %v3779 = vpack.c.b16 %v2695, %v2691
    %v3780 = vpack.c.b16 %v2696, %v2692
    %v3781 = vpack.c.b16 %v2701, %v2697
    %v3782 = vpack.c.b16 %v2702, %v2698
    %v3783 = vpack.c.b16 %v2703, %v2699
    %v3784 = vpack.c.b16 %v2704, %v2700
    %v3785 = vpack.c.b16 %v2709, %v2705
    %v3786 = vpack.c.b16 %v2710, %v2706
    %v3787 = vpack.c.b16 %v2711, %v2707
    %v3788 = vpack.c.b16 %v2712, %v2708
    %v3789 = vpack.c.b16 %v2717, %v2713
    %v3790 = vpack.c.b16 %v2718, %v2714
    %v3791 = vpack.c.b16 %v2719, %v2715
    %v3792 = vpack.c.b16 %v2720, %v2716
    %v3793 = vpack.c.b16 %v2725, %v2721
    %v3794 = vpack.c.b16 %v2726, %v2722
    %v3795 = vpack.c.b16 %v2727, %v2723
    %v3796 = vpack.c.b16 %v2728, %v2724
    %v3797 = vpack.c.b16 %v2733, %v2729
    %v3798 = vpack.c.b16 %v2734, %v2730
    %v3799 = vpack.c.b16 %v2735, %v2731
    %v3800 = vpack.c.b16 %v2736, %v2732
    %v3801 = vpack.c.b16 %v2741, %v2737
    %v3802 = vpack.c.b16 %v2742, %v2738
    %v3803 = vpack.c.b16 %v2743, %v2739
    %v3804 = vpack.c.b16 %v2744, %v2740
    %v3805 = vpack.c.b16 %v2749, %v2745
    %v3806 = vpack.c.b16 %v2750, %v2746
    %v3807 = vpack.c.b16 %v2751, %v2747
    %v3808 = vpack.c.b16 %v2752, %v2748
    %v3809 = vpack.c.b16 %v2757, %v2753
    %v3810 = vpack.c.b16 %v2758, %v2754
    %v3811 = vpack.c.b16 %v2759, %v2755
    %v3812 = vpack.c.b16 %v2760, %v2756
    %v3813 = vpack.c.b16 %v2765, %v2761
    %v3814 = vpack.c.b16 %v2766, %v2762
    %v3815 = vpack.c.b16 %v2767, %v2763
    %v3816 = vpack.c.b16 %v2768, %v2764
    %v3817 = vpack.c.b16 %v2773, %v2769
    %v3818 = vpack.c.b16 %v2774, %v2770
    %v3819 = vpack.c.b16 %v2775, %v2771
    %v3820 = vpack.c.b16 %v2776, %v2772
    %v3821 = vpack.c.b16 %v2781, %v2777
    %v3822 = vpack.c.b16 %v2782, %v2778
    %v3823 = vpack.c.b16 %v2783, %v2779
    %v3824 = vpack.c.b16 %v2784, %v2780
    %v3825 = vpack.c.b16 %v2789, %v2785
    %v3826 = vpack.c.b16 %v2790, %v2786
    %v3827 = vpack.c.b16 %v2791, %v2787
    %v3828 = vpack.c.b16 %v2792, %v2788
    %v3829 = vpack.c.b16 %v2797, %v2793
    %v3830 = vpack.c.b16 %v2798, %v2794
    %v3831 = vpack.c.b16 %v2799, %v2795
    %v3832 = vpack.c.b16 %v2800, %v2796
    %v3833 = vpack.c.b16 %v2805, %v2801
    %v3834 = vpack.c.b16 %v2806, %v2802
    %v3835 = vpack.c.b16 %v2807, %v2803
    %v3836 = vpack.c.b16 %v2808, %v2804
    %v3837 = vpack.c.b16 %v2813, %v2809
    %v3838 = vpack.c.b16 %v2814, %v2810
    %v3839 = vpack.c.b16 %v2815, %v2811
    %v3840 = vpack.c.b16 %v2816, %v2812
    %v3841 = vpack.c.b16 %v2821, %v2817
    %v3842 = vpack.c.b16 %v2822, %v2818
    %v3843 = vpack.c.b16 %v2823, %v2819
    %v3844 = vpack.c.b16 %v2824, %v2820
    %v3845 = vpack.c.b16 %v2829, %v2825
    %v3846 = vpack.c.b16 %v2830, %v2826
    %v3847 = vpack.c.b16 %v2831, %v2827
    %v3848 = vpack.c.b16 %v2832, %v2828
    %v3849 = vpack.c.b16 %v2837, %v2833
    %v3850 = vpack.c.b16 %v2838, %v2834
    %v3851 = vpack.c.b16 %v2839, %v2835
    %v3852 = vpack.c.b16 %v2840, %v2836
    %v3853 = vpack.c.b16 %v2845, %v2841
    %v3854 = vpack.c.b16 %v2846, %v2842
    %v3855 = vpack.c.b16 %v2847, %v2843
    %v3856 = vpack.c.b16 %v2848, %v2844
    %v3857 = vpack.c.b16 %v2853, %v2849
    %v3858 = vpack.c.b16 %v2854, %v2850
    %v3859 = vpack.c.b16 %v2855, %v2851
    %v3860 = vpack.c.b16 %v2856, %v2852
    %v3861 = vpack.c.b16 %v2861, %v2857
    %v3862 = vpack.c.b16 %v2862, %v2858
    %v3863 = vpack.c.b16 %v2863, %v2859
    %v3864 = vpack.c.b16 %v2864, %v2860
    %v3865 = vpack.c.b16 %v2869, %v2865
    %v3866 = vpack.c.b16 %v2870, %v2866
    %v3867 = vpack.c.b16 %v2871, %v2867
    %v3868 = vpack.c.b16 %v2872, %v2868
    %v3869 = vpack.c.b16 %v2877, %v2873
    %v3870 = vpack.c.b16 %v2878, %v2874
    %v3871 = vpack.c.b16 %v2879, %v2875
    %v3872 = vpack.c.b16 %v2880, %v2876
    %v3873 = vpack.c.b16 %v2885, %v2881
    %v3874 = vpack.c.b16 %v2886, %v2882
    %v3875 = vpack.c.b16 %v2887, %v2883
    %v3876 = vpack.c.b16 %v2888, %v2884
    %v3877 = vpack.c.b16 %v2893, %v2889
    %v3878 = vpack.c.b16 %v2894, %v2890
    %v3879 = vpack.c.b16 %v2895, %v2891
    %v3880 = vpack.c.b16 %v2896, %v2892
    %v3881 = vpack.c.b16 %v2901, %v2897
    %v3882 = vpack.c.b16 %v2902, %v2898
    %v3883 = vpack.c.b16 %v2903, %v2899
    %v3884 = vpack.c.b16 %v2904, %v2900
    %v3885 = vpack.c.b16 %v2909, %v2905
    %v3886 = vpack.c.b16 %v2910, %v2906
    %v3887 = vpack.c.b16 %v2911, %v2907
    %v3888 = vpack.c.b16 %v2912, %v2908
    %v3889 = vpack.c.b16 %v2917, %v2913
    %v3890 = vpack.c.b16 %v2918, %v2914
    %v3891 = vpack.c.b16 %v2919, %v2915
    %v3892 = vpack.c.b16 %v2920, %v2916
    %v3893 = vpack.c.b16 %v2925, %v2921
    %v3894 = vpack.c.b16 %v2926, %v2922
    %v3895 = vpack.c.b16 %v2927, %v2923
    %v3896 = vpack.c.b16 %v2928, %v2924
    %v3897 = vpack.c.b16 %v2933, %v2929
    %v3898 = vpack.c.b16 %v2934, %v2930
    %v3899 = vpack.c.b16 %v2935, %v2931
    %v3900 = vpack.c.b16 %v2936, %v2932
    %v3901 = vpack.c.b16 %v2941, %v2937
    %v3902 = vpack.c.b16 %v2942, %v2938
    %v3903 = vpack.c.b16 %v2943, %v2939
    %v3904 = vpack.c.b16 %v2944, %v2940
    %v3905 = vpack.c.b16 %v2949, %v2945
    %v3906 = vpack.c.b16 %v2950, %v2946
    %v3907 = vpack.c.b16 %v2951, %v2947
    %v3908 = vpack.c.b16 %v2952, %v2948
    %v3909 = vpack.c.b16 %v2957, %v2953
    %v3910 = vpack.c.b16 %v2958, %v2954
    %v3911 = vpack.c.b16 %v2959, %v2955
    %v3912 = vpack.c.b16 %v2960, %v2956
    %v3913 = vpack.c.b16 %v2965, %v2961
    %v3914 = vpack.c.b16 %v2966, %v2962
    %v3915 = vpack.c.b16 %v2967, %v2963
    %v3916 = vpack.c.b16 %v2968, %v2964
    %v3917 = vpack.c.b16 %v2973, %v2969
    %v3918 = vpack.c.b16 %v2974, %v2970
    %v3919 = vpack.c.b16 %v2975, %v2971
    %v3920 = vpack.c.b16 %v2976, %v2972
    %v3921 = vpack.c.b16 %v2981, %v2977
    %v3922 = vpack.c.b16 %v2982, %v2978
    %v3923 = vpack.c.b16 %v2983, %v2979
    %v3924 = vpack.c.b16 %v2984, %v2980
    %v3925 = vpack.c.b16 %v2989, %v2985
    %v3926 = vpack.c.b16 %v2990, %v2986
    %v3927 = vpack.c.b16 %v2991, %v2987
    %v3928 = vpack.c.b16 %v2992, %v2988
    %v3929 = vpack.c.b16 %v2997, %v2993
    %v3930 = vpack.c.b16 %v2998, %v2994
    %v3931 = vpack.c.b16 %v2999, %v2995
    %v3932 = vpack.c.b16 %v3000, %v2996
    %v3933 = vpack.c.b16 %v3005, %v3001
    %v3934 = vpack.c.b16 %v3006, %v3002
    %v3935 = vpack.c.b16 %v3007, %v3003
    %v3936 = vpack.c.b16 %v3008, %v3004
    %v3937 = vpack.c.b16 %v3013, %v3009
    %v3938 = vpack.c.b16 %v3014, %v3010
    %v3939 = vpack.c.b16 %v3015, %v3011
    %v3940 = vpack.c.b16 %v3016, %v3012
    %v3941 = vpack.c.b16 %v3021, %v3017
    %v3942 = vpack.c.b16 %v3022, %v3018
    %v3943 = vpack.c.b16 %v3023, %v3019
    %v3944 = vpack.c.b16 %v3024, %v3020
    %v3945 = vpack.c.b16 %v3029, %v3025
    %v3946 = vpack.c.b16 %v3030, %v3026
    %v3947 = vpack.c.b16 %v3031, %v3027
    %v3948 = vpack.c.b16 %v3032, %v3028
    %v3949 = vpack.c.b16 %v3037, %v3033
    %v3950 = vpack.c.b16 %v3038, %v3034
    %v3951 = vpack.c.b16 %v3039, %v3035
    %v3952 = vpack.c.b16 %v3040, %v3036
    %v3953 = vpack.c.b16 %v3045, %v3041
    %v3954 = vpack.c.b16 %v3046, %v3042
    %v3955 = vpack.c.b16 %v3047, %v3043
    %v3956 = vpack.c.b16 %v3048, %v3044
    %v3957 = vpack.c.b16 %v3053, %v3049
    %v3958 = vpack.c.b16 %v3054, %v3050
    %v3959 = vpack.c.b16 %v3055, %v3051
    %v3960 = vpack.c.b16 %v3056, %v3052
    %v3961 = vpack.c.b16 %v3061, %v3057
    %v3962 = vpack.c.b16 %v3062, %v3058
    %v3963 = vpack.c.b16 %v3063, %v3059
    %v3964 = vpack.c.b16 %v3064, %v3060
    %v3965 = vpack.c.b16 %v3069, %v3065
    %v3966 = vpack.c.b16 %v3070, %v3066
    %v3967 = vpack.c.b16 %v3071, %v3067
    %v3968 = vpack.c.b16 %v3072, %v3068
    %v3969 = vpack.c.b16 %v3077, %v3073
    %v3970 = vpack.c.b16 %v3078, %v3074
    %v3971 = vpack.c.b16 %v3079, %v3075
    %v3972 = vpack.c.b16 %v3080, %v3076
    %v3973 = vpack.c.b16 %v3085, %v3081
    %v3974 = vpack.c.b16 %v3086, %v3082
    %v3975 = vpack.c.b16 %v3087, %v3083
    %v3976 = vpack.c.b16 %v3088, %v3084
    %v3977 = vpack.c.b16 %v3093, %v3089
    %v3978 = vpack.c.b16 %v3094, %v3090
    %v3979 = vpack.c.b16 %v3095, %v3091
    %v3980 = vpack.c.b16 %v3096, %v3092
    %v3981 = vpack.c.b16 %v3101, %v3097
    %v3982 = vpack.c.b16 %v3102, %v3098
    %v3983 = vpack.c.b16 %v3103, %v3099
    %v3984 = vpack.c.b16 %v3104, %v3100
    %v3985 = vpack.c.b16 %v3109, %v3105
    %v3986 = vpack.c.b16 %v3110, %v3106
    %v3987 = vpack.c.b16 %v3111, %v3107
    %v3988 = vpack.c.b16 %v3112, %v3108
    %v3989 = vpack.c.b16 %v3117, %v3113
    %v3990 = vpack.c.b16 %v3118, %v3114
    %v3991 = vpack.c.b16 %v3119, %v3115
    %v3992 = vpack.c.b16 %v3120, %v3116
    %v3993 = vpack.c.b16 %v3125, %v3121
    %v3994 = vpack.c.b16 %v3126, %v3122
    %v3995 = vpack.c.b16 %v3127, %v3123
    %v3996 = vpack.c.b16 %v3128, %v3124
    %v3997 = vpack.c.b16 %v3133, %v3129
    %v3998 = vpack.c.b16 %v3134, %v3130
    %v3999 = vpack.c.b16 %v3135, %v3131
    %v4000 = vpack.c.b16 %v3136, %v3132
    %v4001 = vpack.c.b16 %v3141, %v3137
    %v4002 = vpack.c.b16 %v3142, %v3138
    %v4003 = vpack.c.b16 %v3143, %v3139
    %v4004 = vpack.c.b16 %v3144, %v3140
    %v4005 = vpack.c.b16 %v3149, %v3145
    %v4006 = vpack.c.b16 %v3150, %v3146
    %v4007 = vpack.c.b16 %v3151, %v3147
    %v4008 = vpack.c.b16 %v3152, %v3148
    %v4009 = vpack.c.b16 %v3157, %v3153
    %v4010 = vpack.c.b16 %v3158, %v3154
    %v4011 = vpack.c.b16 %v3159, %v3155
    %v4012 = vpack.c.b16 %v3160, %v3156
    %v4013 = vpack.c.b16 %v3165, %v3161
    %v4014 = vpack.c.b16 %v3166, %v3162
    %v4015 = vpack.c.b16 %v3167, %v3163
    %v4016 = vpack.c.b16 %v3168, %v3164
    %v4017 = vpack.c.b16 %v3173, %v3169
    %v4018 = vpack.c.b16 %v3174, %v3170
    %v4019 = vpack.c.b16 %v3175, %v3171
    %v4020 = vpack.c.b16 %v3176, %v3172
    %v4021 = vpack.c.b16 %v3181, %v3177
    %v4022 = vpack.c.b16 %v3182, %v3178
    %v4023 = vpack.c.b16 %v3183, %v3179
    %v4024 = vpack.c.b16 %v3184, %v3180
    %v4025 = vpack.c.b16 %v3189, %v3185
    %v4026 = vpack.c.b16 %v3190, %v3186
    %v4027 = vpack.c.b16 %v3191, %v3187
    %v4028 = vpack.c.b16 %v3192, %v3188
    %v4029 = vpack.c.b16 %v3197, %v3193
    %v4030 = vpack.c.b16 %v3198, %v3194
    %v4031 = vpack.c.b16 %v3199, %v3195
    %v4032 = vpack.c.b16 %v3200, %v3196
    %v4033 = vpack.c.b16 %v3205, %v3201
    %v4034 = vpack.c.b16 %v3206, %v3202
    %v4035 = vpack.c.b16 %v3207, %v3203
    %v4036 = vpack.c.b16 %v3208, %v3204
    %v4037 = vpack.c.b16 %v3213, %v3209
    %v4038 = vpack.c.b16 %v3214, %v3210
    %v4039 = vpack.c.b16 %v3215, %v3211
    %v4040 = vpack.c.b16 %v3216, %v3212
    %v4041 = vpack.c.b16 %v3221, %v3217
    %v4042 = vpack.c.b16 %v3222, %v3218
    %v4043 = vpack.c.b16 %v3223, %v3219
    %v4044 = vpack.c.b16 %v3224, %v3220
    %v4045 = vpack.c.b16 %v3229, %v3225
    %v4046 = vpack.c.b16 %v3230, %v3226
    %v4047 = vpack.c.b16 %v3231, %v3227
    %v4048 = vpack.c.b16 %v3232, %v3228
    %v4049 = vpack.c.b16 %v3237, %v3233
    %v4050 = vpack.c.b16 %v3238, %v3234
    %v4051 = vpack.c.b16 %v3239, %v3235
    %v4052 = vpack.c.b16 %v3240, %v3236
    %v4053 = vpack.c.b16 %v3245, %v3241
    %v4054 = vpack.c.b16 %v3246, %v3242
    %v4055 = vpack.c.b16 %v3247, %v3243
    %v4056 = vpack.c.b16 %v3248, %v3244
    %v4057 = vpack.c.b16 %v3253, %v3249
    %v4058 = vpack.c.b16 %v3254, %v3250
    %v4059 = vpack.c.b16 %v3255, %v3251
    %v4060 = vpack.c.b16 %v3256, %v3252
    %v4061 = vpack.c.b16 %v3261, %v3257
    %v4062 = vpack.c.b16 %v3262, %v3258
    %v4063 = vpack.c.b16 %v3263, %v3259
    %v4064 = vpack.c.b16 %v3264, %v3260
    %v4065 = vpack.c.b16 %v3269, %v3265
    %v4066 = vpack.c.b16 %v3270, %v3266
    %v4067 = vpack.c.b16 %v3271, %v3267
    %v4068 = vpack.c.b16 %v3272, %v3268
    %v4069 = vpack.c.b16 %v3277, %v3273
    %v4070 = vpack.c.b16 %v3278, %v3274
    %v4071 = vpack.c.b16 %v3279, %v3275
    %v4072 = vpack.c.b16 %v3280, %v3276
    %v4073 = vpack.c.b16 %v3285, %v3281
    %v4074 = vpack.c.b16 %v3286, %v3282
    %v4075 = vpack.c.b16 %v3287, %v3283
    %v4076 = vpack.c.b16 %v3288, %v3284
    %v4077 = vpack.c.b16 %v3293, %v3289
    %v4078 = vpack.c.b16 %v3294, %v3290
    %v4079 = vpack.c.b16 %v3295, %v3291
    %v4080 = vpack.c.b16 %v3296, %v3292
    %v4081 = vpack.c.b16 %v3301, %v3297
    %v4082 = vpack.c.b16 %v3302, %v3298
    %v4083 = vpack.c.b16 %v3303, %v3299
    %v4084 = vpack.c.b16 %v3304, %v3300
    %v4085 = vpack.c.b16 %v3309, %v3305
    %v4086 = vpack.c.b16 %v3310, %v3306
    %v4087 = vpack.c.b16 %v3311, %v3307
    %v4088 = vpack.c.b16 %v3312, %v3308
    %v4089 = vpack.c.b16 %v3317, %v3313
    %v4090 = vpack.c.b16 %v3318, %v3314
    %v4091 = vpack.c.b16 %v3319, %v3315
    %v4092 = vpack.c.b16 %v3320, %v3316
    %v4093 = vpack.c.b16 %v3325, %v3321
    %v4094 = vpack.c.b16 %v3326, %v3322
    %v4095 = vpack.c.b16 %v3327, %v3323
    %v4096 = vpack.c.b16 %v3328, %v3324
    %4865 = vmatprep.subr.bf16.mxu0 %v3358
    %4866 = vmatpush1.bf16.msra.mxu0 %v3357
    %4867 = vmatprep.subr.bf16.mxu0 %v3354
    %4868 = vmatpush1.bf16.msra.mxu0 %v3353
    %4869 = vmatprep.subr.bf16.mxu0 %v3350
    %4870 = vmatpush1.bf16.msra.mxu0 %v3349
    %4871 = vmatprep.subr.bf16.mxu0 %v3346
    %4872 = vmatpush1.bf16.msra.mxu0 %v3345
    %4873 = vmatprep.subr.bf16.mxu0 %v3342
    %4874 = vmatpush1.bf16.msra.mxu0 %v3341
    %4875 = vmatprep.subr.bf16.mxu0 %v3338
    %4876 = vmatpush1.bf16.msra.mxu0 %v3337
    %4877 = vmatprep.subr.bf16.mxu0 %v3334
    %4878 = vmatpush1.bf16.msra.mxu0 %v3333
    %4879 = vmatprep.subr.bf16.mxu0 %v3330
    %4880 = vmatpush1.bf16.msra.mxu0 %v3329
    %4881 = vmatprep.subr.bf16.mxu0 %v3390
    %4882 = vmatpush2.bf16.msra.mxu0 %v3389
    %4883 = vmatprep.subr.bf16.mxu0 %v3386
    %4884 = vmatpush2.bf16.msra.mxu0 %v3385
    %4885 = vmatprep.subr.bf16.mxu0 %v3382
    %4886 = vmatpush2.bf16.msra.mxu0 %v3381
    %4887 = vmatprep.subr.bf16.mxu0 %v3378
    %4888 = vmatpush2.bf16.msra.mxu0 %v3377
    %4889 = vmatprep.subr.bf16.mxu0 %v3374
    %4890 = vmatpush2.bf16.msra.mxu0 %v3373
    %4891 = vmatprep.subr.bf16.mxu0 %v3370
    %4892 = vmatpush2.bf16.msra.mxu0 %v3369
    %4893 = vmatprep.subr.bf16.mxu0 %v3366
    %4894 = vmatpush2.bf16.msra.mxu0 %v3365
    %4895 = vmatprep.subr.bf16.mxu0 %v3362
    %4896 = vmatpush2.bf16.msra.mxu0 %v3361
    %4897 = vmatprep.mubr.bf16.mxu0 %v978
    %4898 = vmatmul.mubr.bf16.gmra.mxu0 %v977
    %v4899 = vpop.f32.mrf.mxu0
    %v4900 = vadd.f32 %v924, %v4899
    %v4901 = vpop.f32.mrf.mxu0
    %v4902 = vadd.f32 %v928, %v4901
    %v4903 = vpop.f32.mrf.mxu0
    %v4904 = vpop.f32.mrf.mxu0
    %4905 = vdwg.mxu0
    %4906 = vmatprep.subr.bf16.mxu0 %v3422
    %4907 = vmatpush1.bf16.msra.mxu0 %v3421
    %4908 = vmatprep.subr.bf16.mxu0 %v3418
    %4909 = vmatpush1.bf16.msra.mxu0 %v3417
    %4910 = vmatprep.subr.bf16.mxu0 %v3414
    %4911 = vmatpush1.bf16.msra.mxu0 %v3413
    %4912 = vmatprep.subr.bf16.mxu0 %v3410
    %4913 = vmatpush1.bf16.msra.mxu0 %v3409
    %4914 = vmatprep.subr.bf16.mxu0 %v3406
    %4915 = vmatpush1.bf16.msra.mxu0 %v3405
    %4916 = vmatprep.subr.bf16.mxu0 %v3402
    %4917 = vmatpush1.bf16.msra.mxu0 %v3401
    %4918 = vmatprep.subr.bf16.mxu0 %v3398
    %4919 = vmatpush1.bf16.msra.mxu0 %v3397
    %4920 = vmatprep.subr.bf16.mxu0 %v3394
    %4921 = vmatpush1.bf16.msra.mxu0 %v3393
    %4922 = vmatprep.subr.bf16.mxu0 %v3454
    %4923 = vmatpush2.bf16.msra.mxu0 %v3453
    %4924 = vmatprep.subr.bf16.mxu0 %v3450
    %4925 = vmatpush2.bf16.msra.mxu0 %v3449
    %4926 = vmatprep.subr.bf16.mxu0 %v3446
    %4927 = vmatpush2.bf16.msra.mxu0 %v3445
    %4928 = vmatprep.subr.bf16.mxu0 %v3442
    %4929 = vmatpush2.bf16.msra.mxu0 %v3441
    %4930 = vmatprep.subr.bf16.mxu0 %v3438
    %4931 = vmatpush2.bf16.msra.mxu0 %v3437
    %4932 = vmatprep.subr.bf16.mxu0 %v3434
    %4933 = vmatpush2.bf16.msra.mxu0 %v3433
    %4934 = vmatprep.subr.bf16.mxu0 %v3430
    %4935 = vmatpush2.bf16.msra.mxu0 %v3429
    %4936 = vmatprep.subr.bf16.mxu0 %v3426
    %4937 = vmatpush2.bf16.msra.mxu0 %v3425
    %4938 = vmatprep.mubr.bf16.mxu0 %v980
    %4939 = vmatmul.mubr.bf16.gmra.mxu0 %v979
    %v4940 = vpop.f32.mrf.mxu0
    %v4941 = vadd.f32 %v4900, %v4940
    %v4942 = vpop.f32.mrf.mxu0
    %v4943 = vadd.f32 %v4902, %v4942
    %v4944 = vpop.f32.mrf.mxu0
    %v4945 = vpop.f32.mrf.mxu0
    %4946 = vdwg.mxu0
    %4947 = vmatprep.subr.bf16.mxu0 %v3486
    %4948 = vmatpush1.bf16.msra.mxu0 %v3485
    %4949 = vmatprep.subr.bf16.mxu0 %v3482
    %4950 = vmatpush1.bf16.msra.mxu0 %v3481
    %4951 = vmatprep.subr.bf16.mxu0 %v3478
    %4952 = vmatpush1.bf16.msra.mxu0 %v3477
    %4953 = vmatprep.subr.bf16.mxu0 %v3474
    %4954 = vmatpush1.bf16.msra.mxu0 %v3473
    %4955 = vmatprep.subr.bf16.mxu0 %v3470
    %4956 = vmatpush1.bf16.msra.mxu0 %v3469
    %4957 = vmatprep.subr.bf16.mxu0 %v3466
    %4958 = vmatpush1.bf16.msra.mxu0 %v3465
    %4959 = vmatprep.subr.bf16.mxu0 %v3462
    %4960 = vmatpush1.bf16.msra.mxu0 %v3461
    %4961 = vmatprep.subr.bf16.mxu0 %v3458
    %4962 = vmatpush1.bf16.msra.mxu0 %v3457
    %4963 = vmatprep.subr.bf16.mxu0 %v3518
    %4964 = vmatpush2.bf16.msra.mxu0 %v3517
    %4965 = vmatprep.subr.bf16.mxu0 %v3514
    %4966 = vmatpush2.bf16.msra.mxu0 %v3513
    %4967 = vmatprep.subr.bf16.mxu0 %v3510
    %4968 = vmatpush2.bf16.msra.mxu0 %v3509
    %4969 = vmatprep.subr.bf16.mxu0 %v3506
    %4970 = vmatpush2.bf16.msra.mxu0 %v3505
    %4971 = vmatprep.subr.bf16.mxu0 %v3502
    %4972 = vmatpush2.bf16.msra.mxu0 %v3501
    %4973 = vmatprep.subr.bf16.mxu0 %v3498
    %4974 = vmatpush2.bf16.msra.mxu0 %v3497
    %4975 = vmatprep.subr.bf16.mxu0 %v3494
    %4976 = vmatpush2.bf16.msra.mxu0 %v3493
    %4977 = vmatprep.subr.bf16.mxu0 %v3490
    %4978 = vmatpush2.bf16.msra.mxu0 %v3489
    %4979 = vmatprep.mubr.bf16.mxu0 %v982
    %4980 = vmatmul.mubr.bf16.gmra.mxu0 %v981
    %v4981 = vpop.f32.mrf.mxu0
    %v4982 = vadd.f32 %v4941, %v4981
    %v4983 = vpop.f32.mrf.mxu0
    %v4984 = vadd.f32 %v4943, %v4983
    %v4985 = vpop.f32.mrf.mxu0
    %v4986 = vpop.f32.mrf.mxu0
    %4987 = vdwg.mxu0
    %4988 = vmatprep.subr.bf16.mxu0 %v3550
    %4989 = vmatpush1.bf16.msra.mxu0 %v3549
    %4990 = vmatprep.subr.bf16.mxu0 %v3546
    %4991 = vmatpush1.bf16.msra.mxu0 %v3545
    %4992 = vmatprep.subr.bf16.mxu0 %v3542
    %4993 = vmatpush1.bf16.msra.mxu0 %v3541
    %4994 = vmatprep.subr.bf16.mxu0 %v3538
    %4995 = vmatpush1.bf16.msra.mxu0 %v3537
    %4996 = vmatprep.subr.bf16.mxu0 %v3534
    %4997 = vmatpush1.bf16.msra.mxu0 %v3533
    %4998 = vmatprep.subr.bf16.mxu0 %v3530
    %4999 = vmatpush1.bf16.msra.mxu0 %v3529
    %5000 = vmatprep.subr.bf16.mxu0 %v3526
    %5001 = vmatpush1.bf16.msra.mxu0 %v3525
    %5002 = vmatprep.subr.bf16.mxu0 %v3522
    %5003 = vmatpush1.bf16.msra.mxu0 %v3521
    %5004 = vmatprep.subr.bf16.mxu0 %v3582
    %5005 = vmatpush2.bf16.msra.mxu0 %v3581
    %5006 = vmatprep.subr.bf16.mxu0 %v3578
    %5007 = vmatpush2.bf16.msra.mxu0 %v3577
    %5008 = vmatprep.subr.bf16.mxu0 %v3574
    %5009 = vmatpush2.bf16.msra.mxu0 %v3573
    %5010 = vmatprep.subr.bf16.mxu0 %v3570
    %5011 = vmatpush2.bf16.msra.mxu0 %v3569
    %5012 = vmatprep.subr.bf16.mxu0 %v3566
    %5013 = vmatpush2.bf16.msra.mxu0 %v3565
    %5014 = vmatprep.subr.bf16.mxu0 %v3562
    %5015 = vmatpush2.bf16.msra.mxu0 %v3561
    %5016 = vmatprep.subr.bf16.mxu0 %v3558
    %5017 = vmatpush2.bf16.msra.mxu0 %v3557
    %5018 = vmatprep.subr.bf16.mxu0 %v3554
    %5019 = vmatpush2.bf16.msra.mxu0 %v3553
    %5020 = vmatprep.mubr.bf16.mxu0 %v984
    %5021 = vmatmul.mubr.bf16.gmra.mxu0 %v983
    %v5022 = vpop.f32.mrf.mxu0
    %v5023 = vadd.f32 %v4982, %v5022
    %v5024 = vpop.f32.mrf.mxu0
    %v5025 = vadd.f32 %v4984, %v5024
    %v5026 = vpop.f32.mrf.mxu0
    %v5027 = vpop.f32.mrf.mxu0
    %5028 = vdwg.mxu0
    %5029 = vmatprep.subr.bf16.mxu0 %v3614
    %5030 = vmatpush1.bf16.msra.mxu0 %v3613
    %5031 = vmatprep.subr.bf16.mxu0 %v3610
    %5032 = vmatpush1.bf16.msra.mxu0 %v3609
    %5033 = vmatprep.subr.bf16.mxu0 %v3606
    %5034 = vmatpush1.bf16.msra.mxu0 %v3605
    %5035 = vmatprep.subr.bf16.mxu0 %v3602
    %5036 = vmatpush1.bf16.msra.mxu0 %v3601
    %5037 = vmatprep.subr.bf16.mxu0 %v3598
    %5038 = vmatpush1.bf16.msra.mxu0 %v3597
    %5039 = vmatprep.subr.bf16.mxu0 %v3594
    %5040 = vmatpush1.bf16.msra.mxu0 %v3593
    %5041 = vmatprep.subr.bf16.mxu0 %v3590
    %5042 = vmatpush1.bf16.msra.mxu0 %v3589
    %5043 = vmatprep.subr.bf16.mxu0 %v3586
    %5044 = vmatpush1.bf16.msra.mxu0 %v3585
    %5045 = vmatprep.subr.bf16.mxu0 %v3646
    %5046 = vmatpush2.bf16.msra.mxu0 %v3645
    %5047 = vmatprep.subr.bf16.mxu0 %v3642
    %5048 = vmatpush2.bf16.msra.mxu0 %v3641
    %5049 = vmatprep.subr.bf16.mxu0 %v3638
    %5050 = vmatpush2.bf16.msra.mxu0 %v3637
    %5051 = vmatprep.subr.bf16.mxu0 %v3634
    %5052 = vmatpush2.bf16.msra.mxu0 %v3633
    %5053 = vmatprep.subr.bf16.mxu0 %v3630
    %5054 = vmatpush2.bf16.msra.mxu0 %v3629
    %5055 = vmatprep.subr.bf16.mxu0 %v3626
    %5056 = vmatpush2.bf16.msra.mxu0 %v3625
    %5057 = vmatprep.subr.bf16.mxu0 %v3622
    %5058 = vmatpush2.bf16.msra.mxu0 %v3621
    %5059 = vmatprep.subr.bf16.mxu0 %v3618
    %5060 = vmatpush2.bf16.msra.mxu0 %v3617
    %5061 = vmatprep.mubr.bf16.mxu0 %v986
    %5062 = vmatmul.mubr.bf16.gmra.mxu0 %v985
    %v5063 = vpop.f32.mrf.mxu0
    %v5064 = vadd.f32 %v5023, %v5063
    %v5065 = vpop.f32.mrf.mxu0
    %v5066 = vadd.f32 %v5025, %v5065
    %v5067 = vpop.f32.mrf.mxu0
    %v5068 = vpop.f32.mrf.mxu0
    %5069 = vdwg.mxu0
    %5070 = vmatprep.subr.bf16.mxu0 %v3678
    %5071 = vmatpush1.bf16.msra.mxu0 %v3677
    %5072 = vmatprep.subr.bf16.mxu0 %v3674
    %5073 = vmatpush1.bf16.msra.mxu0 %v3673
    %5074 = vmatprep.subr.bf16.mxu0 %v3670
    %5075 = vmatpush1.bf16.msra.mxu0 %v3669
    %5076 = vmatprep.subr.bf16.mxu0 %v3666
    %5077 = vmatpush1.bf16.msra.mxu0 %v3665
    %5078 = vmatprep.subr.bf16.mxu0 %v3662
    %5079 = vmatpush1.bf16.msra.mxu0 %v3661
    %5080 = vmatprep.subr.bf16.mxu0 %v3658
    %5081 = vmatpush1.bf16.msra.mxu0 %v3657
    %5082 = vmatprep.subr.bf16.mxu0 %v3654
    %5083 = vmatpush1.bf16.msra.mxu0 %v3653
    %5084 = vmatprep.subr.bf16.mxu0 %v3650
    %5085 = vmatpush1.bf16.msra.mxu0 %v3649
    %5086 = vmatprep.subr.bf16.mxu0 %v3710
    %5087 = vmatpush2.bf16.msra.mxu0 %v3709
    %5088 = vmatprep.subr.bf16.mxu0 %v3706
    %5089 = vmatpush2.bf16.msra.mxu0 %v3705
    %5090 = vmatprep.subr.bf16.mxu0 %v3702
    %5091 = vmatpush2.bf16.msra.mxu0 %v3701
    %5092 = vmatprep.subr.bf16.mxu0 %v3698
    %5093 = vmatpush2.bf16.msra.mxu0 %v3697
    %5094 = vmatprep.subr.bf16.mxu0 %v3694
    %5095 = vmatpush2.bf16.msra.mxu0 %v3693
    %5096 = vmatprep.subr.bf16.mxu0 %v3690
    %5097 = vmatpush2.bf16.msra.mxu0 %v3689
    %5098 = vmatprep.subr.bf16.mxu0 %v3686
    %5099 = vmatpush2.bf16.msra.mxu0 %v3685
    %5100 = vmatprep.subr.bf16.mxu0 %v3682
    %5101 = vmatpush2.bf16.msra.mxu0 %v3681
    %5102 = vmatprep.mubr.bf16.mxu0 %v988
    %5103 = vmatmul.mubr.bf16.gmra.mxu0 %v987
    %v5104 = vpop.f32.mrf.mxu0
    %v5105 = vadd.f32 %v5064, %v5104
    %v5106 = vpop.f32.mrf.mxu0
    %v5107 = vadd.f32 %v5066, %v5106
    %v5108 = vpop.f32.mrf.mxu0
    %v5109 = vpop.f32.mrf.mxu0
    %5110 = vdwg.mxu0
    %5111 = vmatprep.subr.bf16.mxu0 %v3742
    %5112 = vmatpush1.bf16.msra.mxu0 %v3741
    %5113 = vmatprep.subr.bf16.mxu0 %v3738
    %5114 = vmatpush1.bf16.msra.mxu0 %v3737
    %5115 = vmatprep.subr.bf16.mxu0 %v3734
    %5116 = vmatpush1.bf16.msra.mxu0 %v3733
    %5117 = vmatprep.subr.bf16.mxu0 %v3730
    %5118 = vmatpush1.bf16.msra.mxu0 %v3729
    %5119 = vmatprep.subr.bf16.mxu0 %v3726
    %5120 = vmatpush1.bf16.msra.mxu0 %v3725
    %5121 = vmatprep.subr.bf16.mxu0 %v3722
    %5122 = vmatpush1.bf16.msra.mxu0 %v3721
    %5123 = vmatprep.subr.bf16.mxu0 %v3718
    %5124 = vmatpush1.bf16.msra.mxu0 %v3717
    %5125 = vmatprep.subr.bf16.mxu0 %v3714
    %5126 = vmatpush1.bf16.msra.mxu0 %v3713
    %5127 = vmatprep.subr.bf16.mxu0 %v3774
    %5128 = vmatpush2.bf16.msra.mxu0 %v3773
    %5129 = vmatprep.subr.bf16.mxu0 %v3770
    %5130 = vmatpush2.bf16.msra.mxu0 %v3769
    %5131 = vmatprep.subr.bf16.mxu0 %v3766
    %5132 = vmatpush2.bf16.msra.mxu0 %v3765
    %5133 = vmatprep.subr.bf16.mxu0 %v3762
    %5134 = vmatpush2.bf16.msra.mxu0 %v3761
    %5135 = vmatprep.subr.bf16.mxu0 %v3758
    %5136 = vmatpush2.bf16.msra.mxu0 %v3757
    %5137 = vmatprep.subr.bf16.mxu0 %v3754
    %5138 = vmatpush2.bf16.msra.mxu0 %v3753
    %5139 = vmatprep.subr.bf16.mxu0 %v3750
    %5140 = vmatpush2.bf16.msra.mxu0 %v3749
    %5141 = vmatprep.subr.bf16.mxu0 %v3746
    %5142 = vmatpush2.bf16.msra.mxu0 %v3745
    %5143 = vmatprep.mubr.bf16.mxu0 %v990
    %5144 = vmatmul.mubr.bf16.gmra.mxu0 %v989
    %v5145 = vpop.f32.mrf.mxu0
    %v5146 = vadd.f32 %v5105, %v5145
    %v5147 = vpop.f32.mrf.mxu0
    %v5148 = vadd.f32 %v5107, %v5147
    %v5149 = vpop.f32.mrf.mxu0
    %v5150 = vpop.f32.mrf.mxu0
    %5151 = vdwg.mxu0
    %5152 = vmatprep.subr.bf16.mxu0 %v3806
    %5153 = vmatpush1.bf16.msra.mxu0 %v3805
    %5154 = vmatprep.subr.bf16.mxu0 %v3802
    %5155 = vmatpush1.bf16.msra.mxu0 %v3801
    %5156 = vmatprep.subr.bf16.mxu0 %v3798
    %5157 = vmatpush1.bf16.msra.mxu0 %v3797
    %5158 = vmatprep.subr.bf16.mxu0 %v3794
    %5159 = vmatpush1.bf16.msra.mxu0 %v3793
    %5160 = vmatprep.subr.bf16.mxu0 %v3790
    %5161 = vmatpush1.bf16.msra.mxu0 %v3789
    %5162 = vmatprep.subr.bf16.mxu0 %v3786
    %5163 = vmatpush1.bf16.msra.mxu0 %v3785
    %5164 = vmatprep.subr.bf16.mxu0 %v3782
    %5165 = vmatpush1.bf16.msra.mxu0 %v3781
    %5166 = vmatprep.subr.bf16.mxu0 %v3778
    %5167 = vmatpush1.bf16.msra.mxu0 %v3777
    %5168 = vmatprep.subr.bf16.mxu0 %v3838
    %5169 = vmatpush2.bf16.msra.mxu0 %v3837
    %5170 = vmatprep.subr.bf16.mxu0 %v3834
    %5171 = vmatpush2.bf16.msra.mxu0 %v3833
    %5172 = vmatprep.subr.bf16.mxu0 %v3830
    %5173 = vmatpush2.bf16.msra.mxu0 %v3829
    %5174 = vmatprep.subr.bf16.mxu0 %v3826
    %5175 = vmatpush2.bf16.msra.mxu0 %v3825
    %5176 = vmatprep.subr.bf16.mxu0 %v3822
    %5177 = vmatpush2.bf16.msra.mxu0 %v3821
    %5178 = vmatprep.subr.bf16.mxu0 %v3818
    %5179 = vmatpush2.bf16.msra.mxu0 %v3817
    %5180 = vmatprep.subr.bf16.mxu0 %v3814
    %5181 = vmatpush2.bf16.msra.mxu0 %v3813
    %5182 = vmatprep.subr.bf16.mxu0 %v3810
    %5183 = vmatpush2.bf16.msra.mxu0 %v3809
    %5184 = vmatprep.mubr.bf16.mxu0 %v992
    %5185 = vmatmul.mubr.bf16.gmra.mxu0 %v991
    %v5186 = vpop.f32.mrf.mxu0
    %v5187 = vadd.f32 %v5146, %v5186
    %v5188 = vpop.f32.mrf.mxu0
    %v5189 = vadd.f32 %v5148, %v5188
    %v5190 = vpop.f32.mrf.mxu0
    %v5191 = vpop.f32.mrf.mxu0
    %5192 = vdwg.mxu0
    %5193 = vmatprep.subr.bf16.mxu0 %v3870
    %5194 = vmatpush1.bf16.msra.mxu0 %v3869
    %5195 = vmatprep.subr.bf16.mxu0 %v3866
    %5196 = vmatpush1.bf16.msra.mxu0 %v3865
    %5197 = vmatprep.subr.bf16.mxu0 %v3862
    %5198 = vmatpush1.bf16.msra.mxu0 %v3861
    %5199 = vmatprep.subr.bf16.mxu0 %v3858
    %5200 = vmatpush1.bf16.msra.mxu0 %v3857
    %5201 = vmatprep.subr.bf16.mxu0 %v3854
    %5202 = vmatpush1.bf16.msra.mxu0 %v3853
    %5203 = vmatprep.subr.bf16.mxu0 %v3850
    %5204 = vmatpush1.bf16.msra.mxu0 %v3849
    %5205 = vmatprep.subr.bf16.mxu0 %v3846
    %5206 = vmatpush1.bf16.msra.mxu0 %v3845
    %5207 = vmatprep.subr.bf16.mxu0 %v3842
    %5208 = vmatpush1.bf16.msra.mxu0 %v3841
    %5209 = vmatprep.subr.bf16.mxu0 %v3902
    %5210 = vmatpush2.bf16.msra.mxu0 %v3901
    %5211 = vmatprep.subr.bf16.mxu0 %v3898
    %5212 = vmatpush2.bf16.msra.mxu0 %v3897
    %5213 = vmatprep.subr.bf16.mxu0 %v3894
    %5214 = vmatpush2.bf16.msra.mxu0 %v3893
    %5215 = vmatprep.subr.bf16.mxu0 %v3890
    %5216 = vmatpush2.bf16.msra.mxu0 %v3889
    %5217 = vmatprep.subr.bf16.mxu0 %v3886
    %5218 = vmatpush2.bf16.msra.mxu0 %v3885
    %5219 = vmatprep.subr.bf16.mxu0 %v3882
    %5220 = vmatpush2.bf16.msra.mxu0 %v3881
    %5221 = vmatprep.subr.bf16.mxu0 %v3878
    %5222 = vmatpush2.bf16.msra.mxu0 %v3877
    %5223 = vmatprep.subr.bf16.mxu0 %v3874
    %5224 = vmatpush2.bf16.msra.mxu0 %v3873
    %5225 = vmatprep.mubr.bf16.mxu0 %v994
    %5226 = vmatmul.mubr.bf16.gmra.mxu0 %v993
    %v5227 = vpop.f32.mrf.mxu0
    %v5228 = vadd.f32 %v5187, %v5227
    %v5229 = vpop.f32.mrf.mxu0
    %v5230 = vadd.f32 %v5189, %v5229
    %v5231 = vpop.f32.mrf.mxu0
    %v5232 = vpop.f32.mrf.mxu0
    %5233 = vdwg.mxu0
    %5234 = vmatprep.subr.bf16.mxu0 %v3934
    %5235 = vmatpush1.bf16.msra.mxu0 %v3933
    %5236 = vmatprep.subr.bf16.mxu0 %v3930
    %5237 = vmatpush1.bf16.msra.mxu0 %v3929
    %5238 = vmatprep.subr.bf16.mxu0 %v3926
    %5239 = vmatpush1.bf16.msra.mxu0 %v3925
    %5240 = vmatprep.subr.bf16.mxu0 %v3922
    %5241 = vmatpush1.bf16.msra.mxu0 %v3921
    %5242 = vmatprep.subr.bf16.mxu0 %v3918
    %5243 = vmatpush1.bf16.msra.mxu0 %v3917
    %5244 = vmatprep.subr.bf16.mxu0 %v3914
    %5245 = vmatpush1.bf16.msra.mxu0 %v3913
    %5246 = vmatprep.subr.bf16.mxu0 %v3910
    %5247 = vmatpush1.bf16.msra.mxu0 %v3909
    %5248 = vmatprep.subr.bf16.mxu0 %v3906
    %5249 = vmatpush1.bf16.msra.mxu0 %v3905
    %5250 = vmatprep.subr.bf16.mxu0 %v3966
    %5251 = vmatpush2.bf16.msra.mxu0 %v3965
    %5252 = vmatprep.subr.bf16.mxu0 %v3962
    %5253 = vmatpush2.bf16.msra.mxu0 %v3961
    %5254 = vmatprep.subr.bf16.mxu0 %v3958
    %5255 = vmatpush2.bf16.msra.mxu0 %v3957
    %5256 = vmatprep.subr.bf16.mxu0 %v3954
    %5257 = vmatpush2.bf16.msra.mxu0 %v3953
    %5258 = vmatprep.subr.bf16.mxu0 %v3950
    %5259 = vmatpush2.bf16.msra.mxu0 %v3949
    %5260 = vmatprep.subr.bf16.mxu0 %v3946
    %5261 = vmatpush2.bf16.msra.mxu0 %v3945
    %5262 = vmatprep.subr.bf16.mxu0 %v3942
    %5263 = vmatpush2.bf16.msra.mxu0 %v3941
    %5264 = vmatprep.subr.bf16.mxu0 %v3938
    %5265 = vmatpush2.bf16.msra.mxu0 %v3937
    %5266 = vmatprep.mubr.bf16.mxu0 %v996
    %5267 = vmatmul.mubr.bf16.gmra.mxu0 %v995
    %v5268 = vpop.f32.mrf.mxu0
    %v5269 = vadd.f32 %v5228, %v5268
    %v5270 = vpop.f32.mrf.mxu0
    %v5271 = vadd.f32 %v5230, %v5270
    %v5272 = vpop.f32.mrf.mxu0
    %v5273 = vpop.f32.mrf.mxu0
    %5274 = vdwg.mxu0
    %5275 = vmatprep.subr.bf16.mxu0 %v3998
    %5276 = vmatpush1.bf16.msra.mxu0 %v3997
    %5277 = vmatprep.subr.bf16.mxu0 %v3994
    %5278 = vmatpush1.bf16.msra.mxu0 %v3993
    %5279 = vmatprep.subr.bf16.mxu0 %v3990
    %5280 = vmatpush1.bf16.msra.mxu0 %v3989
    %5281 = vmatprep.subr.bf16.mxu0 %v3986
    %5282 = vmatpush1.bf16.msra.mxu0 %v3985
    %5283 = vmatprep.subr.bf16.mxu0 %v3982
    %5284 = vmatpush1.bf16.msra.mxu0 %v3981
    %5285 = vmatprep.subr.bf16.mxu0 %v3978
    %5286 = vmatpush1.bf16.msra.mxu0 %v3977
    %5287 = vmatprep.subr.bf16.mxu0 %v3974
    %5288 = vmatpush1.bf16.msra.mxu0 %v3973
    %5289 = vmatprep.subr.bf16.mxu0 %v3970
    %5290 = vmatpush1.bf16.msra.mxu0 %v3969
    %5291 = vmatprep.subr.bf16.mxu0 %v4030
    %5292 = vmatpush2.bf16.msra.mxu0 %v4029
    %5293 = vmatprep.subr.bf16.mxu0 %v4026
    %5294 = vmatpush2.bf16.msra.mxu0 %v4025
    %5295 = vmatprep.subr.bf16.mxu0 %v4022
    %5296 = vmatpush2.bf16.msra.mxu0 %v4021
    %5297 = vmatprep.subr.bf16.mxu0 %v4018
    %5298 = vmatpush2.bf16.msra.mxu0 %v4017
    %5299 = vmatprep.subr.bf16.mxu0 %v4014
    %5300 = vmatpush2.bf16.msra.mxu0 %v4013
    %5301 = vmatprep.subr.bf16.mxu0 %v4010
    %5302 = vmatpush2.bf16.msra.mxu0 %v4009
    %5303 = vmatprep.subr.bf16.mxu0 %v4006
    %5304 = vmatpush2.bf16.msra.mxu0 %v4005
    %5305 = vmatprep.subr.bf16.mxu0 %v4002
    %5306 = vmatpush2.bf16.msra.mxu0 %v4001
    %5307 = vmatprep.mubr.bf16.mxu0 %v998
    %5308 = vmatmul.mubr.bf16.gmra.mxu0 %v997
    %v5309 = vpop.f32.mrf.mxu0
    %v5310 = vadd.f32 %v5269, %v5309
    %v5311 = vpop.f32.mrf.mxu0
    %v5312 = vadd.f32 %v5271, %v5311
    %v5313 = vpop.f32.mrf.mxu0
    %v5314 = vpop.f32.mrf.mxu0
    %5315 = vdwg.mxu0
    %5316 = vmatprep.subr.bf16.mxu0 %v4062
    %5317 = vmatpush1.bf16.msra.mxu0 %v4061
    %5318 = vmatprep.subr.bf16.mxu0 %v4058
    %5319 = vmatpush1.bf16.msra.mxu0 %v4057
    %5320 = vmatprep.subr.bf16.mxu0 %v4054
    %5321 = vmatpush1.bf16.msra.mxu0 %v4053
    %5322 = vmatprep.subr.bf16.mxu0 %v4050
    %5323 = vmatpush1.bf16.msra.mxu0 %v4049
    %5324 = vmatprep.subr.bf16.mxu0 %v4046
    %5325 = vmatpush1.bf16.msra.mxu0 %v4045
    %5326 = vmatprep.subr.bf16.mxu0 %v4042
    %5327 = vmatpush1.bf16.msra.mxu0 %v4041
    %5328 = vmatprep.subr.bf16.mxu0 %v4038
    %5329 = vmatpush1.bf16.msra.mxu0 %v4037
    %5330 = vmatprep.subr.bf16.mxu0 %v4034
    %5331 = vmatpush1.bf16.msra.mxu0 %v4033
    %5332 = vmatprep.subr.bf16.mxu0 %v4094
    %5333 = vmatpush2.bf16.msra.mxu0 %v4093
    %5334 = vmatprep.subr.bf16.mxu0 %v4090
    %5335 = vmatpush2.bf16.msra.mxu0 %v4089
    %5336 = vmatprep.subr.bf16.mxu0 %v4086
    %5337 = vmatpush2.bf16.msra.mxu0 %v4085
    %5338 = vmatprep.subr.bf16.mxu0 %v4082
    %5339 = vmatpush2.bf16.msra.mxu0 %v4081
    %5340 = vmatprep.subr.bf16.mxu0 %v4078
    %5341 = vmatpush2.bf16.msra.mxu0 %v4077
    %5342 = vmatprep.subr.bf16.mxu0 %v4074
    %5343 = vmatpush2.bf16.msra.mxu0 %v4073
    %5344 = vmatprep.subr.bf16.mxu0 %v4070
    %5345 = vmatpush2.bf16.msra.mxu0 %v4069
    %5346 = vmatprep.subr.bf16.mxu0 %v4066
    %5347 = vmatpush2.bf16.msra.mxu0 %v4065
    %5348 = vmatprep.mubr.bf16.mxu0 %v1000
    %5349 = vmatmul.mubr.bf16.gmra.mxu0 %v999
    %v5350 = vpop.f32.mrf.mxu0
    %v5351 = vadd.f32 %v5310, %v5350
    %v5352 = vpop.f32.mrf.mxu0
    %v5353 = vadd.f32 %v5312, %v5352
    %v5354 = vpop.f32.mrf.mxu0
    %v5355 = vpop.f32.mrf.mxu0
    %5356 = vdwg.mxu0
    %5357 = vmatprep.subr.bf16.mxu0 %v3360
    %5358 = vmatpush1.bf16.msra.mxu0 %v3359
    %5359 = vmatprep.subr.bf16.mxu0 %v3356
    %5360 = vmatpush1.bf16.msra.mxu0 %v3355
    %5361 = vmatprep.subr.bf16.mxu0 %v3352
    %5362 = vmatpush1.bf16.msra.mxu0 %v3351
    %5363 = vmatprep.subr.bf16.mxu0 %v3348
    %5364 = vmatpush1.bf16.msra.mxu0 %v3347
    %5365 = vmatprep.subr.bf16.mxu0 %v3344
    %5366 = vmatpush1.bf16.msra.mxu0 %v3343
    %5367 = vmatprep.subr.bf16.mxu0 %v3340
    %5368 = vmatpush1.bf16.msra.mxu0 %v3339
    %5369 = vmatprep.subr.bf16.mxu0 %v3336
    %5370 = vmatpush1.bf16.msra.mxu0 %v3335
    %5371 = vmatprep.subr.bf16.mxu0 %v3332
    %5372 = vmatpush1.bf16.msra.mxu0 %v3331
    %5373 = vmatprep.subr.bf16.mxu0 %v3392
    %5374 = vmatpush2.bf16.msra.mxu0 %v3391
    %5375 = vmatprep.subr.bf16.mxu0 %v3388
    %5376 = vmatpush2.bf16.msra.mxu0 %v3387
    %5377 = vmatprep.subr.bf16.mxu0 %v3384
    %5378 = vmatpush2.bf16.msra.mxu0 %v3383
    %5379 = vmatprep.subr.bf16.mxu0 %v3380
    %5380 = vmatpush2.bf16.msra.mxu0 %v3379
    %5381 = vmatprep.subr.bf16.mxu0 %v3376
    %5382 = vmatpush2.bf16.msra.mxu0 %v3375
    %5383 = vmatprep.subr.bf16.mxu0 %v3372
    %5384 = vmatpush2.bf16.msra.mxu0 %v3371
    %5385 = vmatprep.subr.bf16.mxu0 %v3368
    %5386 = vmatpush2.bf16.msra.mxu0 %v3367
    %5387 = vmatprep.subr.bf16.mxu0 %v3364
    %5388 = vmatpush2.bf16.msra.mxu0 %v3363
    %5389 = vmatprep.mubr.bf16.mxu0 %v978
    %5390 = vmatmul.mubr.bf16.gmra.mxu0 %v977
    %v5391 = vpop.f32.mrf.mxu0
    %v5392 = vadd.f32 %v932, %v5391
    %v5393 = vpop.f32.mrf.mxu0
    %v5394 = vadd.f32 %v936, %v5393
    %v5395 = vpop.f32.mrf.mxu0
    %v5396 = vpop.f32.mrf.mxu0
    %5397 = vdwg.mxu0
    %5398 = vmatprep.subr.bf16.mxu0 %v3424
    %5399 = vmatpush1.bf16.msra.mxu0 %v3423
    %5400 = vmatprep.subr.bf16.mxu0 %v3420
    %5401 = vmatpush1.bf16.msra.mxu0 %v3419
    %5402 = vmatprep.subr.bf16.mxu0 %v3416
    %5403 = vmatpush1.bf16.msra.mxu0 %v3415
    %5404 = vmatprep.subr.bf16.mxu0 %v3412
    %5405 = vmatpush1.bf16.msra.mxu0 %v3411
    %5406 = vmatprep.subr.bf16.mxu0 %v3408
    %5407 = vmatpush1.bf16.msra.mxu0 %v3407
    %5408 = vmatprep.subr.bf16.mxu0 %v3404
    %5409 = vmatpush1.bf16.msra.mxu0 %v3403
    %5410 = vmatprep.subr.bf16.mxu0 %v3400
    %5411 = vmatpush1.bf16.msra.mxu0 %v3399
    %5412 = vmatprep.subr.bf16.mxu0 %v3396
    %5413 = vmatpush1.bf16.msra.mxu0 %v3395
    %5414 = vmatprep.subr.bf16.mxu0 %v3456
    %5415 = vmatpush2.bf16.msra.mxu0 %v3455
    %5416 = vmatprep.subr.bf16.mxu0 %v3452
    %5417 = vmatpush2.bf16.msra.mxu0 %v3451
    %5418 = vmatprep.subr.bf16.mxu0 %v3448
    %5419 = vmatpush2.bf16.msra.mxu0 %v3447
    %5420 = vmatprep.subr.bf16.mxu0 %v3444
    %5421 = vmatpush2.bf16.msra.mxu0 %v3443
    %5422 = vmatprep.subr.bf16.mxu0 %v3440
    %5423 = vmatpush2.bf16.msra.mxu0 %v3439
    %5424 = vmatprep.subr.bf16.mxu0 %v3436
    %5425 = vmatpush2.bf16.msra.mxu0 %v3435
    %5426 = vmatprep.subr.bf16.mxu0 %v3432
    %5427 = vmatpush2.bf16.msra.mxu0 %v3431
    %5428 = vmatprep.subr.bf16.mxu0 %v3428
    %5429 = vmatpush2.bf16.msra.mxu0 %v3427
    %5430 = vmatprep.mubr.bf16.mxu0 %v980
    %5431 = vmatmul.mubr.bf16.gmra.mxu0 %v979
    %v5432 = vpop.f32.mrf.mxu0
    %v5433 = vadd.f32 %v5392, %v5432
    %v5434 = vpop.f32.mrf.mxu0
    %v5435 = vadd.f32 %v5394, %v5434
    %v5436 = vpop.f32.mrf.mxu0
    %v5437 = vpop.f32.mrf.mxu0
    %5438 = vdwg.mxu0
    %5439 = vmatprep.subr.bf16.mxu0 %v3488
    %5440 = vmatpush1.bf16.msra.mxu0 %v3487
    %5441 = vmatprep.subr.bf16.mxu0 %v3484
    %5442 = vmatpush1.bf16.msra.mxu0 %v3483
    %5443 = vmatprep.subr.bf16.mxu0 %v3480
    %5444 = vmatpush1.bf16.msra.mxu0 %v3479
    %5445 = vmatprep.subr.bf16.mxu0 %v3476
    %5446 = vmatpush1.bf16.msra.mxu0 %v3475
    %5447 = vmatprep.subr.bf16.mxu0 %v3472
    %5448 = vmatpush1.bf16.msra.mxu0 %v3471
    %5449 = vmatprep.subr.bf16.mxu0 %v3468
    %5450 = vmatpush1.bf16.msra.mxu0 %v3467
    %5451 = vmatprep.subr.bf16.mxu0 %v3464
    %5452 = vmatpush1.bf16.msra.mxu0 %v3463
    %5453 = vmatprep.subr.bf16.mxu0 %v3460
    %5454 = vmatpush1.bf16.msra.mxu0 %v3459
    %5455 = vmatprep.subr.bf16.mxu0 %v3520
    %5456 = vmatpush2.bf16.msra.mxu0 %v3519
    %5457 = vmatprep.subr.bf16.mxu0 %v3516
    %5458 = vmatpush2.bf16.msra.mxu0 %v3515
    %5459 = vmatprep.subr.bf16.mxu0 %v3512
    %5460 = vmatpush2.bf16.msra.mxu0 %v3511
    %5461 = vmatprep.subr.bf16.mxu0 %v3508
    %5462 = vmatpush2.bf16.msra.mxu0 %v3507
    %5463 = vmatprep.subr.bf16.mxu0 %v3504
    %5464 = vmatpush2.bf16.msra.mxu0 %v3503
    %5465 = vmatprep.subr.bf16.mxu0 %v3500
    %5466 = vmatpush2.bf16.msra.mxu0 %v3499
    %5467 = vmatprep.subr.bf16.mxu0 %v3496
    %5468 = vmatpush2.bf16.msra.mxu0 %v3495
    %5469 = vmatprep.subr.bf16.mxu0 %v3492
    %5470 = vmatpush2.bf16.msra.mxu0 %v3491
    %5471 = vmatprep.mubr.bf16.mxu0 %v982
    %5472 = vmatmul.mubr.bf16.gmra.mxu0 %v981
    %v5473 = vpop.f32.mrf.mxu0
    %v5474 = vadd.f32 %v5433, %v5473
    %v5475 = vpop.f32.mrf.mxu0
    %v5476 = vadd.f32 %v5435, %v5475
    %v5477 = vpop.f32.mrf.mxu0
    %v5478 = vpop.f32.mrf.mxu0
    %5479 = vdwg.mxu0
    %5480 = vmatprep.subr.bf16.mxu0 %v3552
    %5481 = vmatpush1.bf16.msra.mxu0 %v3551
    %5482 = vmatprep.subr.bf16.mxu0 %v3548
    %5483 = vmatpush1.bf16.msra.mxu0 %v3547
    %5484 = vmatprep.subr.bf16.mxu0 %v3544
    %5485 = vmatpush1.bf16.msra.mxu0 %v3543
    %5486 = vmatprep.subr.bf16.mxu0 %v3540
    %5487 = vmatpush1.bf16.msra.mxu0 %v3539
    %5488 = vmatprep.subr.bf16.mxu0 %v3536
    %5489 = vmatpush1.bf16.msra.mxu0 %v3535
    %5490 = vmatprep.subr.bf16.mxu0 %v3532
    %5491 = vmatpush1.bf16.msra.mxu0 %v3531
    %5492 = vmatprep.subr.bf16.mxu0 %v3528
    %5493 = vmatpush1.bf16.msra.mxu0 %v3527
    %5494 = vmatprep.subr.bf16.mxu0 %v3524
    %5495 = vmatpush1.bf16.msra.mxu0 %v3523
    %5496 = vmatprep.subr.bf16.mxu0 %v3584
    %5497 = vmatpush2.bf16.msra.mxu0 %v3583
    %5498 = vmatprep.subr.bf16.mxu0 %v3580
    %5499 = vmatpush2.bf16.msra.mxu0 %v3579
    %5500 = vmatprep.subr.bf16.mxu0 %v3576
    %5501 = vmatpush2.bf16.msra.mxu0 %v3575
    %5502 = vmatprep.subr.bf16.mxu0 %v3572
    %5503 = vmatpush2.bf16.msra.mxu0 %v3571
    %5504 = vmatprep.subr.bf16.mxu0 %v3568
    %5505 = vmatpush2.bf16.msra.mxu0 %v3567
    %5506 = vmatprep.subr.bf16.mxu0 %v3564
    %5507 = vmatpush2.bf16.msra.mxu0 %v3563
    %5508 = vmatprep.subr.bf16.mxu0 %v3560
    %5509 = vmatpush2.bf16.msra.mxu0 %v3559
    %5510 = vmatprep.subr.bf16.mxu0 %v3556
    %5511 = vmatpush2.bf16.msra.mxu0 %v3555
    %5512 = vmatprep.mubr.bf16.mxu0 %v984
    %5513 = vmatmul.mubr.bf16.gmra.mxu0 %v983
    %v5514 = vpop.f32.mrf.mxu0
    %v5515 = vadd.f32 %v5474, %v5514
    %v5516 = vpop.f32.mrf.mxu0
    %v5517 = vadd.f32 %v5476, %v5516
    %v5518 = vpop.f32.mrf.mxu0
    %v5519 = vpop.f32.mrf.mxu0
    %5520 = vdwg.mxu0
    %5521 = vmatprep.subr.bf16.mxu0 %v3616
    %5522 = vmatpush1.bf16.msra.mxu0 %v3615
    %5523 = vmatprep.subr.bf16.mxu0 %v3612
    %5524 = vmatpush1.bf16.msra.mxu0 %v3611
    %5525 = vmatprep.subr.bf16.mxu0 %v3608
    %5526 = vmatpush1.bf16.msra.mxu0 %v3607
    %5527 = vmatprep.subr.bf16.mxu0 %v3604
    %5528 = vmatpush1.bf16.msra.mxu0 %v3603
    %5529 = vmatprep.subr.bf16.mxu0 %v3600
    %5530 = vmatpush1.bf16.msra.mxu0 %v3599
    %5531 = vmatprep.subr.bf16.mxu0 %v3596
    %5532 = vmatpush1.bf16.msra.mxu0 %v3595
    %5533 = vmatprep.subr.bf16.mxu0 %v3592
    %5534 = vmatpush1.bf16.msra.mxu0 %v3591
    %5535 = vmatprep.subr.bf16.mxu0 %v3588
    %5536 = vmatpush1.bf16.msra.mxu0 %v3587
    %5537 = vmatprep.subr.bf16.mxu0 %v3648
    %5538 = vmatpush2.bf16.msra.mxu0 %v3647
    %5539 = vmatprep.subr.bf16.mxu0 %v3644
    %5540 = vmatpush2.bf16.msra.mxu0 %v3643
    %5541 = vmatprep.subr.bf16.mxu0 %v3640
    %5542 = vmatpush2.bf16.msra.mxu0 %v3639
    %5543 = vmatprep.subr.bf16.mxu0 %v3636
    %5544 = vmatpush2.bf16.msra.mxu0 %v3635
    %5545 = vmatprep.subr.bf16.mxu0 %v3632
    %5546 = vmatpush2.bf16.msra.mxu0 %v3631
    %5547 = vmatprep.subr.bf16.mxu0 %v3628
    %5548 = vmatpush2.bf16.msra.mxu0 %v3627
    %5549 = vmatprep.subr.bf16.mxu0 %v3624
    %5550 = vmatpush2.bf16.msra.mxu0 %v3623
    %5551 = vmatprep.subr.bf16.mxu0 %v3620
    %5552 = vmatpush2.bf16.msra.mxu0 %v3619
    %5553 = vmatprep.mubr.bf16.mxu0 %v986
    %5554 = vmatmul.mubr.bf16.gmra.mxu0 %v985
    %v5555 = vpop.f32.mrf.mxu0
    %v5556 = vadd.f32 %v5515, %v5555
    %v5557 = vpop.f32.mrf.mxu0
    %v5558 = vadd.f32 %v5517, %v5557
    %v5559 = vpop.f32.mrf.mxu0
    %v5560 = vpop.f32.mrf.mxu0
    %5561 = vdwg.mxu0
    %5562 = vmatprep.subr.bf16.mxu0 %v3680
    %5563 = vmatpush1.bf16.msra.mxu0 %v3679
    %5564 = vmatprep.subr.bf16.mxu0 %v3676
    %5565 = vmatpush1.bf16.msra.mxu0 %v3675
    %5566 = vmatprep.subr.bf16.mxu0 %v3672
    %5567 = vmatpush1.bf16.msra.mxu0 %v3671
    %5568 = vmatprep.subr.bf16.mxu0 %v3668
    %5569 = vmatpush1.bf16.msra.mxu0 %v3667
    %5570 = vmatprep.subr.bf16.mxu0 %v3664
    %5571 = vmatpush1.bf16.msra.mxu0 %v3663
    %5572 = vmatprep.subr.bf16.mxu0 %v3660
    %5573 = vmatpush1.bf16.msra.mxu0 %v3659
    %5574 = vmatprep.subr.bf16.mxu0 %v3656
    %5575 = vmatpush1.bf16.msra.mxu0 %v3655
    %5576 = vmatprep.subr.bf16.mxu0 %v3652
    %5577 = vmatpush1.bf16.msra.mxu0 %v3651
    %5578 = vmatprep.subr.bf16.mxu0 %v3712
    %5579 = vmatpush2.bf16.msra.mxu0 %v3711
    %5580 = vmatprep.subr.bf16.mxu0 %v3708
    %5581 = vmatpush2.bf16.msra.mxu0 %v3707
    %5582 = vmatprep.subr.bf16.mxu0 %v3704
    %5583 = vmatpush2.bf16.msra.mxu0 %v3703
    %5584 = vmatprep.subr.bf16.mxu0 %v3700
    %5585 = vmatpush2.bf16.msra.mxu0 %v3699
    %5586 = vmatprep.subr.bf16.mxu0 %v3696
    %5587 = vmatpush2.bf16.msra.mxu0 %v3695
    %5588 = vmatprep.subr.bf16.mxu0 %v3692
    %5589 = vmatpush2.bf16.msra.mxu0 %v3691
    %5590 = vmatprep.subr.bf16.mxu0 %v3688
    %5591 = vmatpush2.bf16.msra.mxu0 %v3687
    %5592 = vmatprep.subr.bf16.mxu0 %v3684
    %5593 = vmatpush2.bf16.msra.mxu0 %v3683
    %5594 = vmatprep.mubr.bf16.mxu0 %v988
    %5595 = vmatmul.mubr.bf16.gmra.mxu0 %v987
    %v5596 = vpop.f32.mrf.mxu0
    %v5597 = vadd.f32 %v5556, %v5596
    %v5598 = vpop.f32.mrf.mxu0
    %v5599 = vadd.f32 %v5558, %v5598
    %v5600 = vpop.f32.mrf.mxu0
    %v5601 = vpop.f32.mrf.mxu0
    %5602 = vdwg.mxu0
    %5603 = vmatprep.subr.bf16.mxu0 %v3744
    %5604 = vmatpush1.bf16.msra.mxu0 %v3743
    %5605 = vmatprep.subr.bf16.mxu0 %v3740
    %5606 = vmatpush1.bf16.msra.mxu0 %v3739
    %5607 = vmatprep.subr.bf16.mxu0 %v3736
    %5608 = vmatpush1.bf16.msra.mxu0 %v3735
    %5609 = vmatprep.subr.bf16.mxu0 %v3732
    %5610 = vmatpush1.bf16.msra.mxu0 %v3731
    %5611 = vmatprep.subr.bf16.mxu0 %v3728
    %5612 = vmatpush1.bf16.msra.mxu0 %v3727
    %5613 = vmatprep.subr.bf16.mxu0 %v3724
    %5614 = vmatpush1.bf16.msra.mxu0 %v3723
    %5615 = vmatprep.subr.bf16.mxu0 %v3720
    %5616 = vmatpush1.bf16.msra.mxu0 %v3719
    %5617 = vmatprep.subr.bf16.mxu0 %v3716
    %5618 = vmatpush1.bf16.msra.mxu0 %v3715
    %5619 = vmatprep.subr.bf16.mxu0 %v3776
    %5620 = vmatpush2.bf16.msra.mxu0 %v3775
    %5621 = vmatprep.subr.bf16.mxu0 %v3772
    %5622 = vmatpush2.bf16.msra.mxu0 %v3771
    %5623 = vmatprep.subr.bf16.mxu0 %v3768
    %5624 = vmatpush2.bf16.msra.mxu0 %v3767
    %5625 = vmatprep.subr.bf16.mxu0 %v3764
    %5626 = vmatpush2.bf16.msra.mxu0 %v3763
    %5627 = vmatprep.subr.bf16.mxu0 %v3760
    %5628 = vmatpush2.bf16.msra.mxu0 %v3759
    %5629 = vmatprep.subr.bf16.mxu0 %v3756
    %5630 = vmatpush2.bf16.msra.mxu0 %v3755
    %5631 = vmatprep.subr.bf16.mxu0 %v3752
    %5632 = vmatpush2.bf16.msra.mxu0 %v3751
    %5633 = vmatprep.subr.bf16.mxu0 %v3748
    %5634 = vmatpush2.bf16.msra.mxu0 %v3747
    %5635 = vmatprep.mubr.bf16.mxu0 %v990
    %5636 = vmatmul.mubr.bf16.gmra.mxu0 %v989
    %v5637 = vpop.f32.mrf.mxu0
    %v5638 = vadd.f32 %v5597, %v5637
    %v5639 = vpop.f32.mrf.mxu0
    %v5640 = vadd.f32 %v5599, %v5639
    %v5641 = vpop.f32.mrf.mxu0
    %v5642 = vpop.f32.mrf.mxu0
    %5643 = vdwg.mxu0
    %5644 = vmatprep.subr.bf16.mxu0 %v3808
    %5645 = vmatpush1.bf16.msra.mxu0 %v3807
    %5646 = vmatprep.subr.bf16.mxu0 %v3804
    %5647 = vmatpush1.bf16.msra.mxu0 %v3803
    %5648 = vmatprep.subr.bf16.mxu0 %v3800
    %5649 = vmatpush1.bf16.msra.mxu0 %v3799
    %5650 = vmatprep.subr.bf16.mxu0 %v3796
    %5651 = vmatpush1.bf16.msra.mxu0 %v3795
    %5652 = vmatprep.subr.bf16.mxu0 %v3792
    %5653 = vmatpush1.bf16.msra.mxu0 %v3791
    %5654 = vmatprep.subr.bf16.mxu0 %v3788
    %5655 = vmatpush1.bf16.msra.mxu0 %v3787
    %5656 = vmatprep.subr.bf16.mxu0 %v3784
    %5657 = vmatpush1.bf16.msra.mxu0 %v3783
    %5658 = vmatprep.subr.bf16.mxu0 %v3780
    %5659 = vmatpush1.bf16.msra.mxu0 %v3779
    %5660 = vmatprep.subr.bf16.mxu0 %v3840
    %5661 = vmatpush2.bf16.msra.mxu0 %v3839
    %5662 = vmatprep.subr.bf16.mxu0 %v3836
    %5663 = vmatpush2.bf16.msra.mxu0 %v3835
    %5664 = vmatprep.subr.bf16.mxu0 %v3832
    %5665 = vmatpush2.bf16.msra.mxu0 %v3831
    %5666 = vmatprep.subr.bf16.mxu0 %v3828
    %5667 = vmatpush2.bf16.msra.mxu0 %v3827
    %5668 = vmatprep.subr.bf16.mxu0 %v3824
    %5669 = vmatpush2.bf16.msra.mxu0 %v3823
    %5670 = vmatprep.subr.bf16.mxu0 %v3820
    %5671 = vmatpush2.bf16.msra.mxu0 %v3819
    %5672 = vmatprep.subr.bf16.mxu0 %v3816
    %5673 = vmatpush2.bf16.msra.mxu0 %v3815
    %5674 = vmatprep.subr.bf16.mxu0 %v3812
    %5675 = vmatpush2.bf16.msra.mxu0 %v3811
    %5676 = vmatprep.mubr.bf16.mxu0 %v992
    %5677 = vmatmul.mubr.bf16.gmra.mxu0 %v991
    %v5678 = vpop.f32.mrf.mxu0
    %v5679 = vadd.f32 %v5638, %v5678
    %v5680 = vpop.f32.mrf.mxu0
    %v5681 = vadd.f32 %v5640, %v5680
    %v5682 = vpop.f32.mrf.mxu0
    %v5683 = vpop.f32.mrf.mxu0
    %5684 = vdwg.mxu0
    %5685 = vmatprep.subr.bf16.mxu0 %v3872
    %5686 = vmatpush1.bf16.msra.mxu0 %v3871
    %5687 = vmatprep.subr.bf16.mxu0 %v3868
    %5688 = vmatpush1.bf16.msra.mxu0 %v3867
    %5689 = vmatprep.subr.bf16.mxu0 %v3864
    %5690 = vmatpush1.bf16.msra.mxu0 %v3863
    %5691 = vmatprep.subr.bf16.mxu0 %v3860
    %5692 = vmatpush1.bf16.msra.mxu0 %v3859
    %5693 = vmatprep.subr.bf16.mxu0 %v3856
    %5694 = vmatpush1.bf16.msra.mxu0 %v3855
    %5695 = vmatprep.subr.bf16.mxu0 %v3852
    %5696 = vmatpush1.bf16.msra.mxu0 %v3851
    %5697 = vmatprep.subr.bf16.mxu0 %v3848
    %5698 = vmatpush1.bf16.msra.mxu0 %v3847
    %5699 = vmatprep.subr.bf16.mxu0 %v3844
    %5700 = vmatpush1.bf16.msra.mxu0 %v3843
    %5701 = vmatprep.subr.bf16.mxu0 %v3904
    %5702 = vmatpush2.bf16.msra.mxu0 %v3903
    %5703 = vmatprep.subr.bf16.mxu0 %v3900
    %5704 = vmatpush2.bf16.msra.mxu0 %v3899
    %5705 = vmatprep.subr.bf16.mxu0 %v3896
    %5706 = vmatpush2.bf16.msra.mxu0 %v3895
    %5707 = vmatprep.subr.bf16.mxu0 %v3892
    %5708 = vmatpush2.bf16.msra.mxu0 %v3891
    %5709 = vmatprep.subr.bf16.mxu0 %v3888
    %5710 = vmatpush2.bf16.msra.mxu0 %v3887
    %5711 = vmatprep.subr.bf16.mxu0 %v3884
    %5712 = vmatpush2.bf16.msra.mxu0 %v3883
    %5713 = vmatprep.subr.bf16.mxu0 %v3880
    %5714 = vmatpush2.bf16.msra.mxu0 %v3879
    %5715 = vmatprep.subr.bf16.mxu0 %v3876
    %5716 = vmatpush2.bf16.msra.mxu0 %v3875
    %5717 = vmatprep.mubr.bf16.mxu0 %v994
    %5718 = vmatmul.mubr.bf16.gmra.mxu0 %v993
    %v5719 = vpop.f32.mrf.mxu0
    %v5720 = vadd.f32 %v5679, %v5719
    %v5721 = vpop.f32.mrf.mxu0
    %v5722 = vadd.f32 %v5681, %v5721
    %v5723 = vpop.f32.mrf.mxu0
    %v5724 = vpop.f32.mrf.mxu0
    %5725 = vdwg.mxu0
    %5726 = vmatprep.subr.bf16.mxu0 %v3936
    %5727 = vmatpush1.bf16.msra.mxu0 %v3935
    %5728 = vmatprep.subr.bf16.mxu0 %v3932
    %5729 = vmatpush1.bf16.msra.mxu0 %v3931
    %5730 = vmatprep.subr.bf16.mxu0 %v3928
    %5731 = vmatpush1.bf16.msra.mxu0 %v3927
    %5732 = vmatprep.subr.bf16.mxu0 %v3924
    %5733 = vmatpush1.bf16.msra.mxu0 %v3923
    %5734 = vmatprep.subr.bf16.mxu0 %v3920
    %5735 = vmatpush1.bf16.msra.mxu0 %v3919
    %5736 = vmatprep.subr.bf16.mxu0 %v3916
    %5737 = vmatpush1.bf16.msra.mxu0 %v3915
    %5738 = vmatprep.subr.bf16.mxu0 %v3912
    %5739 = vmatpush1.bf16.msra.mxu0 %v3911
    %5740 = vmatprep.subr.bf16.mxu0 %v3908
    %5741 = vmatpush1.bf16.msra.mxu0 %v3907
    %5742 = vmatprep.subr.bf16.mxu0 %v3968
    %5743 = vmatpush2.bf16.msra.mxu0 %v3967
    %5744 = vmatprep.subr.bf16.mxu0 %v3964
    %5745 = vmatpush2.bf16.msra.mxu0 %v3963
    %5746 = vmatprep.subr.bf16.mxu0 %v3960
    %5747 = vmatpush2.bf16.msra.mxu0 %v3959
    %5748 = vmatprep.subr.bf16.mxu0 %v3956
    %5749 = vmatpush2.bf16.msra.mxu0 %v3955
    %5750 = vmatprep.subr.bf16.mxu0 %v3952
    %5751 = vmatpush2.bf16.msra.mxu0 %v3951
    %5752 = vmatprep.subr.bf16.mxu0 %v3948
    %5753 = vmatpush2.bf16.msra.mxu0 %v3947
    %5754 = vmatprep.subr.bf16.mxu0 %v3944
    %5755 = vmatpush2.bf16.msra.mxu0 %v3943
    %5756 = vmatprep.subr.bf16.mxu0 %v3940
    %5757 = vmatpush2.bf16.msra.mxu0 %v3939
    %5758 = vmatprep.mubr.bf16.mxu0 %v996
    %5759 = vmatmul.mubr.bf16.gmra.mxu0 %v995
    %v5760 = vpop.f32.mrf.mxu0
    %v5761 = vadd.f32 %v5720, %v5760
    %v5762 = vpop.f32.mrf.mxu0
    %v5763 = vadd.f32 %v5722, %v5762
    %v5764 = vpop.f32.mrf.mxu0
    %v5765 = vpop.f32.mrf.mxu0
    %5766 = vdwg.mxu0
    %5767 = vmatprep.subr.bf16.mxu0 %v4000
    %5768 = vmatpush1.bf16.msra.mxu0 %v3999
    %5769 = vmatprep.subr.bf16.mxu0 %v3996
    %5770 = vmatpush1.bf16.msra.mxu0 %v3995
    %5771 = vmatprep.subr.bf16.mxu0 %v3992
    %5772 = vmatpush1.bf16.msra.mxu0 %v3991
    %5773 = vmatprep.subr.bf16.mxu0 %v3988
    %5774 = vmatpush1.bf16.msra.mxu0 %v3987
    %5775 = vmatprep.subr.bf16.mxu0 %v3984
    %5776 = vmatpush1.bf16.msra.mxu0 %v3983
    %5777 = vmatprep.subr.bf16.mxu0 %v3980
    %5778 = vmatpush1.bf16.msra.mxu0 %v3979
    %5779 = vmatprep.subr.bf16.mxu0 %v3976
    %5780 = vmatpush1.bf16.msra.mxu0 %v3975
    %5781 = vmatprep.subr.bf16.mxu0 %v3972
    %5782 = vmatpush1.bf16.msra.mxu0 %v3971
    %5783 = vmatprep.subr.bf16.mxu0 %v4032
    %5784 = vmatpush2.bf16.msra.mxu0 %v4031
    %5785 = vmatprep.subr.bf16.mxu0 %v4028
    %5786 = vmatpush2.bf16.msra.mxu0 %v4027
    %5787 = vmatprep.subr.bf16.mxu0 %v4024
    %5788 = vmatpush2.bf16.msra.mxu0 %v4023
    %5789 = vmatprep.subr.bf16.mxu0 %v4020
    %5790 = vmatpush2.bf16.msra.mxu0 %v4019
    %5791 = vmatprep.subr.bf16.mxu0 %v4016
    %5792 = vmatpush2.bf16.msra.mxu0 %v4015
    %5793 = vmatprep.subr.bf16.mxu0 %v4012
    %5794 = vmatpush2.bf16.msra.mxu0 %v4011
    %5795 = vmatprep.subr.bf16.mxu0 %v4008
    %5796 = vmatpush2.bf16.msra.mxu0 %v4007
    %5797 = vmatprep.subr.bf16.mxu0 %v4004
    %5798 = vmatpush2.bf16.msra.mxu0 %v4003
    %5799 = vmatprep.mubr.bf16.mxu0 %v998
    %5800 = vmatmul.mubr.bf16.gmra.mxu0 %v997
    %v5801 = vpop.f32.mrf.mxu0
    %v5802 = vadd.f32 %v5761, %v5801
    %v5803 = vpop.f32.mrf.mxu0
    %v5804 = vadd.f32 %v5763, %v5803
    %v5805 = vpop.f32.mrf.mxu0
    %v5806 = vpop.f32.mrf.mxu0
    %5807 = vdwg.mxu0
    %5808 = vmatprep.subr.bf16.mxu0 %v4064
    %5809 = vmatpush1.bf16.msra.mxu0 %v4063
    %5810 = vmatprep.subr.bf16.mxu0 %v4060
    %5811 = vmatpush1.bf16.msra.mxu0 %v4059
    %5812 = vmatprep.subr.bf16.mxu0 %v4056
    %5813 = vmatpush1.bf16.msra.mxu0 %v4055
    %5814 = vmatprep.subr.bf16.mxu0 %v4052
    %5815 = vmatpush1.bf16.msra.mxu0 %v4051
    %5816 = vmatprep.subr.bf16.mxu0 %v4048
    %5817 = vmatpush1.bf16.msra.mxu0 %v4047
    %5818 = vmatprep.subr.bf16.mxu0 %v4044
    %5819 = vmatpush1.bf16.msra.mxu0 %v4043
    %5820 = vmatprep.subr.bf16.mxu0 %v4040
    %5821 = vmatpush1.bf16.msra.mxu0 %v4039
    %5822 = vmatprep.subr.bf16.mxu0 %v4036
    %5823 = vmatpush1.bf16.msra.mxu0 %v4035
    %5824 = vmatprep.subr.bf16.mxu0 %v4096
    %5825 = vmatpush2.bf16.msra.mxu0 %v4095
    %5826 = vmatprep.subr.bf16.mxu0 %v4092
    %5827 = vmatpush2.bf16.msra.mxu0 %v4091
    %5828 = vmatprep.subr.bf16.mxu0 %v4088
    %5829 = vmatpush2.bf16.msra.mxu0 %v4087
    %5830 = vmatprep.subr.bf16.mxu0 %v4084
    %5831 = vmatpush2.bf16.msra.mxu0 %v4083
    %5832 = vmatprep.subr.bf16.mxu0 %v4080
    %5833 = vmatpush2.bf16.msra.mxu0 %v4079
    %5834 = vmatprep.subr.bf16.mxu0 %v4076
    %5835 = vmatpush2.bf16.msra.mxu0 %v4075
    %5836 = vmatprep.subr.bf16.mxu0 %v4072
    %5837 = vmatpush2.bf16.msra.mxu0 %v4071
    %5838 = vmatprep.subr.bf16.mxu0 %v4068
    %5839 = vmatpush2.bf16.msra.mxu0 %v4067
    %5840 = vmatprep.mubr.bf16.mxu0 %v1000
    %5841 = vmatmul.mubr.bf16.gmra.mxu0 %v999
    %v5842 = vpop.f32.mrf.mxu0
    %v5843 = vadd.f32 %v5802, %v5842
    %v5844 = vpop.f32.mrf.mxu0
    %v5845 = vadd.f32 %v5804, %v5844
    %v5846 = vpop.f32.mrf.mxu0
    %v5847 = vpop.f32.mrf.mxu0
    %5848 = vdwg.mxu0
    %v5849 = vmax.f32 %v5351, 0.0
    %v5850 = vmax.f32 %v5353, 0.0
    %v5851 = vmax.f32 %v5843, 0.0
    %v5852 = vmax.f32 %v5845, 0.0
    %v5853 = vpack.c.bf16 %v5849, %v5849
    %v5854 = vpack.c.bf16 %v5850, %v5850
    %v5855 = vpack.c.bf16 %v5851, %v5851
    %v5856 = vpack.c.bf16 %v5852, %v5852
    %v5857 = vld [vmem:[#allocation7] sm:$0xff]
    %v5858 = vld [vmem:[#allocation7 + $0x8] sm:$0xff]
    %v5859 = vld [vmem:[#allocation7 + $0x10] sm:$0xff]
    %v5860 = vld [vmem:[#allocation7 + $0x18] sm:$0xff]
    %v5861 = vld [vmem:[#allocation7 + $0x20] sm:$0xff]
    %v5862 = vld [vmem:[#allocation7 + $0x28] sm:$0xff]
    %v5863 = vld [vmem:[#allocation7 + $0x30] sm:$0xff]
    %v5864 = vld [vmem:[#allocation7 + $0x38] sm:$0xff]
    %v5865 = vld [vmem:[#allocation7 + $0x40] sm:$0xff]
    %v5866 = vld [vmem:[#allocation7 + $0x48] sm:$0xff]
    %v5867 = vld [vmem:[#allocation7 + $0x50] sm:$0xff]
    %v5868 = vld [vmem:[#allocation7 + $0x58] sm:$0xff]
    %v5869 = vld [vmem:[#allocation7 + $0x60] sm:$0xff]
    %v5870 = vld [vmem:[#allocation7 + $0x68] sm:$0xff]
    %v5871 = vld [vmem:[#allocation7 + $0x70] sm:$0xff]
    %v5872 = vld [vmem:[#allocation7 + $0x78] sm:$0xff]
    %v5873 = vld [vmem:[#allocation7 + $0x80] sm:$0xff]
    %v5874 = vld [vmem:[#allocation7 + $0x88] sm:$0xff]
    %v5875 = vld [vmem:[#allocation7 + $0x90] sm:$0xff]
    %v5876 = vld [vmem:[#allocation7 + $0x98] sm:$0xff]
    %v5877 = vld [vmem:[#allocation7 + $0xa0] sm:$0xff]
    %v5878 = vld [vmem:[#allocation7 + $0xa8] sm:$0xff]
    %v5879 = vld [vmem:[#allocation7 + $0xb0] sm:$0xff]
    %v5880 = vld [vmem:[#allocation7 + $0xb8] sm:$0xff]
    %v5881 = vld [vmem:[#allocation7 + $0xc0] sm:$0xff]
    %v5882 = vld [vmem:[#allocation7 + $0xc8] sm:$0xff]
    %v5883 = vld [vmem:[#allocation7 + $0xd0] sm:$0xff]
    %v5884 = vld [vmem:[#allocation7 + $0xd8] sm:$0xff]
    %v5885 = vld [vmem:[#allocation7 + $0xe0] sm:$0xff]
    %v5886 = vld [vmem:[#allocation7 + $0xe8] sm:$0xff]
    %v5887 = vld [vmem:[#allocation7 + $0xf0] sm:$0xff]
    %v5888 = vld [vmem:[#allocation7 + $0xf8] sm:$0xff]
    %v5889 = vld [vmem:[#allocation7 + $0x100] sm:$0xff]
    %v5890 = vld [vmem:[#allocation7 + $0x108] sm:$0xff]
    %v5891 = vld [vmem:[#allocation7 + $0x110] sm:$0xff]
    %v5892 = vld [vmem:[#allocation7 + $0x118] sm:$0xff]
    %v5893 = vld [vmem:[#allocation7 + $0x120] sm:$0xff]
    %v5894 = vld [vmem:[#allocation7 + $0x128] sm:$0xff]
    %v5895 = vld [vmem:[#allocation7 + $0x130] sm:$0xff]
    %v5896 = vld [vmem:[#allocation7 + $0x138] sm:$0xff]
    %v5897 = vld [vmem:[#allocation7 + $0x140] sm:$0xff]
    %v5898 = vld [vmem:[#allocation7 + $0x148] sm:$0xff]
    %v5899 = vld [vmem:[#allocation7 + $0x150] sm:$0xff]
    %v5900 = vld [vmem:[#allocation7 + $0x158] sm:$0xff]
    %v5901 = vld [vmem:[#allocation7 + $0x160] sm:$0xff]
    %v5902 = vld [vmem:[#allocation7 + $0x168] sm:$0xff]
    %v5903 = vld [vmem:[#allocation7 + $0x170] sm:$0xff]
    %v5904 = vld [vmem:[#allocation7 + $0x178] sm:$0xff]
    %v5905 = vld [vmem:[#allocation7 + $0x180] sm:$0xff]
    %v5906 = vld [vmem:[#allocation7 + $0x188] sm:$0xff]
    %v5907 = vld [vmem:[#allocation7 + $0x190] sm:$0xff]
    %v5908 = vld [vmem:[#allocation7 + $0x198] sm:$0xff]
    %v5909 = vld [vmem:[#allocation7 + $0x1a0] sm:$0xff]
    %v5910 = vld [vmem:[#allocation7 + $0x1a8] sm:$0xff]
    %v5911 = vld [vmem:[#allocation7 + $0x1b0] sm:$0xff]
    %v5912 = vld [vmem:[#allocation7 + $0x1b8] sm:$0xff]
    %v5913 = vld [vmem:[#allocation7 + $0x1c0] sm:$0xff]
    %v5914 = vld [vmem:[#allocation7 + $0x1c8] sm:$0xff]
    %v5915 = vld [vmem:[#allocation7 + $0x1d0] sm:$0xff]
    %v5916 = vld [vmem:[#allocation7 + $0x1d8] sm:$0xff]
    %v5917 = vld [vmem:[#allocation7 + $0x1e0] sm:$0xff]
    %v5918 = vld [vmem:[#allocation7 + $0x1e8] sm:$0xff]
    %v5919 = vld [vmem:[#allocation7 + $0x1f0] sm:$0xff]
    %v5920 = vld [vmem:[#allocation7 + $0x1f8] sm:$0xff]
    %v5921 = vld [vmem:[#allocation8] sm:$0x3]
    %v5923 = vlaneseq
    %v5924 = vshrl.u32 %v5923, 7
    %v5925 = vsub.s32 0, %v5924
    %v5926 = vrot.slane %v5921, %v5925
    %v5927 = vlaneseq
    %v5928 = vshrl.u32 %v5927, 7
    %v5929 = vsub.s32 1, %v5928
    %v5930 = vrot.slane %v5921, %v5929
    %v5997 = vunpack.c.l.b16 %v5857
    %v5998 = vunpack.c.h.b16 %v5857
    %v5999 = vunpack.c.l.b16 %v5858
    %v6000 = vunpack.c.h.b16 %v5858
    %v6001 = vunpack.c.l.b16 %v5859
    %v6002 = vunpack.c.h.b16 %v5859
    %v6003 = vunpack.c.l.b16 %v5860
    %v6004 = vunpack.c.h.b16 %v5860
    %v6005 = vunpack.c.l.b16 %v5861
    %v6006 = vunpack.c.h.b16 %v5861
    %v6007 = vunpack.c.l.b16 %v5862
    %v6008 = vunpack.c.h.b16 %v5862
    %v6009 = vunpack.c.l.b16 %v5863
    %v6010 = vunpack.c.h.b16 %v5863
    %v6011 = vunpack.c.l.b16 %v5864
    %v6012 = vunpack.c.h.b16 %v5864
    %v6013 = vunpack.c.l.b16 %v5865
    %v6014 = vunpack.c.h.b16 %v5865
    %v6015 = vunpack.c.l.b16 %v5866
    %v6016 = vunpack.c.h.b16 %v5866
    %v6017 = vunpack.c.l.b16 %v5867
    %v6018 = vunpack.c.h.b16 %v5867
    %v6019 = vunpack.c.l.b16 %v5868
    %v6020 = vunpack.c.h.b16 %v5868
    %v6021 = vunpack.c.l.b16 %v5869
    %v6022 = vunpack.c.h.b16 %v5869
    %v6023 = vunpack.c.l.b16 %v5870
    %v6024 = vunpack.c.h.b16 %v5870
    %v6025 = vunpack.c.l.b16 %v5871
    %v6026 = vunpack.c.h.b16 %v5871
    %v6027 = vunpack.c.l.b16 %v5872
    %v6028 = vunpack.c.h.b16 %v5872
    %v6029 = vunpack.c.l.b16 %v5873
    %v6030 = vunpack.c.h.b16 %v5873
    %v6031 = vunpack.c.l.b16 %v5874
    %v6032 = vunpack.c.h.b16 %v5874
    %v6033 = vunpack.c.l.b16 %v5875
    %v6034 = vunpack.c.h.b16 %v5875
    %v6035 = vunpack.c.l.b16 %v5876
    %v6036 = vunpack.c.h.b16 %v5876
    %v6037 = vunpack.c.l.b16 %v5877
    %v6038 = vunpack.c.h.b16 %v5877
    %v6039 = vunpack.c.l.b16 %v5878
    %v6040 = vunpack.c.h.b16 %v5878
    %v6041 = vunpack.c.l.b16 %v5879
    %v6042 = vunpack.c.h.b16 %v5879
    %v6043 = vunpack.c.l.b16 %v5880
    %v6044 = vunpack.c.h.b16 %v5880
    %v6045 = vunpack.c.l.b16 %v5881
    %v6046 = vunpack.c.h.b16 %v5881
    %v6047 = vunpack.c.l.b16 %v5882
    %v6048 = vunpack.c.h.b16 %v5882
    %v6049 = vunpack.c.l.b16 %v5883
    %v6050 = vunpack.c.h.b16 %v5883
    %v6051 = vunpack.c.l.b16 %v5884
    %v6052 = vunpack.c.h.b16 %v5884
    %v6053 = vunpack.c.l.b16 %v5885
    %v6054 = vunpack.c.h.b16 %v5885
    %v6055 = vunpack.c.l.b16 %v5886
    %v6056 = vunpack.c.h.b16 %v5886
    %v6057 = vunpack.c.l.b16 %v5887
    %v6058 = vunpack.c.h.b16 %v5887
    %v6059 = vunpack.c.l.b16 %v5888
    %v6060 = vunpack.c.h.b16 %v5888
    %v6061 = vunpack.c.l.b16 %v5889
    %v6062 = vunpack.c.h.b16 %v5889
    %v6063 = vunpack.c.l.b16 %v5890
    %v6064 = vunpack.c.h.b16 %v5890
    %v6065 = vunpack.c.l.b16 %v5891
    %v6066 = vunpack.c.h.b16 %v5891
    %v6067 = vunpack.c.l.b16 %v5892
    %v6068 = vunpack.c.h.b16 %v5892
    %v6069 = vunpack.c.l.b16 %v5893
    %v6070 = vunpack.c.h.b16 %v5893
    %v6071 = vunpack.c.l.b16 %v5894
    %v6072 = vunpack.c.h.b16 %v5894
    %v6073 = vunpack.c.l.b16 %v5895
    %v6074 = vunpack.c.h.b16 %v5895
    %v6075 = vunpack.c.l.b16 %v5896
    %v6076 = vunpack.c.h.b16 %v5896
    %v6077 = vunpack.c.l.b16 %v5897
    %v6078 = vunpack.c.h.b16 %v5897
    %v6079 = vunpack.c.l.b16 %v5898
    %v6080 = vunpack.c.h.b16 %v5898
    %v6081 = vunpack.c.l.b16 %v5899
    %v6082 = vunpack.c.h.b16 %v5899
    %v6083 = vunpack.c.l.b16 %v5900
    %v6084 = vunpack.c.h.b16 %v5900
    %v6085 = vunpack.c.l.b16 %v5901
    %v6086 = vunpack.c.h.b16 %v5901
    %v6087 = vunpack.c.l.b16 %v5902
    %v6088 = vunpack.c.h.b16 %v5902
    %v6089 = vunpack.c.l.b16 %v5903
    %v6090 = vunpack.c.h.b16 %v5903
    %v6091 = vunpack.c.l.b16 %v5904
    %v6092 = vunpack.c.h.b16 %v5904
    %v6093 = vunpack.c.l.b16 %v5905
    %v6094 = vunpack.c.h.b16 %v5905
    %v6095 = vunpack.c.l.b16 %v5906
    %v6096 = vunpack.c.h.b16 %v5906
    %v6097 = vunpack.c.l.b16 %v5907
    %v6098 = vunpack.c.h.b16 %v5907
    %v6099 = vunpack.c.l.b16 %v5908
    %v6100 = vunpack.c.h.b16 %v5908
    %v6101 = vunpack.c.l.b16 %v5909
    %v6102 = vunpack.c.h.b16 %v5909
    %v6103 = vunpack.c.l.b16 %v5910
    %v6104 = vunpack.c.h.b16 %v5910
    %v6105 = vunpack.c.l.b16 %v5911
    %v6106 = vunpack.c.h.b16 %v5911
    %v6107 = vunpack.c.l.b16 %v5912
    %v6108 = vunpack.c.h.b16 %v5912
    %v6109 = vunpack.c.l.b16 %v5913
    %v6110 = vunpack.c.h.b16 %v5913
    %v6111 = vunpack.c.l.b16 %v5914
    %v6112 = vunpack.c.h.b16 %v5914
    %v6113 = vunpack.c.l.b16 %v5915
    %v6114 = vunpack.c.h.b16 %v5915
    %v6115 = vunpack.c.l.b16 %v5916
    %v6116 = vunpack.c.h.b16 %v5916
    %v6117 = vunpack.c.l.b16 %v5917
    %v6118 = vunpack.c.h.b16 %v5917
    %v6119 = vunpack.c.l.b16 %v5918
    %v6120 = vunpack.c.h.b16 %v5918
    %v6121 = vunpack.c.l.b16 %v5919
    %v6122 = vunpack.c.h.b16 %v5919
    %v6123 = vunpack.c.l.b16 %v5920
    %v6124 = vunpack.c.h.b16 %v5920
    %v6125 = vpack.c.b16 %v5999, %v5997
    %v6126 = vpack.c.b16 %v6000, %v5998
    %v6127 = vpack.c.b16 %v6003, %v6001
    %v6128 = vpack.c.b16 %v6004, %v6002
    %v6129 = vpack.c.b16 %v6007, %v6005
    %v6130 = vpack.c.b16 %v6008, %v6006
    %v6131 = vpack.c.b16 %v6011, %v6009
    %v6132 = vpack.c.b16 %v6012, %v6010
    %v6133 = vpack.c.b16 %v6015, %v6013
    %v6134 = vpack.c.b16 %v6016, %v6014
    %v6135 = vpack.c.b16 %v6019, %v6017
    %v6136 = vpack.c.b16 %v6020, %v6018
    %v6137 = vpack.c.b16 %v6023, %v6021
    %v6138 = vpack.c.b16 %v6024, %v6022
    %v6139 = vpack.c.b16 %v6027, %v6025
    %v6140 = vpack.c.b16 %v6028, %v6026
    %v6141 = vpack.c.b16 %v6031, %v6029
    %v6142 = vpack.c.b16 %v6032, %v6030
    %v6143 = vpack.c.b16 %v6035, %v6033
    %v6144 = vpack.c.b16 %v6036, %v6034
    %v6145 = vpack.c.b16 %v6039, %v6037
    %v6146 = vpack.c.b16 %v6040, %v6038
    %v6147 = vpack.c.b16 %v6043, %v6041
    %v6148 = vpack.c.b16 %v6044, %v6042
    %v6149 = vpack.c.b16 %v6047, %v6045
    %v6150 = vpack.c.b16 %v6048, %v6046
    %v6151 = vpack.c.b16 %v6051, %v6049
    %v6152 = vpack.c.b16 %v6052, %v6050
    %v6153 = vpack.c.b16 %v6055, %v6053
    %v6154 = vpack.c.b16 %v6056, %v6054
    %v6155 = vpack.c.b16 %v6059, %v6057
    %v6156 = vpack.c.b16 %v6060, %v6058
    %v6157 = vpack.c.b16 %v6063, %v6061
    %v6158 = vpack.c.b16 %v6064, %v6062
    %v6159 = vpack.c.b16 %v6067, %v6065
    %v6160 = vpack.c.b16 %v6068, %v6066
    %v6161 = vpack.c.b16 %v6071, %v6069
    %v6162 = vpack.c.b16 %v6072, %v6070
    %v6163 = vpack.c.b16 %v6075, %v6073
    %v6164 = vpack.c.b16 %v6076, %v6074
    %v6165 = vpack.c.b16 %v6079, %v6077
    %v6166 = vpack.c.b16 %v6080, %v6078
    %v6167 = vpack.c.b16 %v6083, %v6081
    %v6168 = vpack.c.b16 %v6084, %v6082
    %v6169 = vpack.c.b16 %v6087, %v6085
    %v6170 = vpack.c.b16 %v6088, %v6086
    %v6171 = vpack.c.b16 %v6091, %v6089
    %v6172 = vpack.c.b16 %v6092, %v6090
    %v6173 = vpack.c.b16 %v6095, %v6093
    %v6174 = vpack.c.b16 %v6096, %v6094
    %v6175 = vpack.c.b16 %v6099, %v6097
    %v6176 = vpack.c.b16 %v6100, %v6098
    %v6177 = vpack.c.b16 %v6103, %v6101
    %v6178 = vpack.c.b16 %v6104, %v6102
    %v6179 = vpack.c.b16 %v6107, %v6105
    %v6180 = vpack.c.b16 %v6108, %v6106
    %v6181 = vpack.c.b16 %v6111, %v6109
    %v6182 = vpack.c.b16 %v6112, %v6110
    %v6183 = vpack.c.b16 %v6115, %v6113
    %v6184 = vpack.c.b16 %v6116, %v6114
    %v6185 = vpack.c.b16 %v6119, %v6117
    %v6186 = vpack.c.b16 %v6120, %v6118
    %v6187 = vpack.c.b16 %v6123, %v6121
    %v6188 = vpack.c.b16 %v6124, %v6122
    %6253 = vmatprep.subr.bf16.mxu0 %v6140
    %6254 = vmatpush1.bf16.msra.mxu0 %v6139
    %6255 = vmatprep.subr.bf16.mxu0 %v6138
    %6256 = vmatpush1.bf16.msra.mxu0 %v6137
    %6257 = vmatprep.subr.bf16.mxu0 %v6136
    %6258 = vmatpush1.bf16.msra.mxu0 %v6135
    %6259 = vmatprep.subr.bf16.mxu0 %v6134
    %6260 = vmatpush1.bf16.msra.mxu0 %v6133
    %6261 = vmatprep.subr.bf16.mxu0 %v6132
    %6262 = vmatpush1.bf16.msra.mxu0 %v6131
    %6263 = vmatprep.subr.bf16.mxu0 %v6130
    %6264 = vmatpush1.bf16.msra.mxu0 %v6129
    %6265 = vmatprep.subr.bf16.mxu0 %v6128
    %6266 = vmatpush1.bf16.msra.mxu0 %v6127
    %6267 = vmatprep.subr.bf16.mxu0 %v6126
    %6268 = vmatpush1.bf16.msra.mxu0 %v6125
    %6269 = vmatprep.subr.bf16.mxu0 %v6156
    %6270 = vmatpush2.bf16.msra.mxu0 %v6155
    %6271 = vmatprep.subr.bf16.mxu0 %v6154
    %6272 = vmatpush2.bf16.msra.mxu0 %v6153
    %6273 = vmatprep.subr.bf16.mxu0 %v6152
    %6274 = vmatpush2.bf16.msra.mxu0 %v6151
    %6275 = vmatprep.subr.bf16.mxu0 %v6150
    %6276 = vmatpush2.bf16.msra.mxu0 %v6149
    %6277 = vmatprep.subr.bf16.mxu0 %v6148
    %6278 = vmatpush2.bf16.msra.mxu0 %v6147
    %6279 = vmatprep.subr.bf16.mxu0 %v6146
    %6280 = vmatpush2.bf16.msra.mxu0 %v6145
    %6281 = vmatprep.subr.bf16.mxu0 %v6144
    %6282 = vmatpush2.bf16.msra.mxu0 %v6143
    %6283 = vmatprep.subr.bf16.mxu0 %v6142
    %6284 = vmatpush2.bf16.msra.mxu0 %v6141
    %6285 = vmatprep.mubr.bf16.mxu0 %v5854
    %6286 = vmatmul.mubr.bf16.gmra.mxu0 %v5853
    %v6287 = vpop.f32.mrf.mxu0
    %v6288 = vadd.f32 %v5926, %v6287
    %v6289 = vpop.f32.mrf.mxu0
    %v6290 = vadd.f32 %v5930, %v6289
    %v6291 = vpop.f32.mrf.mxu0
    %v6292 = vpop.f32.mrf.mxu0
    %6293 = vdwg.mxu0
    %6294 = vmatprep.subr.bf16.mxu0 %v6172
    %6295 = vmatpush1.bf16.msra.mxu0 %v6171
    %6296 = vmatprep.subr.bf16.mxu0 %v6170
    %6297 = vmatpush1.bf16.msra.mxu0 %v6169
    %6298 = vmatprep.subr.bf16.mxu0 %v6168
    %6299 = vmatpush1.bf16.msra.mxu0 %v6167
    %6300 = vmatprep.subr.bf16.mxu0 %v6166
    %6301 = vmatpush1.bf16.msra.mxu0 %v6165
    %6302 = vmatprep.subr.bf16.mxu0 %v6164
    %6303 = vmatpush1.bf16.msra.mxu0 %v6163
    %6304 = vmatprep.subr.bf16.mxu0 %v6162
    %6305 = vmatpush1.bf16.msra.mxu0 %v6161
    %6306 = vmatprep.subr.bf16.mxu0 %v6160
    %6307 = vmatpush1.bf16.msra.mxu0 %v6159
    %6308 = vmatprep.subr.bf16.mxu0 %v6158
    %6309 = vmatpush1.bf16.msra.mxu0 %v6157
    %6310 = vmatprep.subr.bf16.mxu0 %v6188
    %6311 = vmatpush2.bf16.msra.mxu0 %v6187
    %6312 = vmatprep.subr.bf16.mxu0 %v6186
    %6313 = vmatpush2.bf16.msra.mxu0 %v6185
    %6314 = vmatprep.subr.bf16.mxu0 %v6184
    %6315 = vmatpush2.bf16.msra.mxu0 %v6183
    %6316 = vmatprep.subr.bf16.mxu0 %v6182
    %6317 = vmatpush2.bf16.msra.mxu0 %v6181
    %6318 = vmatprep.subr.bf16.mxu0 %v6180
    %6319 = vmatpush2.bf16.msra.mxu0 %v6179
    %6320 = vmatprep.subr.bf16.mxu0 %v6178
    %6321 = vmatpush2.bf16.msra.mxu0 %v6177
    %6322 = vmatprep.subr.bf16.mxu0 %v6176
    %6323 = vmatpush2.bf16.msra.mxu0 %v6175
    %6324 = vmatprep.subr.bf16.mxu0 %v6174
    %6325 = vmatpush2.bf16.msra.mxu0 %v6173
    %6326 = vmatprep.mubr.bf16.mxu0 %v5856
    %6327 = vmatmul.mubr.bf16.gmra.mxu0 %v5855
    %v6328 = vpop.f32.mrf.mxu0
    %v6329 = vadd.f32 %v6288, %v6328
    %v6330 = vpop.f32.mrf.mxu0
    %v6331 = vadd.f32 %v6290, %v6330
    %v6332 = vpop.f32.mrf.mxu0
    %v6333 = vpop.f32.mrf.mxu0
    %6334 = vdwg.mxu0
    %v6335 = vmax.f32 %v6329, 0.0
    %v6336 = vmax.f32 %v6331, 0.0
    %v6337 = vpack.c.bf16 %v6335, %v6335
    %v6338 = vpack.c.bf16 %v6336, %v6336
    %v6339 = vld [vmem:[#allocation10] sm:$0xf]
    %v6340 = vld [vmem:[#allocation10 + $0x4] sm:$0xf]
    %v6341 = vld [vmem:[#allocation10 + $0x8] sm:$0xf]
    %v6342 = vld [vmem:[#allocation10 + $0xc] sm:$0xf]
    %v6343 = vld [vmem:[#allocation10 + $0x10] sm:$0xf]
    %v6344 = vld [vmem:[#allocation10 + $0x14] sm:$0xf]
    %v6345 = vld [vmem:[#allocation10 + $0x18] sm:$0xf]
    %v6346 = vld [vmem:[#allocation10 + $0x1c] sm:$0xf]
    %v6347 = vld [vmem:[#allocation10 + $0x20] sm:$0xf]
    %v6348 = vld [vmem:[#allocation10 + $0x24] sm:$0xf]
    %v6349 = vld [vmem:[#allocation10 + $0x28] sm:$0xf]
    %v6350 = vld [vmem:[#allocation10 + $0x2c] sm:$0xf]
    %v6351 = vld [vmem:[#allocation10 + $0x30] sm:$0xf]
    %v6352 = vld [vmem:[#allocation10 + $0x34] sm:$0xf]
    %v6353 = vld [vmem:[#allocation10 + $0x38] sm:$0xf]
    %v6354 = vld [vmem:[#allocation10 + $0x3c] sm:$0xf]
    %v6355 = vld [vmem:[#allocation10 + $0x40] sm:$0xf]
    %v6356 = vld [vmem:[#allocation10 + $0x44] sm:$0xf]
    %v6357 = vld [vmem:[#allocation10 + $0x48] sm:$0xf]
    %v6358 = vld [vmem:[#allocation10 + $0x4c] sm:$0xf]
    %v6359 = vld [vmem:[#allocation10 + $0x50] sm:$0xf]
    %v6360 = vld [vmem:[#allocation10 + $0x54] sm:$0xf]
    %v6361 = vld [vmem:[#allocation10 + $0x58] sm:$0xf]
    %v6362 = vld [vmem:[#allocation10 + $0x5c] sm:$0xf]
    %v6363 = vld [vmem:[#allocation10 + $0x60] sm:$0xf]
    %v6364 = vld [vmem:[#allocation10 + $0x64] sm:$0xf]
    %v6365 = vld [vmem:[#allocation10 + $0x68] sm:$0xf]
    %v6366 = vld [vmem:[#allocation10 + $0x6c] sm:$0xf]
    %v6367 = vld [vmem:[#allocation10 + $0x70] sm:$0xf]
    %v6368 = vld [vmem:[#allocation10 + $0x74] sm:$0xf]
    %v6369 = vld [vmem:[#allocation10 + $0x78] sm:$0xf]
    %v6370 = vld [vmem:[#allocation10 + $0x7c] sm:$0xf]
    %v6371 = vld [vmem:[#allocation11] sm:$0x1]
    %v6373 = vlaneseq
    %v6374 = vshrl.u32 %v6373, 7
    %v6375 = vsub.s32 0, %v6374
    %v6376 = vrot.slane %v6371, %v6375
    %v6410 = vunpack.c.l.b16 %v6339
    %v6411 = vunpack.c.l.b16 %v6340
    %v6412 = vunpack.c.l.b16 %v6341
    %v6413 = vunpack.c.l.b16 %v6342
    %v6414 = vunpack.c.l.b16 %v6343
    %v6415 = vunpack.c.l.b16 %v6344
    %v6416 = vunpack.c.l.b16 %v6345
    %v6417 = vunpack.c.l.b16 %v6346
    %v6418 = vunpack.c.l.b16 %v6347
    %v6419 = vunpack.c.l.b16 %v6348
    %v6420 = vunpack.c.l.b16 %v6349
    %v6421 = vunpack.c.l.b16 %v6350
    %v6422 = vunpack.c.l.b16 %v6351
    %v6423 = vunpack.c.l.b16 %v6352
    %v6424 = vunpack.c.l.b16 %v6353
    %v6425 = vunpack.c.l.b16 %v6354
    %v6426 = vunpack.c.l.b16 %v6355
    %v6427 = vunpack.c.l.b16 %v6356
    %v6428 = vunpack.c.l.b16 %v6357
    %v6429 = vunpack.c.l.b16 %v6358
    %v6430 = vunpack.c.l.b16 %v6359
    %v6431 = vunpack.c.l.b16 %v6360
    %v6432 = vunpack.c.l.b16 %v6361
    %v6433 = vunpack.c.l.b16 %v6362
    %v6434 = vunpack.c.l.b16 %v6363
    %v6435 = vunpack.c.l.b16 %v6364
    %v6436 = vunpack.c.l.b16 %v6365
    %v6437 = vunpack.c.l.b16 %v6366
    %v6438 = vunpack.c.l.b16 %v6367
    %v6439 = vunpack.c.l.b16 %v6368
    %v6440 = vunpack.c.l.b16 %v6369
    %v6441 = vunpack.c.l.b16 %v6370
    %v6442 = vpack.c.b16 %v6411, %v6410
    %v6443 = vpack.c.b16 %v6413, %v6412
    %v6444 = vpack.c.b16 %v6415, %v6414
    %v6445 = vpack.c.b16 %v6417, %v6416
    %v6446 = vpack.c.b16 %v6419, %v6418
    %v6447 = vpack.c.b16 %v6421, %v6420
    %v6448 = vpack.c.b16 %v6423, %v6422
    %v6449 = vpack.c.b16 %v6425, %v6424
    %v6450 = vpack.c.b16 %v6427, %v6426
    %v6451 = vpack.c.b16 %v6429, %v6428
    %v6452 = vpack.c.b16 %v6431, %v6430
    %v6453 = vpack.c.b16 %v6433, %v6432
    %v6454 = vpack.c.b16 %v6435, %v6434
    %v6455 = vpack.c.b16 %v6437, %v6436
    %v6456 = vpack.c.b16 %v6439, %v6438
    %v6457 = vpack.c.b16 %v6441, %v6440
    %6474 = vmatprep.subr.bf16.mxu0 0
    %6475 = vmatpush1.bf16.msra.mxu0 %v6449
    %6476 = vmatprep.subr.bf16.mxu0 0
    %6477 = vmatpush1.bf16.msra.mxu0 %v6448
    %6478 = vmatprep.subr.bf16.mxu0 0
    %6479 = vmatpush1.bf16.msra.mxu0 %v6447
    %6480 = vmatprep.subr.bf16.mxu0 0
    %6481 = vmatpush1.bf16.msra.mxu0 %v6446
    %6482 = vmatprep.subr.bf16.mxu0 0
    %6483 = vmatpush1.bf16.msra.mxu0 %v6445
    %6484 = vmatprep.subr.bf16.mxu0 0
    %6485 = vmatpush1.bf16.msra.mxu0 %v6444
    %6486 = vmatprep.subr.bf16.mxu0 0
    %6487 = vmatpush1.bf16.msra.mxu0 %v6443
    %6488 = vmatprep.subr.bf16.mxu0 0
    %6489 = vmatpush1.bf16.msra.mxu0 %v6442
    %6490 = vmatprep.subr.bf16.mxu0 0
    %6491 = vmatpush2.bf16.msra.mxu0 %v6457
    %6492 = vmatprep.subr.bf16.mxu0 0
    %6493 = vmatpush2.bf16.msra.mxu0 %v6456
    %6494 = vmatprep.subr.bf16.mxu0 0
    %6495 = vmatpush2.bf16.msra.mxu0 %v6455
    %6496 = vmatprep.subr.bf16.mxu0 0
    %6497 = vmatpush2.bf16.msra.mxu0 %v6454
    %6498 = vmatprep.subr.bf16.mxu0 0
    %6499 = vmatpush2.bf16.msra.mxu0 %v6453
    %6500 = vmatprep.subr.bf16.mxu0 0
    %6501 = vmatpush2.bf16.msra.mxu0 %v6452
    %6502 = vmatprep.subr.bf16.mxu0 0
    %6503 = vmatpush2.bf16.msra.mxu0 %v6451
    %6504 = vmatprep.subr.bf16.mxu0 0
    %6505 = vmatpush2.bf16.msra.mxu0 %v6450
    %6506 = vmatprep.mubr.bf16.mxu0 %v6338
    %6507 = vmatmul.mubr.bf16.gmra.mxu0 %v6337
    %v6508 = vpop.f32.mrf.mxu0
    %v6509 = vadd.f32 %v6376, %v6508
    %v6510 = vpop.f32.mrf.mxu0
    %v6511 = vpop.f32.mrf.mxu0
    %v6512 = vpop.f32.mrf.mxu0
    %6513 = vdwg.mxu0
    %v6514 = vmax.f32 %v6509, 0.0
    %v6515 = vpack.c.bf16 %v6514, %v6514
    %v6516 = vld [vmem:[%s7] sm:$0xf]
    %v6517 = vld [vmem:[%s7 + $0x4] sm:$0xf]
    %v6518 = vld [vmem:[%s7 + $0x8] sm:$0xf]
    %v6519 = vld [vmem:[%s7 + $0xc] sm:$0xf]
    %v6520 = vld [vmem:[%s7 + $0x10] sm:$0xf]
    %v6521 = vld [vmem:[%s7 + $0x14] sm:$0xf]
    %v6522 = vld [vmem:[%s7 + $0x18] sm:$0xf]
    %v6523 = vld [vmem:[%s7 + $0x1c] sm:$0xf]
    %v6524 = vld [vmem:[%s7 + $0x20] sm:$0xf]
    %v6525 = vld [vmem:[%s7 + $0x24] sm:$0xf]
    %v6526 = vld [vmem:[%s7 + $0x28] sm:$0xf]
    %v6527 = vld [vmem:[%s7 + $0x2c] sm:$0xf]
    %v6528 = vld [vmem:[%s7 + $0x30] sm:$0xf]
    %v6529 = vld [vmem:[%s7 + $0x34] sm:$0xf]
    %v6530 = vld [vmem:[%s7 + $0x38] sm:$0xf]
    %v6531 = vld [vmem:[%s7 + $0x3c] sm:$0xf]
    %v6532 = vld [vmem:[#allocation13] sm:$0x1]
    %v6534 = vlaneseq
    %v6535 = vshrl.u32 %v6534, 7
    %v6536 = vsub.s32 0, %v6535
    %v6537 = vrot.slane %v6532, %v6536
    %v6555 = vunpack.c.l.b16 %v6516
    %v6556 = vunpack.c.l.b16 %v6517
    %v6557 = vunpack.c.l.b16 %v6518
    %v6558 = vunpack.c.l.b16 %v6519
    %v6559 = vunpack.c.l.b16 %v6520
    %v6560 = vunpack.c.l.b16 %v6521
    %v6561 = vunpack.c.l.b16 %v6522
    %v6562 = vunpack.c.l.b16 %v6523
    %v6563 = vunpack.c.l.b16 %v6524
    %v6564 = vunpack.c.l.b16 %v6525
    %v6565 = vunpack.c.l.b16 %v6526
    %v6566 = vunpack.c.l.b16 %v6527
    %v6567 = vunpack.c.l.b16 %v6528
    %v6568 = vunpack.c.l.b16 %v6529
    %v6569 = vunpack.c.l.b16 %v6530
    %v6570 = vunpack.c.l.b16 %v6531
    %v6571 = vpack.c.b16 %v6556, %v6555
    %v6572 = vpack.c.b16 %v6558, %v6557
    %v6573 = vpack.c.b16 %v6560, %v6559
    %v6574 = vpack.c.b16 %v6562, %v6561
    %v6575 = vpack.c.b16 %v6564, %v6563
    %v6576 = vpack.c.b16 %v6566, %v6565
    %v6577 = vpack.c.b16 %v6568, %v6567
    %v6578 = vpack.c.b16 %v6570, %v6569
    %6587 = vmatprep.subr.bf16.mxu0 0
    %6588 = vmatpush1.bf16.msra.mxu0 %v6578
    %6589 = vmatprep.subr.bf16.mxu0 0
    %6590 = vmatpush1.bf16.msra.mxu0 %v6577
    %6591 = vmatprep.subr.bf16.mxu0 0
    %6592 = vmatpush1.bf16.msra.mxu0 %v6576
    %6593 = vmatprep.subr.bf16.mxu0 0
    %6594 = vmatpush1.bf16.msra.mxu0 %v6575
    %6595 = vmatprep.subr.bf16.mxu0 0
    %6596 = vmatpush1.bf16.msra.mxu0 %v6574
    %6597 = vmatprep.subr.bf16.mxu0 0
    %6598 = vmatpush1.bf16.msra.mxu0 %v6573
    %6599 = vmatprep.subr.bf16.mxu0 0
    %6600 = vmatpush1.bf16.msra.mxu0 %v6572
    %6601 = vmatprep.subr.bf16.mxu0 0
    %6602 = vmatpush1.bf16.msra.mxu0 %v6571
    %6603 = vmatprep.subr.bf16.mxu0 0
    %6604 = vmatpush2.bf16.msra.mxu0 0
    %6605 = vmatprep.subr.bf16.mxu0 0
    %6606 = vmatpush2.bf16.msra.mxu0 0
    %6607 = vmatprep.subr.bf16.mxu0 0
    %6608 = vmatpush2.bf16.msra.mxu0 0
    %6609 = vmatprep.subr.bf16.mxu0 0
    %6610 = vmatpush2.bf16.msra.mxu0 0
    %6611 = vmatprep.subr.bf16.mxu0 0
    %6612 = vmatpush2.bf16.msra.mxu0 0
    %6613 = vmatprep.subr.bf16.mxu0 0
    %6614 = vmatpush2.bf16.msra.mxu0 0
    %6615 = vmatprep.subr.bf16.mxu0 0
    %6616 = vmatpush2.bf16.msra.mxu0 0
    %6617 = vmatprep.subr.bf16.mxu0 0
    %6618 = vmatpush2.bf16.msra.mxu0 0
    %6619 = vmatprep.mubr.bf16.mxu0 0
    %6620 = vmatmul.mubr.bf16.gmra.mxu0 %v6515
    %v6621 = vpop.f32.mrf.mxu0
    %v6622 = vadd.f32 %v6537, %v6621
    %v6623 = vpop.f32.mrf.mxu0
    %v6624 = vpop.f32.mrf.mxu0
    %v6625 = vpop.f32.mrf.mxu0
    %6626 = vdwg.mxu0
    %v6627 = vmax.f32 %v6622, 0.0
    %v6628 = vpack.c.bf16 %v6627, %v6627
    %v6629 = vld [vmem:[%s9] sm:$0xf]
    %v6630 = vld [vmem:[%s9 + $0x4] sm:$0xf]
    %v6631 = vld [vmem:[%s9 + $0x8] sm:$0xf]
    %v6632 = vld [vmem:[%s9 + $0xc] sm:$0xf]
    %v6633 = vld [vmem:[%s9 + $0x10] sm:$0xf]
    %v6634 = vld [vmem:[%s9 + $0x14] sm:$0xf]
    %v6635 = vld [vmem:[%s9 + $0x18] sm:$0xf]
    %v6636 = vld [vmem:[%s9 + $0x1c] sm:$0xf]
    %v6637 = vld [vmem:[#allocation14] sm:$0x1]
    %v6639 = vlaneseq
    %v6640 = vshrl.u32 %v6639, 7
    %v6641 = vsub.s32 0, %v6640
    %v6642 = vrot.slane %v6637, %v6641
    %v6652 = vunpack.c.l.b16 %v6629
    %v6653 = vunpack.c.l.b16 %v6630
    %v6654 = vunpack.c.l.b16 %v6631
    %v6655 = vunpack.c.l.b16 %v6632
    %v6656 = vunpack.c.l.b16 %v6633
    %v6657 = vunpack.c.l.b16 %v6634
    %v6658 = vunpack.c.l.b16 %v6635
    %v6659 = vunpack.c.l.b16 %v6636
    %v6660 = vpack.c.b16 %v6653, %v6652
    %v6661 = vpack.c.b16 %v6655, %v6654
    %v6662 = vpack.c.b16 %v6657, %v6656
    %v6663 = vpack.c.b16 %v6659, %v6658
    %vm6668 = vcmask 523264
    %v6670 = vsel %vm6668, %v6628, 0
    %6672 = vmatprep.subr.bf16.mxu0 0
    %6673 = vmatpush1.bf16.msra.mxu0 0
    %6674 = vmatprep.subr.bf16.mxu0 0
    %6675 = vmatpush1.bf16.msra.mxu0 0
    %6676 = vmatprep.subr.bf16.mxu0 0
    %6677 = vmatpush1.bf16.msra.mxu0 0
    %6678 = vmatprep.subr.bf16.mxu0 0
    %6679 = vmatpush1.bf16.msra.mxu0 0
    %6680 = vmatprep.subr.bf16.mxu0 0
    %6681 = vmatpush1.bf16.msra.mxu0 %v6663
    %6682 = vmatprep.subr.bf16.mxu0 0
    %6683 = vmatpush1.bf16.msra.mxu0 %v6662
    %6684 = vmatprep.subr.bf16.mxu0 0
    %6685 = vmatpush1.bf16.msra.mxu0 %v6661
    %6686 = vmatprep.subr.bf16.mxu0 0
    %6687 = vmatpush1.bf16.msra.mxu0 %v6660
    %6688 = vmatprep.subr.bf16.mxu0 0
    %6689 = vmatpush2.bf16.msra.mxu0 0
    %6690 = vmatprep.subr.bf16.mxu0 0
    %6691 = vmatpush2.bf16.msra.mxu0 0
    %6692 = vmatprep.subr.bf16.mxu0 0
    %6693 = vmatpush2.bf16.msra.mxu0 0
    %6694 = vmatprep.subr.bf16.mxu0 0
    %6695 = vmatpush2.bf16.msra.mxu0 0
    %6696 = vmatprep.subr.bf16.mxu0 0
    %6697 = vmatpush2.bf16.msra.mxu0 0
    %6698 = vmatprep.subr.bf16.mxu0 0
    %6699 = vmatpush2.bf16.msra.mxu0 0
    %6700 = vmatprep.subr.bf16.mxu0 0
    %6701 = vmatpush2.bf16.msra.mxu0 0
    %6702 = vmatprep.subr.bf16.mxu0 0
    %6703 = vmatpush2.bf16.msra.mxu0 0
    %6704 = vmatprep.mubr.bf16.mxu0 0
    %6705 = vmatmul.mubr.bf16.gmra.mxu0 %v6670
    %v6706 = vpop.f32.mrf.mxu0
    %v6707 = vadd.f32 %v6642, %v6706
    %v6708 = vpop.f32.mrf.mxu0
    %v6709 = vpop.f32.mrf.mxu0
    %v6710 = vpop.f32.mrf.mxu0
    %6711 = vdwg.mxu0
    %vm6712 = vcmask 80896
    %v6713 = vsel %vm6712, %v6707, -inf
    %6714 = vmax.xlane.f32.xlu0 %v6713
    %v6715 = vpop.xlane.xlu0 %6714
    %v6716 = vsub.f32 %v6707, %v6715
    %v6717 = vmul.f32 %v6716, 1.442695
    %v6718 = vpow.pop %v6717
    %v6719 = vsel %vm6712, %v6718, 0.0
    %6720 = vadd.xlane.f32.xlu0 %v6719
    %v6721 = vpop.xlane.xlu0 %6720
    %v6722 = vlog2.pop %v6721
    %v6723 = vmul.f32 %v6722, 0.6931472
    %v6724 = vsub.f32 %v6716, %v6723
    %6725 = vst.msk [vmem:[#allocation16] sm:$0xff] %vm6712, %v6724
    // Predicated region
    $region78: #{mlp_sample_forward.1} parent=1 // pred_check
      _
    $region79: #{mlp_sample_forward.1} parent=1 // pred_check_branch
      %6727 = sbr.rel (0) target = $region81
    $region80: #{mlp_sample_forward.1} parent=1 // pred_region
      %s6729 = ssub.s32 128, 128
      %6730 = vsyncadd [#allocation4], %s6729
      %s6732 = sshll.u32 [#allocation16], 4
      %s6733 = int_to_ptr.vmem [resolvable:$true] %s6732
      %6735 = dma.vmem_to_hbm [thread:$0]  %s6733, 128, %s11, [#allocation4]
    $region81: #{mlp_sample_forward.1} parent=1 // pred_fallthru
      _
    // Predicated region
    $region82: #{mlp_sample_forward.1} parent=1 // pred_check
      _
    $region83: #{mlp_sample_forward.1} parent=1 // pred_check_branch
      %6737 = sbr.rel (0) target = $region85
    $region84: #{mlp_sample_forward.1} parent=1 // pred_region
      %6738 = dma.done [#allocation4], 128
    $region85: #{mlp_sample_forward.1} parent=1 // pred_fallthru
      _
    %6739 = vsyncpa [#allocation3], 1
    %6740 = vsyncpa [#allocation6], 1
    %6741 = vsyncpa [#allocation9], 1
    %6742 = vsyncpa [#allocation12], 1
    %6743 = vsyncpa [#allocation15], 1
    %6744 = vsyncpa [#allocation4], 1

</llo_original>
